<compile_context>
chip_gen: v5e
topology: v5e:2x2
jax: 0.10.0
libtpu: 0.0.40
codegen_flags: <defaults>
</compile_context>

<pallas_src>
import jax
import jax.numpy as jnp
import numpy as np
from jax.experimental import pallas as pl
from jax.experimental.pallas import tpu as pltpu

HIDDEN = [16, 32, 64, 128, 256, 512]
IN_CHANNELS = 7
SEQ_LEN = 64          # Linear(512*2, latent) forces final length 2 => L_in = 64
LATENT = 32
NEG_SLOPE = 0.01      # nn.LeakyReLU default
EPS = 1e-5            # nn.BatchNorm1d default


# ----------------------------------------------------------------------------
# Fused kernel
# ----------------------------------------------------------------------------
def _fused_encoder_kernel(x_ref,
                          w1_ref, b1_ref, w2_ref, b2_ref, w3_ref, b3_ref,
                          w4_ref, b4_ref, w5_ref, b5_ref,
                          w6_ref, b6_ref, wl0_ref, wl1_ref, bl_ref,
                          o_ref,
                          a1_ref, a2_ref, a3_ref, a4_ref):
    bt = o_ref.shape[0]                       # batch tile (multiple of 8)

    # Zero the "left padding" row of each activation scratch buffer once.
    # Scratch persists across grid steps and row 0 is never written again.
    @pl.when(pl.program_id(0) == 0)
    def _init_pad_rows():
        a1_ref[0] = jnp.zeros(a1_ref.shape[1:], jnp.float32)
        a2_ref[0] = jnp.zeros(a2_ref.shape[1:], jnp.float32)
        a3_ref[0] = jnp.zeros(a3_ref.shape[1:], jnp.float32)
        a4_ref[0] = jnp.zeros(a4_ref.shape[1:], jnp.float32)

    def conv_block(v, w_ref, b_ref):
        # v: (L+1, bt, c_in); v[0] is the zero left-padding row.
        # Conv1d(kernel=3, stride=2, pad=1) + folded BN + LeakyReLU.
        L = v.shape[0] - 1
        lo = L // 2
        c_in = v.shape[2]
        head = v[0:L].reshape(lo, 2, bt, c_in)
        tail = v[1:L + 1].reshape(lo, 2, bt, c_in)
        t0 = head[:, 0].reshape(lo * bt, c_in)    # x[2j - 1]  (zero at j == 0)
        t1 = head[:, 1].reshape(lo * bt, c_in)    # x[2j]
        t2 = tail[:, 1].reshape(lo * bt, c_in)    # x[2j + 1]
        y = jnp.dot(t0, w_ref[0], preferred_element_type=jnp.float32)
        y = y + jnp.dot(t1, w_ref[1], preferred_element_type=jnp.float32)
        y = y + jnp.dot(t2, w_ref[2], preferred_element_type=jnp.float32)
        y = y + b_ref[...]
        return jnp.where(y > 0, y, NEG_SLOPE * y)  # (lo*bt, c_out)

    def stash(y, out_ref):
        # Write (lo*bt, c) into rows 1.. of a (lo+1, bt, c) buffer; row 0 is
        # the (already-zeroed) left padding for the next layer.
        lo = out_ref.shape[0] - 1
        c = out_ref.shape[2]
        out_ref[1:] = y.reshape(lo, bt, c)

    stash(conv_block(x_ref[...], w1_ref, b1_ref), a1_ref)    # L 64 -> 32, c16
    stash(conv_block(a1_ref[...], w2_ref, b2_ref), a2_ref)   # 32 -> 16, c32
    stash(conv_block(a2_ref[...], w3_ref, b3_ref), a3_ref)   # 16 ->  8, c64
    stash(conv_block(a3_ref[...], w4_ref, b4_ref), a4_ref)   #  8 ->  4, c128
    y5 = conv_block(a4_ref[...], w5_ref, b5_ref)             # (2*bt, 256)

    # 1x1 conv (per-position dense) + folded BN + LeakyReLU.
    y6 = jnp.dot(y5, w6_ref[...], preferred_element_type=jnp.float32)
    y6 = y6 + b6_ref[...]
    y6 = jnp.where(y6 > 0, y6, NEG_SLOPE * y6)                # (2*bt, 512)

    # Flatten (PyTorch channel-major over (512, 2)) + Linear: the flatten is
    # absorbed by pre-splitting the Linear weight rows by position l in {0,1}.
    out = jnp.dot(y6[0:bt], wl0_ref[...], preferred_element_type=jnp.float32)
    out = out + jnp.dot(y6[bt:2 * bt], wl1_ref[...],
                        preferred_element_type=jnp.float32)
    out = out + bl_ref[...]
    o_ref[...] = out.astype(o_ref.dtype)


# ----------------------------------------------------------------------------
# Wrapper
# ----------------------------------------------------------------------------
def _round_up(n, m):
    return ((n + m - 1) // m) * m


def prepare_params(params):
    """Fold BatchNorm + conv bias into conv weights; pre-split Linear weight."""
    folded_convs = []
    for p in params["convs"]:
        s = p["gamma"] * jax.lax.rsqrt(p["var"] + EPS)            # (1, c_out)
        w = p["w"] * s                                            # (3, c_in, c_out)
        b = (p["b"] - p["mean"]) * s + p["beta"]                  # (1, c_out)
        folded_convs.append((w, b))
    p = params["conv1x1"]
    s = p["gamma"] * jax.lax.rsqrt(p["var"] + EPS)
    w6 = p["w"] * s
    b6 = (p["b"] - p["mean"]) * s + p["beta"]
    wl = params["linear"]["w"]                                    # (1024, latent)
    # Flatten order of (B, 512, 2) is c*2 + l  =>  split rows by position l.
    return folded_convs, (w6, b6), (wl[0::2], wl[1::2], params["linear"]["b"])


def encoder_forward(params, x_ncl, batch_tile=128):
    """x_ncl: (B, 7, 64) in PyTorch NCL layout; returns (B, latent)."""
    folded_convs, (w6, b6), (wl0, wl1, bl) = prepare_params(params)
    B = x_ncl.shape[0]
    latent = bl.shape[-1]
    bt = min(batch_tile, _round_up(B, 8))
    b_pad = _round_up(B, bt)

    # Kernel layout: sequence-major (L, B, C) plus one zero left-padding row.
    x = jnp.transpose(x_ncl, (2, 0, 1)).astype(jnp.float32)       # (64, B, 7)
    x = jnp.pad(x, ((1, 0), (0, b_pad - B), (0, 0)))              # (65, b_pad, 7)

    inputs = [x]
    in_specs = [pl.BlockSpec((SEQ_LEN + 1, bt, IN_CHANNELS),
                             lambda i: (0, i, 0))]
    for w, b in folded_convs:
        inputs += [w, b]
        in_specs += [pl.BlockSpec(w.shape, lambda i: (0, 0, 0)),
                     pl.BlockSpec(b.shape, lambda i: (0, 0))]
    for a in (w6, b6, wl0, wl1, bl):
        inputs.append(a)
        in_specs.append(pl.BlockSpec(a.shape, lambda i: (0, 0)))

    out = pl.pallas_call(
        _fused_encoder_kernel,
        out_shape=jax.ShapeDtypeStruct((b_pad, latent), jnp.float32),
        grid=(b_pad // bt,),
        in_specs=in_specs,
        out_specs=pl.BlockSpec((bt, latent), lambda i: (i, 0)),
        scratch_shapes=[
            pltpu.VMEM((SEQ_LEN // 2 + 1, bt, HIDDEN[0]), jnp.float32),
            pltpu.VMEM((SEQ_LEN // 4 + 1, bt, HIDDEN[1]), jnp.float32),
            pltpu.VMEM((SEQ_LEN // 8 + 1, bt, HIDDEN[2]), jnp.float32),
            pltpu.VMEM((SEQ_LEN // 16 + 1, bt, HIDDEN[3]), jnp.float32),
        ],
        compiler_params=pltpu.CompilerParams(
            dimension_semantics=("parallel",)),
    )(*inputs)
    return out[:B]


# ----------------------------------------------------------------------------
# Deterministic parameter init (synthetic; shapes from Encoder.__init__)
# ----------------------------------------------------------------------------
def _bn_params(c):
    return dict(gamma=jnp.ones((1, c), jnp.float32),
                beta=jnp.zeros((1, c), jnp.float32),
                mean=jnp.zeros((1, c), jnp.float32),
                var=jnp.ones((1, c), jnp.float32))


def init_params(key, latent_size):
    keys = jax.random.split(key, 16)
    ki = 0
    params = {"convs": []}
    c_in = IN_CHANNELS
    for c_out in HIDDEN[:-1]:
        kw, kb = keys[ki], keys[ki + 1]
        ki += 2
        w = jax.random.normal(kw, (3, c_in, c_out), jnp.float32) / np.sqrt(3 * c_in)
        b = jax.random.normal(kb, (1, c_out), jnp.float32) * 0.01
        params["convs"].append(dict(w=w, b=b, **_bn_params(c_out)))
        c_in = c_out
    kw, kb = keys[ki], keys[ki + 1]
    ki += 2
    params["conv1x1"] = dict(
        w=jax.random.normal(kw, (256, 512), jnp.float32) / np.sqrt(256),
        b=jax.random.normal(kb, (1, 512), jnp.float32) * 0.01,
        **_bn_params(512))
    kw, kb = keys[ki], keys[ki + 1]
    params["linear"] = dict(
        w=jax.random.normal(kw, (HIDDEN[-1] * 2, latent_size), jnp.float32)
        / np.sqrt(HIDDEN[-1] * 2),
        b=jax.random.normal(kb, (1, latent_size), jnp.float32) * 0.01)
    return params


# ----------------------------------------------------------------------------
# Pure-JAX reference (XLA) for correctness check
# ----------------------------------------------------------------------------
def reference_forward(params, x_ncl):
    def bn_lrelu(y, p):
        r = lambda a: a.reshape(1, -1, 1)
        inv = jax.lax.rsqrt(r(p["var"]) + EPS)
        y = (y - r(p["mean"])) * inv * r(p["gamma"]) + r(p["beta"])
        return jnp.where(y > 0, y, NEG_SLOPE * y)

    x = x_ncl
    for p in params["convs"]:
        w = jnp.transpose(p["w"], (2, 1, 0))           # (C_out, C_in, 3)
        y = jax.lax.conv_general_dilated(
            x, w, window_strides=(2,), padding=((1, 1),),
            dimension_numbers=("NCH", "OIH", "NCH"))
        x = bn_lrelu(y + p["b"].reshape(1, -1, 1), p)
    p = params["conv1x1"]
    y = jax.lax.conv_general_dilated(
        x, p["w"].T[:, :, None], window_strides=(1,), padding=((0, 0),),
        dimension_numbers=("NCH", "OIH", "NCH"))
    x = bn_lrelu(y + p["b"].reshape(1, -1, 1), p)      # (B, 512, 2)
    flat = x.reshape(x.shape[0], -1)
    return flat @ params["linear"]["w"] + params["linear"]["b"]


if __name__ == "__main__":
    key = jax.random.PRNGKey(0)
    kp, kx = jax.random.split(key)
    params = init_params(kp, LATENT)
    x = jax.random.normal(kx, (2, IN_CHANNELS, SEQ_LEN), dtype=jnp.float32)

    forward = jax.jit(encoder_forward)
    out = jax.block_until_ready(forward(params, x))
    assert out.shape == (2, LATENT), out.shape

    ref = jax.block_until_ready(reference_forward(params, x))
    np.testing.assert_allclose(np.asarray(out), np.asarray(ref),
                               rtol=1e-2, atol=1e-2)
    print("KERNEL_OK")
</pallas_src>

<mosaic_0001>
module attributes {stable_mosaic.version = 11 : i64} {
  func.func @_fused_encoder_kernel(%arg0: i32, %arg1: memref<65x8x7xf32, #tpu.memory_space<vmem>>, %arg2: memref<3x7x16xf32, #tpu.memory_space<vmem>>, %arg3: memref<1x16xf32, #tpu.memory_space<vmem>>, %arg4: memref<3x16x32xf32, #tpu.memory_space<vmem>>, %arg5: memref<1x32xf32, #tpu.memory_space<vmem>>, %arg6: memref<3x32x64xf32, #tpu.memory_space<vmem>>, %arg7: memref<1x64xf32, #tpu.memory_space<vmem>>, %arg8: memref<3x64x128xf32, #tpu.memory_space<vmem>>, %arg9: memref<1x128xf32, #tpu.memory_space<vmem>>, %arg10: memref<3x128x256xf32, #tpu.memory_space<vmem>>, %arg11: memref<1x256xf32, #tpu.memory_space<vmem>>, %arg12: memref<256x512xf32, #tpu.memory_space<vmem>>, %arg13: memref<1x512xf32, #tpu.memory_space<vmem>>, %arg14: memref<512x32xf32, #tpu.memory_space<vmem>>, %arg15: memref<512x32xf32, #tpu.memory_space<vmem>>, %arg16: memref<1x32xf32, #tpu.memory_space<vmem>>, %arg17: memref<8x32xf32, #tpu.memory_space<vmem>>, %arg18: memref<33x8x16xf32, #tpu.memory_space<vmem>>, %arg19: memref<17x8x32xf32, #tpu.memory_space<vmem>>, %arg20: memref<9x8x64xf32, #tpu.memory_space<vmem>>, %arg21: memref<5x8x128xf32, #tpu.memory_space<vmem>>) attributes {dimension_semantics = [#tpu.dimension_semantics<parallel>], iteration_bounds = array<i64: 1>, scalar_prefetch = 0 : i64, scratch_operands = 4 : i64, tpu.core_type = #tpu.core_type<tc>, window_params = [{transform_indices = @transform_0, window_bounds = array<i64: 65, 8, 7>}, {pipeline_mode = #tpu.pipeline_mode<synchronous>, transform_indices = @transform_1, window_bounds = array<i64: 3, 7, 16>}, {pipeline_mode = #tpu.pipeline_mode<synchronous>, transform_indices = @transform_2, window_bounds = array<i64: 1, 16>}, {pipeline_mode = #tpu.pipeline_mode<synchronous>, transform_indices = @transform_3, window_bounds = array<i64: 3, 16, 32>}, {pipeline_mode = #tpu.pipeline_mode<synchronous>, transform_indices = @transform_4, window_bounds = array<i64: 1, 32>}, {pipeline_mode = #tpu.pipeline_mode<synchronous>, transform_indices = @transform_5, window_bounds = array<i64: 3, 32, 64>}, {pipeline_mode = #tpu.pipeline_mode<synchronous>, transform_indices = @transform_6, window_bounds = array<i64: 1, 64>}, {pipeline_mode = #tpu.pipeline_mode<synchronous>, transform_indices = @transform_7, window_bounds = array<i64: 3, 64, 128>}, {pipeline_mode = #tpu.pipeline_mode<synchronous>, transform_indices = @transform_8, window_bounds = array<i64: 1, 128>}, {pipeline_mode = #tpu.pipeline_mode<synchronous>, transform_indices = @transform_9, window_bounds = array<i64: 3, 128, 256>}, {pipeline_mode = #tpu.pipeline_mode<synchronous>, transform_indices = @transform_10, window_bounds = array<i64: 1, 256>}, {pipeline_mode = #tpu.pipeline_mode<synchronous>, transform_indices = @transform_11, window_bounds = array<i64: 256, 512>}, {pipeline_mode = #tpu.pipeline_mode<synchronous>, transform_indices = @transform_12, window_bounds = array<i64: 1, 512>}, {pipeline_mode = #tpu.pipeline_mode<synchronous>, transform_indices = @transform_13, window_bounds = array<i64: 512, 32>}, {pipeline_mode = #tpu.pipeline_mode<synchronous>, transform_indices = @transform_14, window_bounds = array<i64: 512, 32>}, {pipeline_mode = #tpu.pipeline_mode<synchronous>, transform_indices = @transform_15, window_bounds = array<i64: 1, 32>}, {transform_indices = @transform_16, window_bounds = array<i64: 8, 32>}]} {
    %c0_i32 = arith.constant 0 : i32
    %0 = arith.cmpi eq, %arg0, %c0_i32 : i32
    %1 = arith.extui %0 : i1 to i32
    %c0_i32_0 = arith.constant 0 : i32
    %2 = arith.cmpi ne, %1, %c0_i32_0 : i32
    scf.if %2 {
      %cst_121 = arith.constant 0.000000e+00 : f32
      %197 = vector.broadcast %cst_121 : f32 to vector<8x16xf32>
      %c0_122 = arith.constant 0 : index
      %c0_123 = arith.constant 0 : index
      %c0_124 = arith.constant 0 : index
      %198 = vector.load %arg18[%c0_122, %c0_123, %c0_124] : memref<33x8x16xf32, #tpu.memory_space<vmem>>, vector<1x8x16xf32>
      %199 = vector.shape_cast %198 : vector<1x8x16xf32> to vector<8x16xf32>
      %200 = vector.shape_cast %197 : vector<8x16xf32> to vector<1x8x16xf32>
      tpu.vector_store %arg18[%c0_122, %c0_123, %c0_124], %200 {strides = array<i32>} : memref<33x8x16xf32, #tpu.memory_space<vmem>>, vector<1x8x16xf32>,
      %cst_125 = arith.constant 0.000000e+00 : f32
      %201 = vector.broadcast %cst_125 : f32 to vector<8x32xf32>
      %c0_126 = arith.constant 0 : index
      %c0_127 = arith.constant 0 : index
      %c0_128 = arith.constant 0 : index
      %202 = vector.load %arg19[%c0_126, %c0_127, %c0_128] : memref<17x8x32xf32, #tpu.memory_space<vmem>>, vector<1x8x32xf32>
      %203 = vector.shape_cast %202 : vector<1x8x32xf32> to vector<8x32xf32>
      %204 = vector.shape_cast %201 : vector<8x32xf32> to vector<1x8x32xf32>
      tpu.vector_store %arg19[%c0_126, %c0_127, %c0_128], %204 {strides = array<i32>} : memref<17x8x32xf32, #tpu.memory_space<vmem>>, vector<1x8x32xf32>,
      %cst_129 = arith.constant 0.000000e+00 : f32
      %205 = vector.broadcast %cst_129 : f32 to vector<8x64xf32>
      %c0_130 = arith.constant 0 : index
      %c0_131 = arith.constant 0 : index
      %c0_132 = arith.constant 0 : index
      %206 = vector.load %arg20[%c0_130, %c0_131, %c0_132] : memref<9x8x64xf32, #tpu.memory_space<vmem>>, vector<1x8x64xf32>
      %207 = vector.shape_cast %206 : vector<1x8x64xf32> to vector<8x64xf32>
      %208 = vector.shape_cast %205 : vector<8x64xf32> to vector<1x8x64xf32>
      tpu.vector_store %arg20[%c0_130, %c0_131, %c0_132], %208 {strides = array<i32>} : memref<9x8x64xf32, #tpu.memory_space<vmem>>, vector<1x8x64xf32>,
      %cst_133 = arith.constant 0.000000e+00 : f32
      %209 = vector.broadcast %cst_133 : f32 to vector<8x128xf32>
      %c0_134 = arith.constant 0 : index
      %c0_135 = arith.constant 0 : index
      %c0_136 = arith.constant 0 : index
      %210 = vector.load %arg21[%c0_134, %c0_135, %c0_136] : memref<5x8x128xf32, #tpu.memory_space<vmem>>, vector<1x8x128xf32>
      %211 = vector.shape_cast %210 : vector<1x8x128xf32> to vector<8x128xf32>
      %212 = vector.shape_cast %209 : vector<8x128xf32> to vector<1x8x128xf32>
      tpu.vector_store %arg21[%c0_134, %c0_135, %c0_136], %212 {strides = array<i32>} : memref<5x8x128xf32, #tpu.memory_space<vmem>>, vector<1x8x128xf32>,
    } else {
    }
    %c0 = arith.constant 0 : index
    %c0_1 = arith.constant 0 : index
    %c0_2 = arith.constant 0 : index
    %3 = vector.load %arg1[%c0, %c0_1, %c0_2] : memref<65x8x7xf32, #tpu.memory_space<vmem>>, vector<65x8x7xf32>
    %4 = vector.extract_strided_slice %3 {offsets = [0, 0, 0], sizes = [64, 8, 7], strides = [1, 1, 1]} : vector<65x8x7xf32> to vector<64x8x7xf32>
    %5 = vector.shape_cast %4 : vector<64x8x7xf32> to vector<32x2x8x7xf32>
    %6 = vector.extract_strided_slice %3 {offsets = [1, 0, 0], sizes = [64, 8, 7], strides = [1, 1, 1]} : vector<65x8x7xf32> to vector<64x8x7xf32>
    %7 = vector.shape_cast %6 : vector<64x8x7xf32> to vector<32x2x8x7xf32>
    %8 = vector.extract_strided_slice %5 {offsets = [0, 0, 0, 0], sizes = [32, 1, 8, 7], strides = [1, 1, 1, 1]} : vector<32x2x8x7xf32> to vector<32x1x8x7xf32>
    %9 = vector.shape_cast %8 : vector<32x1x8x7xf32> to vector<32x8x7xf32>
    %10 = vector.shape_cast %9 : vector<32x8x7xf32> to vector<256x7xf32>
    %11 = vector.extract_strided_slice %5 {offsets = [0, 1, 0, 0], sizes = [32, 1, 8, 7], strides = [1, 1, 1, 1]} : vector<32x2x8x7xf32> to vector<32x1x8x7xf32>
    %12 = vector.shape_cast %11 : vector<32x1x8x7xf32> to vector<32x8x7xf32>
    %13 = vector.shape_cast %12 : vector<32x8x7xf32> to vector<256x7xf32>
    %14 = vector.extract_strided_slice %7 {offsets = [0, 1, 0, 0], sizes = [32, 1, 8, 7], strides = [1, 1, 1, 1]} : vector<32x2x8x7xf32> to vector<32x1x8x7xf32>
    %15 = vector.shape_cast %14 : vector<32x1x8x7xf32> to vector<32x8x7xf32>
    %16 = vector.shape_cast %15 : vector<32x8x7xf32> to vector<256x7xf32>
    %c0_3 = arith.constant 0 : index
    %c0_4 = arith.constant 0 : index
    %c0_5 = arith.constant 0 : index
    %17 = vector.load %arg2[%c0_3, %c0_4, %c0_5] : memref<3x7x16xf32, #tpu.memory_space<vmem>>, vector<1x7x16xf32>
    %18 = vector.shape_cast %17 : vector<1x7x16xf32> to vector<7x16xf32>
    %cst = arith.constant dense<0.000000e+00> : vector<256x16xf32>
    %19 = tpu.matmul %10, %18, %cst {dimension_numbers = #tpu.dot_dimension_numbers<[1], [0], [0], [1], [0, 0, 1, 1], [], []>} : vector<256x7xf32>, vector<7x16xf32>, vector<256x16xf32> -> vector<256x16xf32>
    %c1 = arith.constant 1 : index
    %c0_6 = arith.constant 0 : index
    %c0_7 = arith.constant 0 : index
    %20 = vector.load %arg2[%c1, %c0_6, %c0_7] : memref<3x7x16xf32, #tpu.memory_space<vmem>>, vector<1x7x16xf32>
    %21 = vector.shape_cast %20 : vector<1x7x16xf32> to vector<7x16xf32>
    %cst_8 = arith.constant dense<0.000000e+00> : vector<256x16xf32>
    %22 = tpu.matmul %13, %21, %cst_8 {dimension_numbers = #tpu.dot_dimension_numbers<[1], [0], [0], [1], [0, 0, 1, 1], [], []>} : vector<256x7xf32>, vector<7x16xf32>, vector<256x16xf32> -> vector<256x16xf32>
    %23 = arith.addf %19, %22 : vector<256x16xf32>
    %c2 = arith.constant 2 : index
    %c0_9 = arith.constant 0 : index
    %c0_10 = arith.constant 0 : index
    %24 = vector.load %arg2[%c2, %c0_9, %c0_10] : memref<3x7x16xf32, #tpu.memory_space<vmem>>, vector<1x7x16xf32>
    %25 = vector.shape_cast %24 : vector<1x7x16xf32> to vector<7x16xf32>
    %cst_11 = arith.constant dense<0.000000e+00> : vector<256x16xf32>
    %26 = tpu.matmul %16, %25, %cst_11 {dimension_numbers = #tpu.dot_dimension_numbers<[1], [0], [0], [1], [0, 0, 1, 1], [], []>} : vector<256x7xf32>, vector<7x16xf32>, vector<256x16xf32> -> vector<256x16xf32>
    %27 = arith.addf %23, %26 : vector<256x16xf32>
    %c0_12 = arith.constant 0 : index
    %c0_13 = arith.constant 0 : index
    %28 = vector.load %arg3[%c0_12, %c0_13] : memref<1x16xf32, #tpu.memory_space<vmem>>, vector<1x16xf32>
    %29 = vector.broadcast %28 : vector<1x16xf32> to vector<256x16xf32>
    %30 = arith.addf %27, %29 : vector<256x16xf32>
    %cst_14 = arith.constant 0.000000e+00 : f32
    %31 = vector.broadcast %cst_14 : f32 to vector<256x16xf32>
    %32 = arith.cmpf ogt, %30, %31 : vector<256x16xf32>
    %cst_15 = arith.constant 0.00999999977 : f32
    %33 = vector.broadcast %cst_15 : f32 to vector<256x16xf32>
    %34 = arith.mulf %33, %30 : vector<256x16xf32>
    %35 = arith.select %32, %30, %34 : vector<256x16xi1>, vector<256x16xf32>
    %36 = vector.shape_cast %35 : vector<256x16xf32> to vector<32x8x16xf32>
    %c1_16 = arith.constant 1 : index
    %c0_17 = arith.constant 0 : index
    %c0_18 = arith.constant 0 : index
    %37 = vector.load %arg18[%c1_16, %c0_17, %c0_18] : memref<33x8x16xf32, #tpu.memory_space<vmem>>, vector<32x8x16xf32>
    tpu.vector_store %arg18[%c1_16, %c0_17, %c0_18], %36 {strides = array<i32>} : memref<33x8x16xf32, #tpu.memory_space<vmem>>, vector<32x8x16xf32>,
    %c0_19 = arith.constant 0 : index
    %c0_20 = arith.constant 0 : index
    %c0_21 = arith.constant 0 : index
    %38 = vector.load %arg18[%c0_19, %c0_20, %c0_21] : memref<33x8x16xf32, #tpu.memory_space<vmem>>, vector<33x8x16xf32>
    %39 = vector.extract_strided_slice %38 {offsets = [0, 0, 0], sizes = [32, 8, 16], strides = [1, 1, 1]} : vector<33x8x16xf32> to vector<32x8x16xf32>
    %40 = vector.shape_cast %39 : vector<32x8x16xf32> to vector<16x2x8x16xf32>
    %41 = vector.extract_strided_slice %38 {offsets = [1, 0, 0], sizes = [32, 8, 16], strides = [1, 1, 1]} : vector<33x8x16xf32> to vector<32x8x16xf32>
    %42 = vector.shape_cast %41 : vector<32x8x16xf32> to vector<16x2x8x16xf32>
    %43 = vector.extract_strided_slice %40 {offsets = [0, 0, 0, 0], sizes = [16, 1, 8, 16], strides = [1, 1, 1, 1]} : vector<16x2x8x16xf32> to vector<16x1x8x16xf32>
    %44 = vector.shape_cast %43 : vector<16x1x8x16xf32> to vector<16x8x16xf32>
    %45 = vector.shape_cast %44 : vector<16x8x16xf32> to vector<128x16xf32>
    %46 = vector.extract_strided_slice %40 {offsets = [0, 1, 0, 0], sizes = [16, 1, 8, 16], strides = [1, 1, 1, 1]} : vector<16x2x8x16xf32> to vector<16x1x8x16xf32>
    %47 = vector.shape_cast %46 : vector<16x1x8x16xf32> to vector<16x8x16xf32>
    %48 = vector.shape_cast %47 : vector<16x8x16xf32> to vector<128x16xf32>
    %49 = vector.extract_strided_slice %42 {offsets = [0, 1, 0, 0], sizes = [16, 1, 8, 16], strides = [1, 1, 1, 1]} : vector<16x2x8x16xf32> to vector<16x1x8x16xf32>
    %50 = vector.shape_cast %49 : vector<16x1x8x16xf32> to vector<16x8x16xf32>
    %51 = vector.shape_cast %50 : vector<16x8x16xf32> to vector<128x16xf32>
    %c0_22 = arith.constant 0 : index
    %c0_23 = arith.constant 0 : index
    %c0_24 = arith.constant 0 : index
    %52 = vector.load %arg4[%c0_22, %c0_23, %c0_24] : memref<3x16x32xf32, #tpu.memory_space<vmem>>, vector<1x16x32xf32>
    %53 = vector.shape_cast %52 : vector<1x16x32xf32> to vector<16x32xf32>
    %cst_25 = arith.constant dense<0.000000e+00> : vector<128x32xf32>
    %54 = tpu.matmul %45, %53, %cst_25 {dimension_numbers = #tpu.dot_dimension_numbers<[1], [0], [0], [1], [0, 0, 1, 1], [], []>} : vector<128x16xf32>, vector<16x32xf32>, vector<128x32xf32> -> vector<128x32xf32>
    %c1_26 = arith.constant 1 : index
    %c0_27 = arith.constant 0 : index
    %c0_28 = arith.constant 0 : index
    %55 = vector.load %arg4[%c1_26, %c0_27, %c0_28] : memref<3x16x32xf32, #tpu.memory_space<vmem>>, vector<1x16x32xf32>
    %56 = vector.shape_cast %55 : vector<1x16x32xf32> to vector<16x32xf32>
    %cst_29 = arith.constant dense<0.000000e+00> : vector<128x32xf32>
    %57 = tpu.matmul %48, %56, %cst_29 {dimension_numbers = #tpu.dot_dimension_numbers<[1], [0], [0], [1], [0, 0, 1, 1], [], []>} : vector<128x16xf32>, vector<16x32xf32>, vector<128x32xf32> -> vector<128x32xf32>
    %58 = arith.addf %54, %57 : vector<128x32xf32>
    %c2_30 = arith.constant 2 : index
    %c0_31 = arith.constant 0 : index
    %c0_32 = arith.constant 0 : index
    %59 = vector.load %arg4[%c2_30, %c0_31, %c0_32] : memref<3x16x32xf32, #tpu.memory_space<vmem>>, vector<1x16x32xf32>
    %60 = vector.shape_cast %59 : vector<1x16x32xf32> to vector<16x32xf32>
    %cst_33 = arith.constant dense<0.000000e+00> : vector<128x32xf32>
    %61 = tpu.matmul %51, %60, %cst_33 {dimension_numbers = #tpu.dot_dimension_numbers<[1], [0], [0], [1], [0, 0, 1, 1], [], []>} : vector<128x16xf32>, vector<16x32xf32>, vector<128x32xf32> -> vector<128x32xf32>
    %62 = arith.addf %58, %61 : vector<128x32xf32>
    %c0_34 = arith.constant 0 : index
    %c0_35 = arith.constant 0 : index
    %63 = vector.load %arg5[%c0_34, %c0_35] : memref<1x32xf32, #tpu.memory_space<vmem>>, vector<1x32xf32>
    %64 = vector.broadcast %63 : vector<1x32xf32> to vector<128x32xf32>
    %65 = arith.addf %62, %64 : vector<128x32xf32>
    %cst_36 = arith.constant 0.000000e+00 : f32
    %66 = vector.broadcast %cst_36 : f32 to vector<128x32xf32>
    %67 = arith.cmpf ogt, %65, %66 : vector<128x32xf32>
    %cst_37 = arith.constant 0.00999999977 : f32
    %68 = vector.broadcast %cst_37 : f32 to vector<128x32xf32>
    %69 = arith.mulf %68, %65 : vector<128x32xf32>
    %70 = arith.select %67, %65, %69 : vector<128x32xi1>, vector<128x32xf32>
    %71 = vector.shape_cast %70 : vector<128x32xf32> to vector<16x8x32xf32>
    %c1_38 = arith.constant 1 : index
    %c0_39 = arith.constant 0 : index
    %c0_40 = arith.constant 0 : index
    %72 = vector.load %arg19[%c1_38, %c0_39, %c0_40] : memref<17x8x32xf32, #tpu.memory_space<vmem>>, vector<16x8x32xf32>
    tpu.vector_store %arg19[%c1_38, %c0_39, %c0_40], %71 {strides = array<i32>} : memref<17x8x32xf32, #tpu.memory_space<vmem>>, vector<16x8x32xf32>,
    %c0_41 = arith.constant 0 : index
    %c0_42 = arith.constant 0 : index
    %c0_43 = arith.constant 0 : index
    %73 = vector.load %arg19[%c0_41, %c0_42, %c0_43] : memref<17x8x32xf32, #tpu.memory_space<vmem>>, vector<17x8x32xf32>
    %74 = vector.extract_strided_slice %73 {offsets = [0, 0, 0], sizes = [16, 8, 32], strides = [1, 1, 1]} : vector<17x8x32xf32> to vector<16x8x32xf32>
    %75 = vector.shape_cast %74 : vector<16x8x32xf32> to vector<8x2x8x32xf32>
    %76 = vector.extract_strided_slice %73 {offsets = [1, 0, 0], sizes = [16, 8, 32], strides = [1, 1, 1]} : vector<17x8x32xf32> to vector<16x8x32xf32>
    %77 = vector.shape_cast %76 : vector<16x8x32xf32> to vector<8x2x8x32xf32>
    %78 = vector.extract_strided_slice %75 {offsets = [0, 0, 0, 0], sizes = [8, 1, 8, 32], strides = [1, 1, 1, 1]} : vector<8x2x8x32xf32> to vector<8x1x8x32xf32>
    %79 = vector.shape_cast %78 : vector<8x1x8x32xf32> to vector<8x8x32xf32>
    %80 = vector.shape_cast %79 : vector<8x8x32xf32> to vector<64x32xf32>
    %81 = vector.extract_strided_slice %75 {offsets = [0, 1, 0, 0], sizes = [8, 1, 8, 32], strides = [1, 1, 1, 1]} : vector<8x2x8x32xf32> to vector<8x1x8x32xf32>
    %82 = vector.shape_cast %81 : vector<8x1x8x32xf32> to vector<8x8x32xf32>
    %83 = vector.shape_cast %82 : vector<8x8x32xf32> to vector<64x32xf32>
    %84 = vector.extract_strided_slice %77 {offsets = [0, 1, 0, 0], sizes = [8, 1, 8, 32], strides = [1, 1, 1, 1]} : vector<8x2x8x32xf32> to vector<8x1x8x32xf32>
    %85 = vector.shape_cast %84 : vector<8x1x8x32xf32> to vector<8x8x32xf32>
    %86 = vector.shape_cast %85 : vector<8x8x32xf32> to vector<64x32xf32>
    %c0_44 = arith.constant 0 : index
    %c0_45 = arith.constant 0 : index
    %c0_46 = arith.constant 0 : index
    %87 = vector.load %arg6[%c0_44, %c0_45, %c0_46] : memref<3x32x64xf32, #tpu.memory_space<vmem>>, vector<1x32x64xf32>
    %88 = vector.shape_cast %87 : vector<1x32x64xf32> to vector<32x64xf32>
    %cst_47 = arith.constant dense<0.000000e+00> : vector<64x64xf32>
    %89 = tpu.matmul %80, %88, %cst_47 {dimension_numbers = #tpu.dot_dimension_numbers<[1], [0], [0], [1], [0, 0, 1, 1], [], []>} : vector<64x32xf32>, vector<32x64xf32>, vector<64x64xf32> -> vector<64x64xf32>
    %c1_48 = arith.constant 1 : index
    %c0_49 = arith.constant 0 : index
    %c0_50 = arith.constant 0 : index
    %90 = vector.load %arg6[%c1_48, %c0_49, %c0_50] : memref<3x32x64xf32, #tpu.memory_space<vmem>>, vector<1x32x64xf32>
    %91 = vector.shape_cast %90 : vector<1x32x64xf32> to vector<32x64xf32>
    %cst_51 = arith.constant dense<0.000000e+00> : vector<64x64xf32>
    %92 = tpu.matmul %83, %91, %cst_51 {dimension_numbers = #tpu.dot_dimension_numbers<[1], [0], [0], [1], [0, 0, 1, 1], [], []>} : vector<64x32xf32>, vector<32x64xf32>, vector<64x64xf32> -> vector<64x64xf32>
    %93 = arith.addf %89, %92 : vector<64x64xf32>
    %c2_52 = arith.constant 2 : index
    %c0_53 = arith.constant 0 : index
    %c0_54 = arith.constant 0 : index
    %94 = vector.load %arg6[%c2_52, %c0_53, %c0_54] : memref<3x32x64xf32, #tpu.memory_space<vmem>>, vector<1x32x64xf32>
    %95 = vector.shape_cast %94 : vector<1x32x64xf32> to vector<32x64xf32>
    %cst_55 = arith.constant dense<0.000000e+00> : vector<64x64xf32>
    %96 = tpu.matmul %86, %95, %cst_55 {dimension_numbers = #tpu.dot_dimension_numbers<[1], [0], [0], [1], [0, 0, 1, 1], [], []>} : vector<64x32xf32>, vector<32x64xf32>, vector<64x64xf32> -> vector<64x64xf32>
    %97 = arith.addf %93, %96 : vector<64x64xf32>
    %c0_56 = arith.constant 0 : index
    %c0_57 = arith.constant 0 : index
    %98 = vector.load %arg7[%c0_56, %c0_57] : memref<1x64xf32, #tpu.memory_space<vmem>>, vector<1x64xf32>
    %99 = vector.broadcast %98 : vector<1x64xf32> to vector<64x64xf32>
    %100 = arith.addf %97, %99 : vector<64x64xf32>
    %cst_58 = arith.constant 0.000000e+00 : f32
    %101 = vector.broadcast %cst_58 : f32 to vector<64x64xf32>
    %102 = arith.cmpf ogt, %100, %101 : vector<64x64xf32>
    %cst_59 = arith.constant 0.00999999977 : f32
    %103 = vector.broadcast %cst_59 : f32 to vector<64x64xf32>
    %104 = arith.mulf %103, %100 : vector<64x64xf32>
    %105 = arith.select %102, %100, %104 : vector<64x64xi1>, vector<64x64xf32>
    %106 = vector.shape_cast %105 : vector<64x64xf32> to vector<8x8x64xf32>
    %c1_60 = arith.constant 1 : index
    %c0_61 = arith.constant 0 : index
    %c0_62 = arith.constant 0 : index
    %107 = vector.load %arg20[%c1_60, %c0_61, %c0_62] : memref<9x8x64xf32, #tpu.memory_space<vmem>>, vector<8x8x64xf32>
    tpu.vector_store %arg20[%c1_60, %c0_61, %c0_62], %106 {strides = array<i32>} : memref<9x8x64xf32, #tpu.memory_space<vmem>>, vector<8x8x64xf32>,
    %c0_63 = arith.constant 0 : index
    %c0_64 = arith.constant 0 : index
    %c0_65 = arith.constant 0 : index
    %108 = vector.load %arg20[%c0_63, %c0_64, %c0_65] : memref<9x8x64xf32, #tpu.memory_space<vmem>>, vector<9x8x64xf32>
    %109 = vector.extract_strided_slice %108 {offsets = [0, 0, 0], sizes = [8, 8, 64], strides = [1, 1, 1]} : vector<9x8x64xf32> to vector<8x8x64xf32>
    %110 = vector.shape_cast %109 : vector<8x8x64xf32> to vector<4x2x8x64xf32>
    %111 = vector.extract_strided_slice %108 {offsets = [1, 0, 0], sizes = [8, 8, 64], strides = [1, 1, 1]} : vector<9x8x64xf32> to vector<8x8x64xf32>
    %112 = vector.shape_cast %111 : vector<8x8x64xf32> to vector<4x2x8x64xf32>
    %113 = vector.extract_strided_slice %110 {offsets = [0, 0, 0, 0], sizes = [4, 1, 8, 64], strides = [1, 1, 1, 1]} : vector<4x2x8x64xf32> to vector<4x1x8x64xf32>
    %114 = vector.shape_cast %113 : vector<4x1x8x64xf32> to vector<4x8x64xf32>
    %115 = vector.shape_cast %114 : vector<4x8x64xf32> to vector<32x64xf32>
    %116 = vector.extract_strided_slice %110 {offsets = [0, 1, 0, 0], sizes = [4, 1, 8, 64], strides = [1, 1, 1, 1]} : vector<4x2x8x64xf32> to vector<4x1x8x64xf32>
    %117 = vector.shape_cast %116 : vector<4x1x8x64xf32> to vector<4x8x64xf32>
    %118 = vector.shape_cast %117 : vector<4x8x64xf32> to vector<32x64xf32>
    %119 = vector.extract_strided_slice %112 {offsets = [0, 1, 0, 0], sizes = [4, 1, 8, 64], strides = [1, 1, 1, 1]} : vector<4x2x8x64xf32> to vector<4x1x8x64xf32>
    %120 = vector.shape_cast %119 : vector<4x1x8x64xf32> to vector<4x8x64xf32>
    %121 = vector.shape_cast %120 : vector<4x8x64xf32> to vector<32x64xf32>
    %c0_66 = arith.constant 0 : index
    %c0_67 = arith.constant 0 : index
    %c0_68 = arith.constant 0 : index
    %122 = vector.load %arg8[%c0_66, %c0_67, %c0_68] : memref<3x64x128xf32, #tpu.memory_space<vmem>>, vector<1x64x128xf32>
    %123 = vector.shape_cast %122 : vector<1x64x128xf32> to vector<64x128xf32>
    %cst_69 = arith.constant dense<0.000000e+00> : vector<32x128xf32>
    %124 = tpu.matmul %115, %123, %cst_69 {dimension_numbers = #tpu.dot_dimension_numbers<[1], [0], [0], [1], [0, 0, 1, 1], [], []>} : vector<32x64xf32>, vector<64x128xf32>, vector<32x128xf32> -> vector<32x128xf32>
    %c1_70 = arith.constant 1 : index
    %c0_71 = arith.constant 0 : index
    %c0_72 = arith.constant 0 : index
    %125 = vector.load %arg8[%c1_70, %c0_71, %c0_72] : memref<3x64x128xf32, #tpu.memory_space<vmem>>, vector<1x64x128xf32>
    %126 = vector.shape_cast %125 : vector<1x64x128xf32> to vector<64x128xf32>
    %cst_73 = arith.constant dense<0.000000e+00> : vector<32x128xf32>
    %127 = tpu.matmul %118, %126, %cst_73 {dimension_numbers = #tpu.dot_dimension_numbers<[1], [0], [0], [1], [0, 0, 1, 1], [], []>} : vector<32x64xf32>, vector<64x128xf32>, vector<32x128xf32> -> vector<32x128xf32>
    %128 = arith.addf %124, %127 : vector<32x128xf32>
    %c2_74 = arith.constant 2 : index
    %c0_75 = arith.constant 0 : index
    %c0_76 = arith.constant 0 : index
    %129 = vector.load %arg8[%c2_74, %c0_75, %c0_76] : memref<3x64x128xf32, #tpu.memory_space<vmem>>, vector<1x64x128xf32>
    %130 = vector.shape_cast %129 : vector<1x64x128xf32> to vector<64x128xf32>
    %cst_77 = arith.constant dense<0.000000e+00> : vector<32x128xf32>
    %131 = tpu.matmul %121, %130, %cst_77 {dimension_numbers = #tpu.dot_dimension_numbers<[1], [0], [0], [1], [0, 0, 1, 1], [], []>} : vector<32x64xf32>, vector<64x128xf32>, vector<32x128xf32> -> vector<32x128xf32>
    %132 = arith.addf %128, %131 : vector<32x128xf32>
    %c0_78 = arith.constant 0 : index
    %c0_79 = arith.constant 0 : index
    %133 = vector.load %arg9[%c0_78, %c0_79] : memref<1x128xf32, #tpu.memory_space<vmem>>, vector<1x128xf32>
    %134 = vector.broadcast %133 : vector<1x128xf32> to vector<32x128xf32>
    %135 = arith.addf %132, %134 : vector<32x128xf32>
    %cst_80 = arith.constant 0.000000e+00 : f32
    %136 = vector.broadcast %cst_80 : f32 to vector<32x128xf32>
    %137 = arith.cmpf ogt, %135, %136 : vector<32x128xf32>
    %cst_81 = arith.constant 0.00999999977 : f32
    %138 = vector.broadcast %cst_81 : f32 to vector<32x128xf32>
    %139 = arith.mulf %138, %135 : vector<32x128xf32>
    %140 = arith.select %137, %135, %139 : vector<32x128xi1>, vector<32x128xf32>
    %141 = vector.shape_cast %140 : vector<32x128xf32> to vector<4x8x128xf32>
    %c1_82 = arith.constant 1 : index
    %c0_83 = arith.constant 0 : index
    %c0_84 = arith.constant 0 : index
    %142 = vector.load %arg21[%c1_82, %c0_83, %c0_84] : memref<5x8x128xf32, #tpu.memory_space<vmem>>, vector<4x8x128xf32>
    tpu.vector_store %arg21[%c1_82, %c0_83, %c0_84], %141 {strides = array<i32>} : memref<5x8x128xf32, #tpu.memory_space<vmem>>, vector<4x8x128xf32>,
    %c0_85 = arith.constant 0 : index
    %c0_86 = arith.constant 0 : index
    %c0_87 = arith.constant 0 : index
    %143 = vector.load %arg21[%c0_85, %c0_86, %c0_87] : memref<5x8x128xf32, #tpu.memory_space<vmem>>, vector<5x8x128xf32>
    %144 = vector.extract_strided_slice %143 {offsets = [0, 0, 0], sizes = [4, 8, 128], strides = [1, 1, 1]} : vector<5x8x128xf32> to vector<4x8x128xf32>
    %145 = vector.shape_cast %144 : vector<4x8x128xf32> to vector<2x2x8x128xf32>
    %146 = vector.extract_strided_slice %143 {offsets = [1, 0, 0], sizes = [4, 8, 128], strides = [1, 1, 1]} : vector<5x8x128xf32> to vector<4x8x128xf32>
    %147 = vector.shape_cast %146 : vector<4x8x128xf32> to vector<2x2x8x128xf32>
    %148 = vector.extract_strided_slice %145 {offsets = [0, 0, 0, 0], sizes = [2, 1, 8, 128], strides = [1, 1, 1, 1]} : vector<2x2x8x128xf32> to vector<2x1x8x128xf32>
    %149 = vector.shape_cast %148 : vector<2x1x8x128xf32> to vector<2x8x128xf32>
    %150 = vector.shape_cast %149 : vector<2x8x128xf32> to vector<16x128xf32>
    %151 = vector.extract_strided_slice %145 {offsets = [0, 1, 0, 0], sizes = [2, 1, 8, 128], strides = [1, 1, 1, 1]} : vector<2x2x8x128xf32> to vector<2x1x8x128xf32>
    %152 = vector.shape_cast %151 : vector<2x1x8x128xf32> to vector<2x8x128xf32>
    %153 = vector.shape_cast %152 : vector<2x8x128xf32> to vector<16x128xf32>
    %154 = vector.extract_strided_slice %147 {offsets = [0, 1, 0, 0], sizes = [2, 1, 8, 128], strides = [1, 1, 1, 1]} : vector<2x2x8x128xf32> to vector<2x1x8x128xf32>
    %155 = vector.shape_cast %154 : vector<2x1x8x128xf32> to vector<2x8x128xf32>
    %156 = vector.shape_cast %155 : vector<2x8x128xf32> to vector<16x128xf32>
    %c0_88 = arith.constant 0 : index
    %c0_89 = arith.constant 0 : index
    %c0_90 = arith.constant 0 : index
    %157 = vector.load %arg10[%c0_88, %c0_89, %c0_90] : memref<3x128x256xf32, #tpu.memory_space<vmem>>, vector<1x128x256xf32>
    %158 = vector.shape_cast %157 : vector<1x128x256xf32> to vector<128x256xf32>
    %cst_91 = arith.constant dense<0.000000e+00> : vector<16x256xf32>
    %159 = tpu.matmul %150, %158, %cst_91 {dimension_numbers = #tpu.dot_dimension_numbers<[1], [0], [0], [1], [0, 0, 1, 1], [], []>} : vector<16x128xf32>, vector<128x256xf32>, vector<16x256xf32> -> vector<16x256xf32>
    %c1_92 = arith.constant 1 : index
    %c0_93 = arith.constant 0 : index
    %c0_94 = arith.constant 0 : index
    %160 = vector.load %arg10[%c1_92, %c0_93, %c0_94] : memref<3x128x256xf32, #tpu.memory_space<vmem>>, vector<1x128x256xf32>
    %161 = vector.shape_cast %160 : vector<1x128x256xf32> to vector<128x256xf32>
    %cst_95 = arith.constant dense<0.000000e+00> : vector<16x256xf32>
    %162 = tpu.matmul %153, %161, %cst_95 {dimension_numbers = #tpu.dot_dimension_numbers<[1], [0], [0], [1], [0, 0, 1, 1], [], []>} : vector<16x128xf32>, vector<128x256xf32>, vector<16x256xf32> -> vector<16x256xf32>
    %163 = arith.addf %159, %162 : vector<16x256xf32>
    %c2_96 = arith.constant 2 : index
    %c0_97 = arith.constant 0 : index
    %c0_98 = arith.constant 0 : index
    %164 = vector.load %arg10[%c2_96, %c0_97, %c0_98] : memref<3x128x256xf32, #tpu.memory_space<vmem>>, vector<1x128x256xf32>
    %165 = vector.shape_cast %164 : vector<1x128x256xf32> to vector<128x256xf32>
    %cst_99 = arith.constant dense<0.000000e+00> : vector<16x256xf32>
    %166 = tpu.matmul %156, %165, %cst_99 {dimension_numbers = #tpu.dot_dimension_numbers<[1], [0], [0], [1], [0, 0, 1, 1], [], []>} : vector<16x128xf32>, vector<128x256xf32>, vector<16x256xf32> -> vector<16x256xf32>
    %167 = arith.addf %163, %166 : vector<16x256xf32>
    %c0_100 = arith.constant 0 : index
    %c0_101 = arith.constant 0 : index
    %168 = vector.load %arg11[%c0_100, %c0_101] : memref<1x256xf32, #tpu.memory_space<vmem>>, vector<1x256xf32>
    %169 = vector.broadcast %168 : vector<1x256xf32> to vector<16x256xf32>
    %170 = arith.addf %167, %169 : vector<16x256xf32>
    %cst_102 = arith.constant 0.000000e+00 : f32
    %171 = vector.broadcast %cst_102 : f32 to vector<16x256xf32>
    %172 = arith.cmpf ogt, %170, %171 : vector<16x256xf32>
    %cst_103 = arith.constant 0.00999999977 : f32
    %173 = vector.broadcast %cst_103 : f32 to vector<16x256xf32>
    %174 = arith.mulf %173, %170 : vector<16x256xf32>
    %175 = arith.select %172, %170, %174 : vector<16x256xi1>, vector<16x256xf32>
    %c0_104 = arith.constant 0 : index
    %c0_105 = arith.constant 0 : index
    %176 = vector.load %arg12[%c0_104, %c0_105] : memref<256x512xf32, #tpu.memory_space<vmem>>, vector<256x512xf32>
    %cst_106 = arith.constant dense<0.000000e+00> : vector<16x512xf32>
    %177 = tpu.matmul %175, %176, %cst_106 {dimension_numbers = #tpu.dot_dimension_numbers<[1], [0], [0], [1], [0, 0, 1, 1], [], []>} : vector<16x256xf32>, vector<256x512xf32>, vector<16x512xf32> -> vector<16x512xf32>
    %c0_107 = arith.constant 0 : index
    %c0_108 = arith.constant 0 : index
    %178 = vector.load %arg13[%c0_107, %c0_108] : memref<1x512xf32, #tpu.memory_space<vmem>>, vector<1x512xf32>
    %179 = vector.broadcast %178 : vector<1x512xf32> to vector<16x512xf32>
    %180 = arith.addf %177, %179 : vector<16x512xf32>
    %cst_109 = arith.constant 0.000000e+00 : f32
    %181 = vector.broadcast %cst_109 : f32 to vector<16x512xf32>
    %182 = arith.cmpf ogt, %180, %181 : vector<16x512xf32>
    %cst_110 = arith.constant 0.00999999977 : f32
    %183 = vector.broadcast %cst_110 : f32 to vector<16x512xf32>
    %184 = arith.mulf %183, %180 : vector<16x512xf32>
    %185 = arith.select %182, %180, %184 : vector<16x512xi1>, vector<16x512xf32>
    %186 = vector.extract_strided_slice %185 {offsets = [0, 0], sizes = [8, 512], strides = [1, 1]} : vector<16x512xf32> to vector<8x512xf32>
    %c0_111 = arith.constant 0 : index
    %c0_112 = arith.constant 0 : index
    %187 = vector.load %arg14[%c0_111, %c0_112] : memref<512x32xf32, #tpu.memory_space<vmem>>, vector<512x32xf32>
    %cst_113 = arith.constant dense<0.000000e+00> : vector<8x32xf32>
    %188 = tpu.matmul %186, %187, %cst_113 {dimension_numbers = #tpu.dot_dimension_numbers<[1], [0], [0], [1], [0, 0, 1, 1], [], []>} : vector<8x512xf32>, vector<512x32xf32>, vector<8x32xf32> -> vector<8x32xf32>
    %189 = vector.extract_strided_slice %185 {offsets = [8, 0], sizes = [8, 512], strides = [1, 1]} : vector<16x512xf32> to vector<8x512xf32>
    %c0_114 = arith.constant 0 : index
    %c0_115 = arith.constant 0 : index
    %190 = vector.load %arg15[%c0_114, %c0_115] : memref<512x32xf32, #tpu.memory_space<vmem>>, vector<512x32xf32>
    %cst_116 = arith.constant dense<0.000000e+00> : vector<8x32xf32>
    %191 = tpu.matmul %189, %190, %cst_116 {dimension_numbers = #tpu.dot_dimension_numbers<[1], [0], [0], [1], [0, 0, 1, 1], [], []>} : vector<8x512xf32>, vector<512x32xf32>, vector<8x32xf32> -> vector<8x32xf32>
    %192 = arith.addf %188, %191 : vector<8x32xf32>
    %c0_117 = arith.constant 0 : index
    %c0_118 = arith.constant 0 : index
    %193 = vector.load %arg16[%c0_117, %c0_118] : memref<1x32xf32, #tpu.memory_space<vmem>>, vector<1x32xf32>
    %194 = vector.broadcast %193 : vector<1x32xf32> to vector<8x32xf32>
    %195 = arith.addf %192, %194 : vector<8x32xf32>
    %c0_119 = arith.constant 0 : index
    %c0_120 = arith.constant 0 : index
    %196 = vector.load %arg17[%c0_119, %c0_120] : memref<8x32xf32, #tpu.memory_space<vmem>>, vector<8x32xf32>
    tpu.vector_store %arg17[%c0_119, %c0_120], %195 {strides = array<i32>} : memref<8x32xf32, #tpu.memory_space<vmem>>, vector<8x32xf32>,
    return
  }
  func.func @transform_0(%arg0: i32) -> (i32, i32, i32) {
    %c0_i32 = arith.constant 0 : i32
    %c0_i32_0 = arith.constant 0 : i32
    %c0_i32_1 = arith.constant 0 : i32
    return %c0_i32, %arg0, %c0_i32_0 : i32, i32, i32
  }
  func.func @transform_1(%arg0: i32) -> (i32, i32, i32) {
    %c0_i32 = arith.constant 0 : i32
    %c0_i32_0 = arith.constant 0 : i32
    %c0_i32_1 = arith.constant 0 : i32
    %c0_i32_2 = arith.constant 0 : i32
    return %c0_i32, %c0_i32_0, %c0_i32_1 : i32, i32, i32
  }
  func.func @transform_2(%arg0: i32) -> (i32, i32) {
    %c0_i32 = arith.constant 0 : i32
    %c0_i32_0 = arith.constant 0 : i32
    %c0_i32_1 = arith.constant 0 : i32
    return %c0_i32, %c0_i32_0 : i32, i32
  }
  func.func @transform_3(%arg0: i32) -> (i32, i32, i32) {
    %c0_i32 = arith.constant 0 : i32
    %c0_i32_0 = arith.constant 0 : i32
    %c0_i32_1 = arith.constant 0 : i32
    %c0_i32_2 = arith.constant 0 : i32
    return %c0_i32, %c0_i32_0, %c0_i32_1 : i32, i32, i32
  }
  func.func @transform_4(%arg0: i32) -> (i32, i32) {
    %c0_i32 = arith.constant 0 : i32
    %c0_i32_0 = arith.constant 0 : i32
    %c0_i32_1 = arith.constant 0 : i32
    return %c0_i32, %c0_i32_0 : i32, i32
  }
  func.func @transform_5(%arg0: i32) -> (i32, i32, i32) {
    %c0_i32 = arith.constant 0 : i32
    %c0_i32_0 = arith.constant 0 : i32
    %c0_i32_1 = arith.constant 0 : i32
    %c0_i32_2 = arith.constant 0 : i32
    return %c0_i32, %c0_i32_0, %c0_i32_1 : i32, i32, i32
  }
  func.func @transform_6(%arg0: i32) -> (i32, i32) {
    %c0_i32 = arith.constant 0 : i32
    %c0_i32_0 = arith.constant 0 : i32
    %c0_i32_1 = arith.constant 0 : i32
    return %c0_i32, %c0_i32_0 : i32, i32
  }
  func.func @transform_7(%arg0: i32) -> (i32, i32, i32) {
    %c0_i32 = arith.constant 0 : i32
    %c0_i32_0 = arith.constant 0 : i32
    %c0_i32_1 = arith.constant 0 : i32
    %c0_i32_2 = arith.constant 0 : i32
    return %c0_i32, %c0_i32_0, %c0_i32_1 : i32, i32, i32
  }
  func.func @transform_8(%arg0: i32) -> (i32, i32) {
    %c0_i32 = arith.constant 0 : i32
    %c0_i32_0 = arith.constant 0 : i32
    %c0_i32_1 = arith.constant 0 : i32
    return %c0_i32, %c0_i32_0 : i32, i32
  }
  func.func @transform_9(%arg0: i32) -> (i32, i32, i32) {
    %c0_i32 = arith.constant 0 : i32
    %c0_i32_0 = arith.constant 0 : i32
    %c0_i32_1 = arith.constant 0 : i32
    %c0_i32_2 = arith.constant 0 : i32
    return %c0_i32, %c0_i32_0, %c0_i32_1 : i32, i32, i32
  }
  func.func @transform_10(%arg0: i32) -> (i32, i32) {
    %c0_i32 = arith.constant 0 : i32
    %c0_i32_0 = arith.constant 0 : i32
    %c0_i32_1 = arith.constant 0 : i32
    return %c0_i32, %c0_i32_0 : i32, i32
  }
  func.func @transform_11(%arg0: i32) -> (i32, i32) {
    %c0_i32 = arith.constant 0 : i32
    %c0_i32_0 = arith.constant 0 : i32
    %c0_i32_1 = arith.constant 0 : i32
    return %c0_i32, %c0_i32_0 : i32, i32
  }
  func.func @transform_12(%arg0: i32) -> (i32, i32) {
    %c0_i32 = arith.constant 0 : i32
    %c0_i32_0 = arith.constant 0 : i32
    %c0_i32_1 = arith.constant 0 : i32
    return %c0_i32, %c0_i32_0 : i32, i32
  }
  func.func @transform_13(%arg0: i32) -> (i32, i32) {
    %c0_i32 = arith.constant 0 : i32
    %c0_i32_0 = arith.constant 0 : i32
    %c0_i32_1 = arith.constant 0 : i32
    return %c0_i32, %c0_i32_0 : i32, i32
  }
  func.func @transform_14(%arg0: i32) -> (i32, i32) {
    %c0_i32 = arith.constant 0 : i32
    %c0_i32_0 = arith.constant 0 : i32
    %c0_i32_1 = arith.constant 0 : i32
    return %c0_i32, %c0_i32_0 : i32, i32
  }
  func.func @transform_15(%arg0: i32) -> (i32, i32) {
    %c0_i32 = arith.constant 0 : i32
    %c0_i32_0 = arith.constant 0 : i32
    %c0_i32_1 = arith.constant 0 : i32
    return %c0_i32, %c0_i32_0 : i32, i32
  }
  func.func @transform_16(%arg0: i32) -> (i32, i32) {
    %c0_i32 = arith.constant 0 : i32
    %c0_i32_0 = arith.constant 0 : i32
    return %arg0, %c0_i32 : i32, i32
  }
}

</mosaic_0001>

<llo_original>
// kernel: encoder_forward.1
$region0: #{encoder_forward.1}
  #allocation0 [shape = 'u32[]', space=smem, size = 0x4, offset = 0x4, fixed_abs, tag = 'smem constant byte address 0x4 - core index']
  #allocation1 [shape = 'u32[72,128]{1,0:T(1,128)}', space=vmem, size = 0x9000, scoped, tag = 'internal scratch']
  #allocation2 [shape = 'f32[33,8,16]{2,1,0:T(8,128)}', space=vmem, size = 0x21000, scoped, tag = 'scratch operand']
  #allocation3 [shape = 'f32[17,8,32]{2,1,0:T(8,128)}', space=vmem, size = 0x11000, scoped, tag = 'scratch operand']
  #allocation4 [shape = 'f32[9,8,64]{2,1,0:T(8,128)}', space=vmem, size = 0x9000, scoped, tag = 'scratch operand']
  #allocation5 [shape = 'f32[5,8,128]{2,1,0:T(8,128)}', space=vmem, size = 0x5000, scoped, tag = 'scratch operand']
  %s0 = inlined_call_operand.vmem [shape: f32[65,8,7], index: 0, kind: input, shape index: {}]
  %s1 = inlined_call_operand.vmem [shape: f32[3,7,16], index: 1, kind: input, shape index: {}]
  %s2 = inlined_call_operand.vmem [shape: f32[1,16], index: 2, kind: input, shape index: {}]
  %s3 = inlined_call_operand.vmem [shape: f32[3,16,32], index: 3, kind: input, shape index: {}]
  %s4 = inlined_call_operand.vmem [shape: f32[1,32], index: 4, kind: input, shape index: {}]
  %s5 = inlined_call_operand.vmem [shape: f32[3,32,64], index: 5, kind: input, shape index: {}]
  %s6 = inlined_call_operand.vmem [shape: f32[1,64], index: 6, kind: input, shape index: {}]
  %s7 = inlined_call_operand.vmem [shape: f32[3,64,128], index: 7, kind: input, shape index: {}]
  %s8 = inlined_call_operand.vmem [shape: f32[1,128], index: 8, kind: input, shape index: {}]
  %s9 = inlined_call_operand.vmem [shape: f32[3,128,256], index: 9, kind: input, shape index: {}]
  %s10 = inlined_call_operand.vmem [shape: f32[1,256], index: 10, kind: input, shape index: {}]
  %s11 = inlined_call_operand.vmem [shape: f32[256,512], index: 11, kind: input, shape index: {}]
  %s12 = inlined_call_operand.vmem [shape: f32[1,512], index: 12, kind: input, shape index: {}]
  %s13 = inlined_call_operand.vmem [shape: f32[512,32], index: 13, kind: input, shape index: {}]
  %s14 = inlined_call_operand.vmem [shape: f32[512,32], index: 14, kind: input, shape index: {}]
  %s15 = inlined_call_operand.vmem [shape: f32[1,32], index: 15, kind: input, shape index: {}]
  %s16 = inlined_call_operand.vmem [shape: f32[8,32], index: 16, kind: output, shape index: {}]
  %s17 = sld [smem:[#allocation0]]
  $region78: #{encoder_forward.1} parent=0
    _
  %s19 = ssub.s32 1, %s17
  %s20 = scalar_select 0, %s19, %s17
  // Predicated region
  $region2: #{encoder_forward.1} parent=0 // pred_check
    _
  $region3: #{encoder_forward.1} parent=0 // pred_check_branch
    %22 = sbr.rel (0) target = $region5
  $region4: #{encoder_forward.1} parent=0 // pred_region
    _
  $region5: #{encoder_forward.1} parent=0 // pred_fallthru
    _
  // Predicated region
  $region6: #{encoder_forward.1} parent=0 // pred_check
    _
  $region7: #{encoder_forward.1} parent=0 // pred_check_branch
    %24 = sbr.rel (0) target = $region9
  $region8: #{encoder_forward.1} parent=0 // pred_region
    _
  $region9: #{encoder_forward.1} parent=0 // pred_fallthru
    _
  // Predicated region
  $region10: #{encoder_forward.1} parent=0 // pred_check
    _
  $region11: #{encoder_forward.1} parent=0 // pred_check_branch
    %26 = sbr.rel (0) target = $region13
  $region12: #{encoder_forward.1} parent=0 // pred_region
    _
  $region13: #{encoder_forward.1} parent=0 // pred_fallthru
    _
  // Predicated region
  $region14: #{encoder_forward.1} parent=0 // pred_check
    _
  $region15: #{encoder_forward.1} parent=0 // pred_check_branch
    %28 = sbr.rel (0) target = $region17
  $region16: #{encoder_forward.1} parent=0 // pred_region
    _
  $region17: #{encoder_forward.1} parent=0 // pred_fallthru
    _
  // Predicated region
  $region18: #{encoder_forward.1} parent=0 // pred_check
    _
  $region19: #{encoder_forward.1} parent=0 // pred_check_branch
    %30 = sbr.rel (0) target = $region21
  $region20: #{encoder_forward.1} parent=0 // pred_region
    _
  $region21: #{encoder_forward.1} parent=0 // pred_fallthru
    _
  // Predicated region
  $region22: #{encoder_forward.1} parent=0 // pred_check
    _
  $region23: #{encoder_forward.1} parent=0 // pred_check_branch
    %32 = sbr.rel (0) target = $region25
  $region24: #{encoder_forward.1} parent=0 // pred_region
    _
  $region25: #{encoder_forward.1} parent=0 // pred_fallthru
    _
  // Predicated region
  $region26: #{encoder_forward.1} parent=0 // pred_check
    _
  $region27: #{encoder_forward.1} parent=0 // pred_check_branch
    %34 = sbr.rel (0) target = $region29
  $region28: #{encoder_forward.1} parent=0 // pred_region
    _
  $region29: #{encoder_forward.1} parent=0 // pred_fallthru
    _
  // Predicated region
  $region30: #{encoder_forward.1} parent=0 // pred_check
    _
  $region31: #{encoder_forward.1} parent=0 // pred_check_branch
    %36 = sbr.rel (0) target = $region33
  $region32: #{encoder_forward.1} parent=0 // pred_region
    _
  $region33: #{encoder_forward.1} parent=0 // pred_fallthru
    _
  // Predicated region
  $region34: #{encoder_forward.1} parent=0 // pred_check
    _
  $region35: #{encoder_forward.1} parent=0 // pred_check_branch
    %38 = sbr.rel (0) target = $region37
  $region36: #{encoder_forward.1} parent=0 // pred_region
    _
  $region37: #{encoder_forward.1} parent=0 // pred_fallthru
    _
  // Predicated region
  $region38: #{encoder_forward.1} parent=0 // pred_check
    _
  $region39: #{encoder_forward.1} parent=0 // pred_check_branch
    %40 = sbr.rel (0) target = $region41
  $region40: #{encoder_forward.1} parent=0 // pred_region
    _
  $region41: #{encoder_forward.1} parent=0 // pred_fallthru
    _
  // Predicated region
  $region42: #{encoder_forward.1} parent=0 // pred_check
    _
  $region43: #{encoder_forward.1} parent=0 // pred_check_branch
    %42 = sbr.rel (0) target = $region45
  $region44: #{encoder_forward.1} parent=0 // pred_region
    _
  $region45: #{encoder_forward.1} parent=0 // pred_fallthru
    _
  // Predicated region
  $region46: #{encoder_forward.1} parent=0 // pred_check
    _
  $region47: #{encoder_forward.1} parent=0 // pred_check_branch
    %44 = sbr.rel (0) target = $region49
  $region48: #{encoder_forward.1} parent=0 // pred_region
    _
  $region49: #{encoder_forward.1} parent=0 // pred_fallthru
    _
  // Predicated region
  $region50: #{encoder_forward.1} parent=0 // pred_check
    _
  $region51: #{encoder_forward.1} parent=0 // pred_check_branch
    %46 = sbr.rel (0) target = $region53
  $region52: #{encoder_forward.1} parent=0 // pred_region
    _
  $region53: #{encoder_forward.1} parent=0 // pred_fallthru
    _
  // Predicated region
  $region54: #{encoder_forward.1} parent=0 // pred_check
    _
  $region55: #{encoder_forward.1} parent=0 // pred_check_branch
    %48 = sbr.rel (0) target = $region57
  $region56: #{encoder_forward.1} parent=0 // pred_region
    _
  $region57: #{encoder_forward.1} parent=0 // pred_fallthru
    _
  // Predicated region
  $region58: #{encoder_forward.1} parent=0 // pred_check
    _
  $region59: #{encoder_forward.1} parent=0 // pred_check_branch
    %50 = sbr.rel (0) target = $region61
  $region60: #{encoder_forward.1} parent=0 // pred_region
    _
  $region61: #{encoder_forward.1} parent=0 // pred_fallthru
    _
  // Predicated region
  $region62: #{encoder_forward.1} parent=0 // pred_check
    _
  $region63: #{encoder_forward.1} parent=0 // pred_check_branch
    %52 = sbr.rel (0) target = $region65
  $region64: #{encoder_forward.1} parent=0 // pred_region
    _
  $region65: #{encoder_forward.1} parent=0 // pred_fallthru
    _
  %p53 = scmp.eq.s32.totalorder 0, 0
  // Predicated region
  $region66: #{encoder_forward.1} parent=0 // pred_check
    %p54 = pneg %p53
  $region67: #{encoder_forward.1} parent=0 // pred_check_branch
    %56 = sbr.rel (%p54) target = $region69
  $region68: #{encoder_forward.1} parent=0 // pred_region
    %vm57 = vcmask 130048
    %58 = vst.msk [vmem:[#allocation2] sm:$0xff] %vm57, 0.0
    %vm59 = vcmask 261120
    %60 = vst.msk [vmem:[#allocation3] sm:$0xff] %vm59, 0.0
    %vm61 = vcmask 523264
    %62 = vst.msk [vmem:[#allocation4] sm:$0xff] %vm61, 0.0
    %63 = vst [vmem:[#allocation5] sm:$0xff] 0.0
  $region69: #{encoder_forward.1} parent=0 // pred_fallthru
    _
  %v64 = vld [vmem:[%s0] sm:$0xff]
  %v65 = vld [vmem:[%s0 + $0x8] sm:$0xff]
  %v66 = vld [vmem:[%s0 + $0x10] sm:$0xff]
  %v67 = vld [vmem:[%s0 + $0x18] sm:$0xff]
  %v68 = vld [vmem:[%s0 + $0x20] sm:$0xff]
  %v69 = vld [vmem:[%s0 + $0x28] sm:$0xff]
  %v70 = vld [vmem:[%s0 + $0x30] sm:$0xff]
  %v71 = vld [vmem:[%s0 + $0x38] sm:$0xff]
  %v72 = vld [vmem:[%s0 + $0x40] sm:$0xff]
  %v73 = vld [vmem:[%s0 + $0x48] sm:$0xff]
  %v74 = vld [vmem:[%s0 + $0x50] sm:$0xff]
  %v75 = vld [vmem:[%s0 + $0x58] sm:$0xff]
  %v76 = vld [vmem:[%s0 + $0x60] sm:$0xff]
  %v77 = vld [vmem:[%s0 + $0x68] sm:$0xff]
  %v78 = vld [vmem:[%s0 + $0x70] sm:$0xff]
  %v79 = vld [vmem:[%s0 + $0x78] sm:$0xff]
  %v80 = vld [vmem:[%s0 + $0x80] sm:$0xff]
  %v81 = vld [vmem:[%s0 + $0x88] sm:$0xff]
  %v82 = vld [vmem:[%s0 + $0x90] sm:$0xff]
  %v83 = vld [vmem:[%s0 + $0x98] sm:$0xff]
  %v84 = vld [vmem:[%s0 + $0xa0] sm:$0xff]
  %v85 = vld [vmem:[%s0 + $0xa8] sm:$0xff]
  %v86 = vld [vmem:[%s0 + $0xb0] sm:$0xff]
  %v87 = vld [vmem:[%s0 + $0xb8] sm:$0xff]
  %v88 = vld [vmem:[%s0 + $0xc0] sm:$0xff]
  %v89 = vld [vmem:[%s0 + $0xc8] sm:$0xff]
  %v90 = vld [vmem:[%s0 + $0xd0] sm:$0xff]
  %v91 = vld [vmem:[%s0 + $0xd8] sm:$0xff]
  %v92 = vld [vmem:[%s0 + $0xe0] sm:$0xff]
  %v93 = vld [vmem:[%s0 + $0xe8] sm:$0xff]
  %v94 = vld [vmem:[%s0 + $0xf0] sm:$0xff]
  %v95 = vld [vmem:[%s0 + $0xf8] sm:$0xff]
  %v96 = vld [vmem:[%s0 + $0x100] sm:$0xff]
  %v97 = vld [vmem:[%s0 + $0x108] sm:$0xff]
  %v98 = vld [vmem:[%s0 + $0x110] sm:$0xff]
  %v99 = vld [vmem:[%s0 + $0x118] sm:$0xff]
  %v100 = vld [vmem:[%s0 + $0x120] sm:$0xff]
  %v101 = vld [vmem:[%s0 + $0x128] sm:$0xff]
  %v102 = vld [vmem:[%s0 + $0x130] sm:$0xff]
  %v103 = vld [vmem:[%s0 + $0x138] sm:$0xff]
  %v104 = vld [vmem:[%s0 + $0x140] sm:$0xff]
  %v105 = vld [vmem:[%s0 + $0x148] sm:$0xff]
  %v106 = vld [vmem:[%s0 + $0x150] sm:$0xff]
  %v107 = vld [vmem:[%s0 + $0x158] sm:$0xff]
  %v108 = vld [vmem:[%s0 + $0x160] sm:$0xff]
  %v109 = vld [vmem:[%s0 + $0x168] sm:$0xff]
  %v110 = vld [vmem:[%s0 + $0x170] sm:$0xff]
  %v111 = vld [vmem:[%s0 + $0x178] sm:$0xff]
  %v112 = vld [vmem:[%s0 + $0x180] sm:$0xff]
  %v113 = vld [vmem:[%s0 + $0x188] sm:$0xff]
  %v114 = vld [vmem:[%s0 + $0x190] sm:$0xff]
  %v115 = vld [vmem:[%s0 + $0x198] sm:$0xff]
  %v116 = vld [vmem:[%s0 + $0x1a0] sm:$0xff]
  %v117 = vld [vmem:[%s0 + $0x1a8] sm:$0xff]
  %v118 = vld [vmem:[%s0 + $0x1b0] sm:$0xff]
  %v119 = vld [vmem:[%s0 + $0x1b8] sm:$0xff]
  %v120 = vld [vmem:[%s0 + $0x1c0] sm:$0xff]
  %v121 = vld [vmem:[%s0 + $0x1c8] sm:$0xff]
  %v122 = vld [vmem:[%s0 + $0x1d0] sm:$0xff]
  %v123 = vld [vmem:[%s0 + $0x1d8] sm:$0xff]
  %v124 = vld [vmem:[%s0 + $0x1e0] sm:$0xff]
  %v125 = vld [vmem:[%s0 + $0x1e8] sm:$0xff]
  %v126 = vld [vmem:[%s0 + $0x1f0] sm:$0xff]
  %v127 = vld [vmem:[%s0 + $0x1f8] sm:$0xff]
  %v128 = vld [vmem:[%s0 + $0x200] sm:$0xff]
  %v129 = vld [vmem:[%s1] sm:$0x7f]
  %s130 = scalar_lea.vmem %s1, 8
  %v131 = vld [vmem:[%s130] sm:$0x7f]
  %vm132 = vcmask 56320
  %v134 = vsel %vm132, %v65, 0
  %v137 = vsel %vm132, %v67, 0
  %v140 = vsel %vm132, %v69, 0
  %v143 = vsel %vm132, %v71, 0
  %v146 = vsel %vm132, %v73, 0
  %v149 = vsel %vm132, %v75, 0
  %v152 = vsel %vm132, %v77, 0
  %v155 = vsel %vm132, %v79, 0
  %v158 = vsel %vm132, %v81, 0
  %v161 = vsel %vm132, %v83, 0
  %v164 = vsel %vm132, %v85, 0
  %v167 = vsel %vm132, %v87, 0
  %v170 = vsel %vm132, %v89, 0
  %v173 = vsel %vm132, %v91, 0
  %v176 = vsel %vm132, %v93, 0
  %v179 = vsel %vm132, %v95, 0
  %v182 = vsel %vm132, %v97, 0
  %v185 = vsel %vm132, %v99, 0
  %v188 = vsel %vm132, %v101, 0
  %v191 = vsel %vm132, %v103, 0
  %v194 = vsel %vm132, %v105, 0
  %v197 = vsel %vm132, %v107, 0
  %v200 = vsel %vm132, %v109, 0
  %v203 = vsel %vm132, %v111, 0
  %v206 = vsel %vm132, %v113, 0
  %v209 = vsel %vm132, %v115, 0
  %v212 = vsel %vm132, %v117, 0
  %v215 = vsel %vm132, %v119, 0
  %v218 = vsel %vm132, %v121, 0
  %v221 = vsel %vm132, %v123, 0
  %v224 = vsel %vm132, %v125, 0
  %v227 = vsel %vm132, %v127, 0
  %vm229 = vcmask 1046528
  %v231 = vsel %vm229, %v131, 0
  %233 = vmatpush.msra.mxu0 0.0
  %234 = vmatpush.msra.mxu0 0.0
  %235 = vmatpush.msra.mxu0 0.0
  %236 = vmatpush.msra.mxu0 0.0
  %237 = vmatpush.msra.mxu0 0.0
  %238 = vmatpush.msra.mxu0 0.0
  %239 = vmatpush.msra.mxu0 0.0
  %240 = vmatpush.msra.mxu0 0.0
  %241 = vmatpush.msra.mxu0 0.0
  %242 = vmatpush.msra.mxu0 0.0
  %243 = vmatpush.msra.mxu0 0.0
  %244 = vmatpush.msra.mxu0 0.0
  %245 = vmatpush.msra.mxu0 0.0
  %246 = vmatpush.msra.mxu0 0.0
  %247 = vmatpush.msra.mxu0 0.0
  %248 = vmatpush.msra.mxu0 %v231
  %249 = vmatmul.f32.gmra.mxu0 %v134
  %v250 = vpop.f32.mrf.mxu0
  %v251 = vadd.f32 0.0, %v250
  %252 = vmatmul.f32.gmra.mxu0 %v137
  %v253 = vpop.f32.mrf.mxu0
  %v254 = vadd.f32 0.0, %v253
  %255 = vmatmul.f32.gmra.mxu0 %v140
  %v256 = vpop.f32.mrf.mxu0
  %v257 = vadd.f32 0.0, %v256
  %258 = vmatmul.f32.gmra.mxu0 %v143
  %v259 = vpop.f32.mrf.mxu0
  %v260 = vadd.f32 0.0, %v259
  %261 = vmatmul.f32.gmra.mxu0 %v146
  %v262 = vpop.f32.mrf.mxu0
  %v263 = vadd.f32 0.0, %v262
  %264 = vmatmul.f32.gmra.mxu0 %v149
  %v265 = vpop.f32.mrf.mxu0
  %v266 = vadd.f32 0.0, %v265
  %267 = vmatmul.f32.gmra.mxu0 %v152
  %v268 = vpop.f32.mrf.mxu0
  %v269 = vadd.f32 0.0, %v268
  %270 = vmatmul.f32.gmra.mxu0 %v155
  %v271 = vpop.f32.mrf.mxu0
  %v272 = vadd.f32 0.0, %v271
  %273 = vmatmul.f32.gmra.mxu0 %v158
  %v274 = vpop.f32.mrf.mxu0
  %v275 = vadd.f32 0.0, %v274
  %276 = vmatmul.f32.gmra.mxu0 %v161
  %v277 = vpop.f32.mrf.mxu0
  %v278 = vadd.f32 0.0, %v277
  %279 = vmatmul.f32.gmra.mxu0 %v164
  %v280 = vpop.f32.mrf.mxu0
  %v281 = vadd.f32 0.0, %v280
  %282 = vmatmul.f32.gmra.mxu0 %v167
  %v283 = vpop.f32.mrf.mxu0
  %v284 = vadd.f32 0.0, %v283
  %285 = vmatmul.f32.gmra.mxu0 %v170
  %v286 = vpop.f32.mrf.mxu0
  %v287 = vadd.f32 0.0, %v286
  %288 = vmatmul.f32.gmra.mxu0 %v173
  %v289 = vpop.f32.mrf.mxu0
  %v290 = vadd.f32 0.0, %v289
  %291 = vmatmul.f32.gmra.mxu0 %v176
  %v292 = vpop.f32.mrf.mxu0
  %v293 = vadd.f32 0.0, %v292
  %294 = vmatmul.f32.gmra.mxu0 %v179
  %v295 = vpop.f32.mrf.mxu0
  %v296 = vadd.f32 0.0, %v295
  %297 = vmatmul.f32.gmra.mxu0 %v182
  %v298 = vpop.f32.mrf.mxu0
  %v299 = vadd.f32 0.0, %v298
  %300 = vmatmul.f32.gmra.mxu0 %v185
  %v301 = vpop.f32.mrf.mxu0
  %v302 = vadd.f32 0.0, %v301
  %303 = vmatmul.f32.gmra.mxu0 %v188
  %v304 = vpop.f32.mrf.mxu0
  %v305 = vadd.f32 0.0, %v304
  %306 = vmatmul.f32.gmra.mxu0 %v191
  %v307 = vpop.f32.mrf.mxu0
  %v308 = vadd.f32 0.0, %v307
  %309 = vmatmul.f32.gmra.mxu0 %v194
  %v310 = vpop.f32.mrf.mxu0
  %v311 = vadd.f32 0.0, %v310
  %312 = vmatmul.f32.gmra.mxu0 %v197
  %v313 = vpop.f32.mrf.mxu0
  %v314 = vadd.f32 0.0, %v313
  %315 = vmatmul.f32.gmra.mxu0 %v200
  %v316 = vpop.f32.mrf.mxu0
  %v317 = vadd.f32 0.0, %v316
  %318 = vmatmul.f32.gmra.mxu0 %v203
  %v319 = vpop.f32.mrf.mxu0
  %v320 = vadd.f32 0.0, %v319
  %321 = vmatmul.f32.gmra.mxu0 %v206
  %v322 = vpop.f32.mrf.mxu0
  %v323 = vadd.f32 0.0, %v322
  %324 = vmatmul.f32.gmra.mxu0 %v209
  %v325 = vpop.f32.mrf.mxu0
  %v326 = vadd.f32 0.0, %v325
  %327 = vmatmul.f32.gmra.mxu0 %v212
  %v328 = vpop.f32.mrf.mxu0
  %v329 = vadd.f32 0.0, %v328
  %330 = vmatmul.f32.gmra.mxu0 %v215
  %v331 = vpop.f32.mrf.mxu0
  %v332 = vadd.f32 0.0, %v331
  %333 = vmatmul.f32.gmra.mxu0 %v218
  %v334 = vpop.f32.mrf.mxu0
  %v335 = vadd.f32 0.0, %v334
  %336 = vmatmul.f32.gmra.mxu0 %v221
  %v337 = vpop.f32.mrf.mxu0
  %v338 = vadd.f32 0.0, %v337
  %339 = vmatmul.f32.gmra.mxu0 %v224
  %v340 = vpop.f32.mrf.mxu0
  %v341 = vadd.f32 0.0, %v340
  %342 = vmatmul.f32.gmra.mxu0 %v227
  %v343 = vpop.f32.mrf.mxu0
  %v344 = vadd.f32 0.0, %v343
  %345 = vdwg.mxu0
  %v347 = vsel %vm132, %v64, 0
  %v350 = vsel %vm132, %v66, 0
  %v353 = vsel %vm132, %v68, 0
  %v356 = vsel %vm132, %v70, 0
  %v359 = vsel %vm132, %v72, 0
  %v362 = vsel %vm132, %v74, 0
  %v365 = vsel %vm132, %v76, 0
  %v368 = vsel %vm132, %v78, 0
  %v371 = vsel %vm132, %v80, 0
  %v374 = vsel %vm132, %v82, 0
  %v377 = vsel %vm132, %v84, 0
  %v380 = vsel %vm132, %v86, 0
  %v383 = vsel %vm132, %v88, 0
  %v386 = vsel %vm132, %v90, 0
  %v389 = vsel %vm132, %v92, 0
  %v392 = vsel %vm132, %v94, 0
  %v395 = vsel %vm132, %v96, 0
  %v398 = vsel %vm132, %v98, 0
  %v401 = vsel %vm132, %v100, 0
  %v404 = vsel %vm132, %v102, 0
  %v407 = vsel %vm132, %v104, 0
  %v410 = vsel %vm132, %v106, 0
  %v413 = vsel %vm132, %v108, 0
  %v416 = vsel %vm132, %v110, 0
  %v419 = vsel %vm132, %v112, 0
  %v422 = vsel %vm132, %v114, 0
  %v425 = vsel %vm132, %v116, 0
  %v428 = vsel %vm132, %v118, 0
  %v431 = vsel %vm132, %v120, 0
  %v434 = vsel %vm132, %v122, 0
  %v437 = vsel %vm132, %v124, 0
  %v440 = vsel %vm132, %v126, 0
  %v443 = vsel %vm229, %v129, 0
  %445 = vmatpush.msra.mxu0 0.0
  %446 = vmatpush.msra.mxu0 0.0
  %447 = vmatpush.msra.mxu0 0.0
  %448 = vmatpush.msra.mxu0 0.0
  %449 = vmatpush.msra.mxu0 0.0
  %450 = vmatpush.msra.mxu0 0.0
  %451 = vmatpush.msra.mxu0 0.0
  %452 = vmatpush.msra.mxu0 0.0
  %453 = vmatpush.msra.mxu0 0.0
  %454 = vmatpush.msra.mxu0 0.0
  %455 = vmatpush.msra.mxu0 0.0
  %456 = vmatpush.msra.mxu0 0.0
  %457 = vmatpush.msra.mxu0 0.0
  %458 = vmatpush.msra.mxu0 0.0
  %459 = vmatpush.msra.mxu0 0.0
  %460 = vmatpush.msra.mxu0 %v443
  %461 = vmatmul.f32.gmra.mxu0 %v347
  %v462 = vpop.f32.mrf.mxu0
  %v463 = vadd.f32 %v251, %v462
  %464 = vmatmul.f32.gmra.mxu0 %v350
  %v465 = vpop.f32.mrf.mxu0
  %v466 = vadd.f32 %v254, %v465
  %467 = vmatmul.f32.gmra.mxu0 %v353
  %v468 = vpop.f32.mrf.mxu0
  %v469 = vadd.f32 %v257, %v468
  %470 = vmatmul.f32.gmra.mxu0 %v356
  %v471 = vpop.f32.mrf.mxu0
  %v472 = vadd.f32 %v260, %v471
  %473 = vmatmul.f32.gmra.mxu0 %v359
  %v474 = vpop.f32.mrf.mxu0
  %v475 = vadd.f32 %v263, %v474
  %476 = vmatmul.f32.gmra.mxu0 %v362
  %v477 = vpop.f32.mrf.mxu0
  %v478 = vadd.f32 %v266, %v477
  %479 = vmatmul.f32.gmra.mxu0 %v365
  %v480 = vpop.f32.mrf.mxu0
  %v481 = vadd.f32 %v269, %v480
  %482 = vmatmul.f32.gmra.mxu0 %v368
  %v483 = vpop.f32.mrf.mxu0
  %v484 = vadd.f32 %v272, %v483
  %485 = vmatmul.f32.gmra.mxu0 %v371
  %v486 = vpop.f32.mrf.mxu0
  %v487 = vadd.f32 %v275, %v486
  %488 = vmatmul.f32.gmra.mxu0 %v374
  %v489 = vpop.f32.mrf.mxu0
  %v490 = vadd.f32 %v278, %v489
  %491 = vmatmul.f32.gmra.mxu0 %v377
  %v492 = vpop.f32.mrf.mxu0
  %v493 = vadd.f32 %v281, %v492
  %494 = vmatmul.f32.gmra.mxu0 %v380
  %v495 = vpop.f32.mrf.mxu0
  %v496 = vadd.f32 %v284, %v495
  %497 = vmatmul.f32.gmra.mxu0 %v383
  %v498 = vpop.f32.mrf.mxu0
  %v499 = vadd.f32 %v287, %v498
  %500 = vmatmul.f32.gmra.mxu0 %v386
  %v501 = vpop.f32.mrf.mxu0
  %v502 = vadd.f32 %v290, %v501
  %503 = vmatmul.f32.gmra.mxu0 %v389
  %v504 = vpop.f32.mrf.mxu0
  %v505 = vadd.f32 %v293, %v504
  %506 = vmatmul.f32.gmra.mxu0 %v392
  %v507 = vpop.f32.mrf.mxu0
  %v508 = vadd.f32 %v296, %v507
  %509 = vmatmul.f32.gmra.mxu0 %v395
  %v510 = vpop.f32.mrf.mxu0
  %v511 = vadd.f32 %v299, %v510
  %512 = vmatmul.f32.gmra.mxu0 %v398
  %v513 = vpop.f32.mrf.mxu0
  %v514 = vadd.f32 %v302, %v513
  %515 = vmatmul.f32.gmra.mxu0 %v401
  %v516 = vpop.f32.mrf.mxu0
  %v517 = vadd.f32 %v305, %v516
  %518 = vmatmul.f32.gmra.mxu0 %v404
  %v519 = vpop.f32.mrf.mxu0
  %v520 = vadd.f32 %v308, %v519
  %521 = vmatmul.f32.gmra.mxu0 %v407
  %v522 = vpop.f32.mrf.mxu0
  %v523 = vadd.f32 %v311, %v522
  %524 = vmatmul.f32.gmra.mxu0 %v410
  %v525 = vpop.f32.mrf.mxu0
  %v526 = vadd.f32 %v314, %v525
  %527 = vmatmul.f32.gmra.mxu0 %v413
  %v528 = vpop.f32.mrf.mxu0
  %v529 = vadd.f32 %v317, %v528
  %530 = vmatmul.f32.gmra.mxu0 %v416
  %v531 = vpop.f32.mrf.mxu0
  %v532 = vadd.f32 %v320, %v531
  %533 = vmatmul.f32.gmra.mxu0 %v419
  %v534 = vpop.f32.mrf.mxu0
  %v535 = vadd.f32 %v323, %v534
  %536 = vmatmul.f32.gmra.mxu0 %v422
  %v537 = vpop.f32.mrf.mxu0
  %v538 = vadd.f32 %v326, %v537
  %539 = vmatmul.f32.gmra.mxu0 %v425
  %v540 = vpop.f32.mrf.mxu0
  %v541 = vadd.f32 %v329, %v540
  %542 = vmatmul.f32.gmra.mxu0 %v428
  %v543 = vpop.f32.mrf.mxu0
  %v544 = vadd.f32 %v332, %v543
  %545 = vmatmul.f32.gmra.mxu0 %v431
  %v546 = vpop.f32.mrf.mxu0
  %v547 = vadd.f32 %v335, %v546
  %548 = vmatmul.f32.gmra.mxu0 %v434
  %v549 = vpop.f32.mrf.mxu0
  %v550 = vadd.f32 %v338, %v549
  %551 = vmatmul.f32.gmra.mxu0 %v437
  %v552 = vpop.f32.mrf.mxu0
  %v553 = vadd.f32 %v341, %v552
  %554 = vmatmul.f32.gmra.mxu0 %v440
  %v555 = vpop.f32.mrf.mxu0
  %v556 = vadd.f32 %v344, %v555
  %557 = vdwg.mxu0
  %s558 = scalar_lea.vmem %s1, 16
  %v559 = vld [vmem:[%s558] sm:$0x7f]
  %v561 = vsel %vm132, %v128, 0
  %v564 = vsel %vm229, %v559, 0
  %566 = vmatpush.msra.mxu0 0.0
  %567 = vmatpush.msra.mxu0 0.0
  %568 = vmatpush.msra.mxu0 0.0
  %569 = vmatpush.msra.mxu0 0.0
  %570 = vmatpush.msra.mxu0 0.0
  %571 = vmatpush.msra.mxu0 0.0
  %572 = vmatpush.msra.mxu0 0.0
  %573 = vmatpush.msra.mxu0 0.0
  %574 = vmatpush.msra.mxu0 0.0
  %575 = vmatpush.msra.mxu0 0.0
  %576 = vmatpush.msra.mxu0 0.0
  %577 = vmatpush.msra.mxu0 0.0
  %578 = vmatpush.msra.mxu0 0.0
  %579 = vmatpush.msra.mxu0 0.0
  %580 = vmatpush.msra.mxu0 0.0
  %581 = vmatpush.msra.mxu0 %v564
  %582 = vmatmul.f32.gmra.mxu0 %v350
  %v583 = vpop.f32.mrf.mxu0
  %v584 = vadd.f32 0.0, %v583
  %585 = vmatmul.f32.gmra.mxu0 %v353
  %v586 = vpop.f32.mrf.mxu0
  %v587 = vadd.f32 0.0, %v586
  %588 = vmatmul.f32.gmra.mxu0 %v356
  %v589 = vpop.f32.mrf.mxu0
  %v590 = vadd.f32 0.0, %v589
  %591 = vmatmul.f32.gmra.mxu0 %v359
  %v592 = vpop.f32.mrf.mxu0
  %v593 = vadd.f32 0.0, %v592
  %594 = vmatmul.f32.gmra.mxu0 %v362
  %v595 = vpop.f32.mrf.mxu0
  %v596 = vadd.f32 0.0, %v595
  %597 = vmatmul.f32.gmra.mxu0 %v365
  %v598 = vpop.f32.mrf.mxu0
  %v599 = vadd.f32 0.0, %v598
  %600 = vmatmul.f32.gmra.mxu0 %v368
  %v601 = vpop.f32.mrf.mxu0
  %v602 = vadd.f32 0.0, %v601
  %603 = vmatmul.f32.gmra.mxu0 %v371
  %v604 = vpop.f32.mrf.mxu0
  %v605 = vadd.f32 0.0, %v604
  %606 = vmatmul.f32.gmra.mxu0 %v374
  %v607 = vpop.f32.mrf.mxu0
  %v608 = vadd.f32 0.0, %v607
  %609 = vmatmul.f32.gmra.mxu0 %v377
  %v610 = vpop.f32.mrf.mxu0
  %v611 = vadd.f32 0.0, %v610
  %612 = vmatmul.f32.gmra.mxu0 %v380
  %v613 = vpop.f32.mrf.mxu0
  %v614 = vadd.f32 0.0, %v613
  %615 = vmatmul.f32.gmra.mxu0 %v383
  %v616 = vpop.f32.mrf.mxu0
  %v617 = vadd.f32 0.0, %v616
  %618 = vmatmul.f32.gmra.mxu0 %v386
  %v619 = vpop.f32.mrf.mxu0
  %v620 = vadd.f32 0.0, %v619
  %621 = vmatmul.f32.gmra.mxu0 %v389
  %v622 = vpop.f32.mrf.mxu0
  %v623 = vadd.f32 0.0, %v622
  %624 = vmatmul.f32.gmra.mxu0 %v392
  %v625 = vpop.f32.mrf.mxu0
  %v626 = vadd.f32 0.0, %v625
  %627 = vmatmul.f32.gmra.mxu0 %v395
  %v628 = vpop.f32.mrf.mxu0
  %v629 = vadd.f32 0.0, %v628
  %630 = vmatmul.f32.gmra.mxu0 %v398
  %v631 = vpop.f32.mrf.mxu0
  %v632 = vadd.f32 0.0, %v631
  %633 = vmatmul.f32.gmra.mxu0 %v401
  %v634 = vpop.f32.mrf.mxu0
  %v635 = vadd.f32 0.0, %v634
  %636 = vmatmul.f32.gmra.mxu0 %v404
  %v637 = vpop.f32.mrf.mxu0
  %v638 = vadd.f32 0.0, %v637
  %639 = vmatmul.f32.gmra.mxu0 %v407
  %v640 = vpop.f32.mrf.mxu0
  %v641 = vadd.f32 0.0, %v640
  %642 = vmatmul.f32.gmra.mxu0 %v410
  %v643 = vpop.f32.mrf.mxu0
  %v644 = vadd.f32 0.0, %v643
  %645 = vmatmul.f32.gmra.mxu0 %v413
  %v646 = vpop.f32.mrf.mxu0
  %v647 = vadd.f32 0.0, %v646
  %648 = vmatmul.f32.gmra.mxu0 %v416
  %v649 = vpop.f32.mrf.mxu0
  %v650 = vadd.f32 0.0, %v649
  %651 = vmatmul.f32.gmra.mxu0 %v419
  %v652 = vpop.f32.mrf.mxu0
  %v653 = vadd.f32 0.0, %v652
  %654 = vmatmul.f32.gmra.mxu0 %v422
  %v655 = vpop.f32.mrf.mxu0
  %v656 = vadd.f32 0.0, %v655
  %657 = vmatmul.f32.gmra.mxu0 %v425
  %v658 = vpop.f32.mrf.mxu0
  %v659 = vadd.f32 0.0, %v658
  %660 = vmatmul.f32.gmra.mxu0 %v428
  %v661 = vpop.f32.mrf.mxu0
  %v662 = vadd.f32 0.0, %v661
  %663 = vmatmul.f32.gmra.mxu0 %v431
  %v664 = vpop.f32.mrf.mxu0
  %v665 = vadd.f32 0.0, %v664
  %666 = vmatmul.f32.gmra.mxu0 %v434
  %v667 = vpop.f32.mrf.mxu0
  %v668 = vadd.f32 0.0, %v667
  %669 = vmatmul.f32.gmra.mxu0 %v437
  %v670 = vpop.f32.mrf.mxu0
  %v671 = vadd.f32 0.0, %v670
  %672 = vmatmul.f32.gmra.mxu0 %v440
  %v673 = vpop.f32.mrf.mxu0
  %v674 = vadd.f32 0.0, %v673
  %675 = vmatmul.f32.gmra.mxu0 %v561
  %v676 = vpop.f32.mrf.mxu0
  %v677 = vadd.f32 0.0, %v676
  %678 = vdwg.mxu0
  %v679 = vadd.f32 %v463, %v584
  %v680 = vadd.f32 %v466, %v587
  %v681 = vadd.f32 %v469, %v590
  %v682 = vadd.f32 %v472, %v593
  %v683 = vadd.f32 %v475, %v596
  %v684 = vadd.f32 %v478, %v599
  %v685 = vadd.f32 %v481, %v602
  %v686 = vadd.f32 %v484, %v605
  %v687 = vadd.f32 %v487, %v608
  %v688 = vadd.f32 %v490, %v611
  %v689 = vadd.f32 %v493, %v614
  %v690 = vadd.f32 %v496, %v617
  %v691 = vadd.f32 %v499, %v620
  %v692 = vadd.f32 %v502, %v623
  %v693 = vadd.f32 %v505, %v626
  %v694 = vadd.f32 %v508, %v629
  %v695 = vadd.f32 %v511, %v632
  %v696 = vadd.f32 %v514, %v635
  %v697 = vadd.f32 %v517, %v638
  %v698 = vadd.f32 %v520, %v641
  %v699 = vadd.f32 %v523, %v644
  %v700 = vadd.f32 %v526, %v647
  %v701 = vadd.f32 %v529, %v650
  %v702 = vadd.f32 %v532, %v653
  %v703 = vadd.f32 %v535, %v656
  %v704 = vadd.f32 %v538, %v659
  %v705 = vadd.f32 %v541, %v662
  %v706 = vadd.f32 %v544, %v665
  %v707 = vadd.f32 %v547, %v668
  %v708 = vadd.f32 %v550, %v671
  %v709 = vadd.f32 %v553, %v674
  %v710 = vadd.f32 %v556, %v677
  %v711 = vld [vmem:[%s2] sm:$0x1]
  %v713 = vperm.slane %v711, 0
  %v715 = vadd.f32 %v679, %v713
  %v716 = vadd.f32 %v680, %v713
  %v717 = vadd.f32 %v681, %v713
  %v718 = vadd.f32 %v682, %v713
  %v719 = vadd.f32 %v683, %v713
  %v720 = vadd.f32 %v684, %v713
  %v721 = vadd.f32 %v685, %v713
  %v722 = vadd.f32 %v686, %v713
  %v723 = vadd.f32 %v687, %v713
  %v724 = vadd.f32 %v688, %v713
  %v725 = vadd.f32 %v689, %v713
  %v726 = vadd.f32 %v690, %v713
  %v727 = vadd.f32 %v691, %v713
  %v728 = vadd.f32 %v692, %v713
  %v729 = vadd.f32 %v693, %v713
  %v730 = vadd.f32 %v694, %v713
  %v731 = vadd.f32 %v695, %v713
  %v732 = vadd.f32 %v696, %v713
  %v733 = vadd.f32 %v697, %v713
  %v734 = vadd.f32 %v698, %v713
  %v735 = vadd.f32 %v699, %v713
  %v736 = vadd.f32 %v700, %v713
  %v737 = vadd.f32 %v701, %v713
  %v738 = vadd.f32 %v702, %v713
  %v739 = vadd.f32 %v703, %v713
  %v740 = vadd.f32 %v704, %v713
  %v741 = vadd.f32 %v705, %v713
  %v742 = vadd.f32 %v706, %v713
  %v743 = vadd.f32 %v707, %v713
  %v744 = vadd.f32 %v708, %v713
  %v745 = vadd.f32 %v709, %v713
  %v746 = vadd.f32 %v710, %v713
  %vm747 = vcmp.gt.f32.partialorder %v715, 0.0
  %vm748 = vcmp.gt.f32.partialorder %v716, 0.0
  %vm749 = vcmp.gt.f32.partialorder %v717, 0.0
  %vm750 = vcmp.gt.f32.partialorder %v718, 0.0
  %vm751 = vcmp.gt.f32.partialorder %v719, 0.0
  %vm752 = vcmp.gt.f32.partialorder %v720, 0.0
  %vm753 = vcmp.gt.f32.partialorder %v721, 0.0
  %vm754 = vcmp.gt.f32.partialorder %v722, 0.0
  %vm755 = vcmp.gt.f32.partialorder %v723, 0.0
  %vm756 = vcmp.gt.f32.partialorder %v724, 0.0
  %vm757 = vcmp.gt.f32.partialorder %v725, 0.0
  %vm758 = vcmp.gt.f32.partialorder %v726, 0.0
  %vm759 = vcmp.gt.f32.partialorder %v727, 0.0
  %vm760 = vcmp.gt.f32.partialorder %v728, 0.0
  %vm761 = vcmp.gt.f32.partialorder %v729, 0.0
  %vm762 = vcmp.gt.f32.partialorder %v730, 0.0
  %vm763 = vcmp.gt.f32.partialorder %v731, 0.0
  %vm764 = vcmp.gt.f32.partialorder %v732, 0.0
  %vm765 = vcmp.gt.f32.partialorder %v733, 0.0
  %vm766 = vcmp.gt.f32.partialorder %v734, 0.0
  %vm767 = vcmp.gt.f32.partialorder %v735, 0.0
  %vm768 = vcmp.gt.f32.partialorder %v736, 0.0
  %vm769 = vcmp.gt.f32.partialorder %v737, 0.0
  %vm770 = vcmp.gt.f32.partialorder %v738, 0.0
  %vm771 = vcmp.gt.f32.partialorder %v739, 0.0
  %vm772 = vcmp.gt.f32.partialorder %v740, 0.0
  %vm773 = vcmp.gt.f32.partialorder %v741, 0.0
  %vm774 = vcmp.gt.f32.partialorder %v742, 0.0
  %vm775 = vcmp.gt.f32.partialorder %v743, 0.0
  %vm776 = vcmp.gt.f32.partialorder %v744, 0.0
  %vm777 = vcmp.gt.f32.partialorder %v745, 0.0
  %vm778 = vcmp.gt.f32.partialorder %v746, 0.0
  %v779 = vmul.f32 %v715, 0.01
  %v780 = vmul.f32 %v716, 0.01
  %v781 = vmul.f32 %v717, 0.01
  %v782 = vmul.f32 %v718, 0.01
  %v783 = vmul.f32 %v719, 0.01
  %v784 = vmul.f32 %v720, 0.01
  %v785 = vmul.f32 %v721, 0.01
  %v786 = vmul.f32 %v722, 0.01
  %v787 = vmul.f32 %v723, 0.01
  %v788 = vmul.f32 %v724, 0.01
  %v789 = vmul.f32 %v725, 0.01
  %v790 = vmul.f32 %v726, 0.01
  %v791 = vmul.f32 %v727, 0.01
  %v792 = vmul.f32 %v728, 0.01
  %v793 = vmul.f32 %v729, 0.01
  %v794 = vmul.f32 %v730, 0.01
  %v795 = vmul.f32 %v731, 0.01
  %v796 = vmul.f32 %v732, 0.01
  %v797 = vmul.f32 %v733, 0.01
  %v798 = vmul.f32 %v734, 0.01
  %v799 = vmul.f32 %v735, 0.01
  %v800 = vmul.f32 %v736, 0.01
  %v801 = vmul.f32 %v737, 0.01
  %v802 = vmul.f32 %v738, 0.01
  %v803 = vmul.f32 %v739, 0.01
  %v804 = vmul.f32 %v740, 0.01
  %v805 = vmul.f32 %v741, 0.01
  %v806 = vmul.f32 %v742, 0.01
  %v807 = vmul.f32 %v743, 0.01
  %v808 = vmul.f32 %v744, 0.01
  %v809 = vmul.f32 %v745, 0.01
  %v810 = vmul.f32 %v746, 0.01
  %v811 = vsel %vm747, %v715, %v779
  %v812 = vsel %vm748, %v716, %v780
  %v813 = vsel %vm749, %v717, %v781
  %v814 = vsel %vm750, %v718, %v782
  %v815 = vsel %vm751, %v719, %v783
  %v816 = vsel %vm752, %v720, %v784
  %v817 = vsel %vm753, %v721, %v785
  %v818 = vsel %vm754, %v722, %v786
  %v819 = vsel %vm755, %v723, %v787
  %v820 = vsel %vm756, %v724, %v788
  %v821 = vsel %vm757, %v725, %v789
  %v822 = vsel %vm758, %v726, %v790
  %v823 = vsel %vm759, %v727, %v791
  %v824 = vsel %vm760, %v728, %v792
  %v825 = vsel %vm761, %v729, %v793
  %v826 = vsel %vm762, %v730, %v794
  %v827 = vsel %vm763, %v731, %v795
  %v828 = vsel %vm764, %v732, %v796
  %v829 = vsel %vm765, %v733, %v797
  %v830 = vsel %vm766, %v734, %v798
  %v831 = vsel %vm767, %v735, %v799
  %v832 = vsel %vm768, %v736, %v800
  %v833 = vsel %vm769, %v737, %v801
  %v834 = vsel %vm770, %v738, %v802
  %v835 = vsel %vm771, %v739, %v803
  %v836 = vsel %vm772, %v740, %v804
  %v837 = vsel %vm773, %v741, %v805
  %v838 = vsel %vm774, %v742, %v806
  %v839 = vsel %vm775, %v743, %v807
  %v840 = vsel %vm776, %v744, %v808
  %v841 = vsel %vm777, %v745, %v809
  %v842 = vsel %vm778, %v746, %v810
  %s843 = scalar_lea.vmem [#allocation2], 8
  %vm844 = vcmask 130048
  %845 = vst.msk [vmem:[%s843] sm:$0xff] %vm844, %v811
  %846 = vst.msk [vmem:[%s843 + $0x8] sm:$0xff] %vm844, %v812
  %847 = vst.msk [vmem:[%s843 + $0x10] sm:$0xff] %vm844, %v813
  %848 = vst.msk [vmem:[%s843 + $0x18] sm:$0xff] %vm844, %v814
  %849 = vst.msk [vmem:[%s843 + $0x20] sm:$0xff] %vm844, %v815
  %850 = vst.msk [vmem:[%s843 + $0x28] sm:$0xff] %vm844, %v816
  %851 = vst.msk [vmem:[%s843 + $0x30] sm:$0xff] %vm844, %v817
  %852 = vst.msk [vmem:[%s843 + $0x38] sm:$0xff] %vm844, %v818
  %853 = vst.msk [vmem:[%s843 + $0x40] sm:$0xff] %vm844, %v819
  %854 = vst.msk [vmem:[%s843 + $0x48] sm:$0xff] %vm844, %v820
  %855 = vst.msk [vmem:[%s843 + $0x50] sm:$0xff] %vm844, %v821
  %856 = vst.msk [vmem:[%s843 + $0x58] sm:$0xff] %vm844, %v822
  %857 = vst.msk [vmem:[%s843 + $0x60] sm:$0xff] %vm844, %v823
  %858 = vst.msk [vmem:[%s843 + $0x68] sm:$0xff] %vm844, %v824
  %859 = vst.msk [vmem:[%s843 + $0x70] sm:$0xff] %vm844, %v825
  %860 = vst.msk [vmem:[%s843 + $0x78] sm:$0xff] %vm844, %v826
  %861 = vst.msk [vmem:[%s843 + $0x80] sm:$0xff] %vm844, %v827
  %862 = vst.msk [vmem:[%s843 + $0x88] sm:$0xff] %vm844, %v828
  %863 = vst.msk [vmem:[%s843 + $0x90] sm:$0xff] %vm844, %v829
  %864 = vst.msk [vmem:[%s843 + $0x98] sm:$0xff] %vm844, %v830
  %865 = vst.msk [vmem:[%s843 + $0xa0] sm:$0xff] %vm844, %v831
  %866 = vst.msk [vmem:[%s843 + $0xa8] sm:$0xff] %vm844, %v832
  %867 = vst.msk [vmem:[%s843 + $0xb0] sm:$0xff] %vm844, %v833
  %868 = vst.msk [vmem:[%s843 + $0xb8] sm:$0xff] %vm844, %v834
  %869 = vst.msk [vmem:[%s843 + $0xc0] sm:$0xff] %vm844, %v835
  %870 = vst.msk [vmem:[%s843 + $0xc8] sm:$0xff] %vm844, %v836
  %871 = vst.msk [vmem:[%s843 + $0xd0] sm:$0xff] %vm844, %v837
  %872 = vst.msk [vmem:[%s843 + $0xd8] sm:$0xff] %vm844, %v838
  %873 = vst.msk [vmem:[%s843 + $0xe0] sm:$0xff] %vm844, %v839
  %874 = vst.msk [vmem:[%s843 + $0xe8] sm:$0xff] %vm844, %v840
  %875 = vst.msk [vmem:[%s843 + $0xf0] sm:$0xff] %vm844, %v841
  %876 = vst.msk [vmem:[%s843 + $0xf8] sm:$0xff] %vm844, %v842
  %v877 = vld [vmem:[#allocation2] sm:$0xff]
  %v878 = vld [vmem:[#allocation2 + $0x8] sm:$0xff]
  %v879 = vld [vmem:[#allocation2 + $0x10] sm:$0xff]
  %v880 = vld [vmem:[#allocation2 + $0x18] sm:$0xff]
  %v881 = vld [vmem:[#allocation2 + $0x20] sm:$0xff]
  %v882 = vld [vmem:[#allocation2 + $0x28] sm:$0xff]
  %v883 = vld [vmem:[#allocation2 + $0x30] sm:$0xff]
  %v884 = vld [vmem:[#allocation2 + $0x38] sm:$0xff]
  %v885 = vld [vmem:[#allocation2 + $0x40] sm:$0xff]
  %v886 = vld [vmem:[#allocation2 + $0x48] sm:$0xff]
  %v887 = vld [vmem:[#allocation2 + $0x50] sm:$0xff]
  %v888 = vld [vmem:[#allocation2 + $0x58] sm:$0xff]
  %v889 = vld [vmem:[#allocation2 + $0x60] sm:$0xff]
  %v890 = vld [vmem:[#allocation2 + $0x68] sm:$0xff]
  %v891 = vld [vmem:[#allocation2 + $0x70] sm:$0xff]
  %v892 = vld [vmem:[#allocation2 + $0x78] sm:$0xff]
  %v893 = vld [vmem:[#allocation2 + $0x80] sm:$0xff]
  %v894 = vld [vmem:[#allocation2 + $0x88] sm:$0xff]
  %v895 = vld [vmem:[#allocation2 + $0x90] sm:$0xff]
  %v896 = vld [vmem:[#allocation2 + $0x98] sm:$0xff]
  %v897 = vld [vmem:[#allocation2 + $0xa0] sm:$0xff]
  %v898 = vld [vmem:[#allocation2 + $0xa8] sm:$0xff]
  %v899 = vld [vmem:[#allocation2 + $0xb0] sm:$0xff]
  %v900 = vld [vmem:[#allocation2 + $0xb8] sm:$0xff]
  %v901 = vld [vmem:[#allocation2 + $0xc0] sm:$0xff]
  %v902 = vld [vmem:[#allocation2 + $0xc8] sm:$0xff]
  %v903 = vld [vmem:[#allocation2 + $0xd0] sm:$0xff]
  %v904 = vld [vmem:[#allocation2 + $0xd8] sm:$0xff]
  %v905 = vld [vmem:[#allocation2 + $0xe0] sm:$0xff]
  %v906 = vld [vmem:[#allocation2 + $0xe8] sm:$0xff]
  %v907 = vld [vmem:[#allocation2 + $0xf0] sm:$0xff]
  %v908 = vld [vmem:[#allocation2 + $0xf8] sm:$0xff]
  %v909 = vld [vmem:[#allocation2 + $0x100] sm:$0xff]
  %v910 = vld [vmem:[%s3] sm:$0xff]
  %v911 = vld [vmem:[%s3 + $0x8] sm:$0xff]
  %s912 = scalar_lea.vmem %s3, 16
  %v913 = vld [vmem:[%s912] sm:$0xff]
  %v914 = vld [vmem:[%s912 + $0x8] sm:$0xff]
  %v916 = vsel %vm844, %v878, 0
  %v919 = vsel %vm844, %v880, 0
  %v922 = vsel %vm844, %v882, 0
  %v925 = vsel %vm844, %v884, 0
  %v928 = vsel %vm844, %v886, 0
  %v931 = vsel %vm844, %v888, 0
  %v934 = vsel %vm844, %v890, 0
  %v937 = vsel %vm844, %v892, 0
  %v940 = vsel %vm844, %v894, 0
  %v943 = vsel %vm844, %v896, 0
  %v946 = vsel %vm844, %v898, 0
  %v949 = vsel %vm844, %v900, 0
  %v952 = vsel %vm844, %v902, 0
  %v955 = vsel %vm844, %v904, 0
  %v958 = vsel %vm844, %v906, 0
  %v961 = vsel %vm844, %v908, 0
  %963 = vmatpush.msra.mxu0 0.0
  %964 = vmatpush.msra.mxu0 0.0
  %965 = vmatpush.msra.mxu0 0.0
  %966 = vmatpush.msra.mxu0 0.0
  %967 = vmatpush.msra.mxu0 0.0
  %968 = vmatpush.msra.mxu0 0.0
  %969 = vmatpush.msra.mxu0 0.0
  %970 = vmatpush.msra.mxu0 0.0
  %971 = vmatpush.msra.mxu0 0.0
  %972 = vmatpush.msra.mxu0 0.0
  %973 = vmatpush.msra.mxu0 0.0
  %974 = vmatpush.msra.mxu0 0.0
  %975 = vmatpush.msra.mxu0 0.0
  %976 = vmatpush.msra.mxu0 0.0
  %977 = vmatpush.msra.mxu0 %v914
  %978 = vmatpush.msra.mxu0 %v913
  %979 = vmatmul.f32.gmra.mxu0 %v916
  %v980 = vpop.f32.mrf.mxu0
  %v981 = vadd.f32 0.0, %v980
  %982 = vmatmul.f32.gmra.mxu0 %v919
  %v983 = vpop.f32.mrf.mxu0
  %v984 = vadd.f32 0.0, %v983
  %985 = vmatmul.f32.gmra.mxu0 %v922
  %v986 = vpop.f32.mrf.mxu0
  %v987 = vadd.f32 0.0, %v986
  %988 = vmatmul.f32.gmra.mxu0 %v925
  %v989 = vpop.f32.mrf.mxu0
  %v990 = vadd.f32 0.0, %v989
  %991 = vmatmul.f32.gmra.mxu0 %v928
  %v992 = vpop.f32.mrf.mxu0
  %v993 = vadd.f32 0.0, %v992
  %994 = vmatmul.f32.gmra.mxu0 %v931
  %v995 = vpop.f32.mrf.mxu0
  %v996 = vadd.f32 0.0, %v995
  %997 = vmatmul.f32.gmra.mxu0 %v934
  %v998 = vpop.f32.mrf.mxu0
  %v999 = vadd.f32 0.0, %v998
  %1000 = vmatmul.f32.gmra.mxu0 %v937
  %v1001 = vpop.f32.mrf.mxu0
  %v1002 = vadd.f32 0.0, %v1001
  %1003 = vmatmul.f32.gmra.mxu0 %v940
  %v1004 = vpop.f32.mrf.mxu0
  %v1005 = vadd.f32 0.0, %v1004
  %1006 = vmatmul.f32.gmra.mxu0 %v943
  %v1007 = vpop.f32.mrf.mxu0
  %v1008 = vadd.f32 0.0, %v1007
  %1009 = vmatmul.f32.gmra.mxu0 %v946
  %v1010 = vpop.f32.mrf.mxu0
  %v1011 = vadd.f32 0.0, %v1010
  %1012 = vmatmul.f32.gmra.mxu0 %v949
  %v1013 = vpop.f32.mrf.mxu0
  %v1014 = vadd.f32 0.0, %v1013
  %1015 = vmatmul.f32.gmra.mxu0 %v952
  %v1016 = vpop.f32.mrf.mxu0
  %v1017 = vadd.f32 0.0, %v1016
  %1018 = vmatmul.f32.gmra.mxu0 %v955
  %v1019 = vpop.f32.mrf.mxu0
  %v1020 = vadd.f32 0.0, %v1019
  %1021 = vmatmul.f32.gmra.mxu0 %v958
  %v1022 = vpop.f32.mrf.mxu0
  %v1023 = vadd.f32 0.0, %v1022
  %1024 = vmatmul.f32.gmra.mxu0 %v961
  %v1025 = vpop.f32.mrf.mxu0
  %v1026 = vadd.f32 0.0, %v1025
  %1027 = vdwg.mxu0
  %v1029 = vsel %vm844, %v877, 0
  %v1032 = vsel %vm844, %v879, 0
  %v1035 = vsel %vm844, %v881, 0
  %v1038 = vsel %vm844, %v883, 0
  %v1041 = vsel %vm844, %v885, 0
  %v1044 = vsel %vm844, %v887, 0
  %v1047 = vsel %vm844, %v889, 0
  %v1050 = vsel %vm844, %v891, 0
  %v1053 = vsel %vm844, %v893, 0
  %v1056 = vsel %vm844, %v895, 0
  %v1059 = vsel %vm844, %v897, 0
  %v1062 = vsel %vm844, %v899, 0
  %v1065 = vsel %vm844, %v901, 0
  %v1068 = vsel %vm844, %v903, 0
  %v1071 = vsel %vm844, %v905, 0
  %v1074 = vsel %vm844, %v907, 0
  %1076 = vmatpush.msra.mxu0 0.0
  %1077 = vmatpush.msra.mxu0 0.0
  %1078 = vmatpush.msra.mxu0 0.0
  %1079 = vmatpush.msra.mxu0 0.0
  %1080 = vmatpush.msra.mxu0 0.0
  %1081 = vmatpush.msra.mxu0 0.0
  %1082 = vmatpush.msra.mxu0 0.0
  %1083 = vmatpush.msra.mxu0 0.0
  %1084 = vmatpush.msra.mxu0 0.0
  %1085 = vmatpush.msra.mxu0 0.0
  %1086 = vmatpush.msra.mxu0 0.0
  %1087 = vmatpush.msra.mxu0 0.0
  %1088 = vmatpush.msra.mxu0 0.0
  %1089 = vmatpush.msra.mxu0 0.0
  %1090 = vmatpush.msra.mxu0 %v911
  %1091 = vmatpush.msra.mxu0 %v910
  %1092 = vmatmul.f32.gmra.mxu0 %v1029
  %v1093 = vpop.f32.mrf.mxu0
  %v1094 = vadd.f32 %v981, %v1093
  %1095 = vmatmul.f32.gmra.mxu0 %v1032
  %v1096 = vpop.f32.mrf.mxu0
  %v1097 = vadd.f32 %v984, %v1096
  %1098 = vmatmul.f32.gmra.mxu0 %v1035
  %v1099 = vpop.f32.mrf.mxu0
  %v1100 = vadd.f32 %v987, %v1099
  %1101 = vmatmul.f32.gmra.mxu0 %v1038
  %v1102 = vpop.f32.mrf.mxu0
  %v1103 = vadd.f32 %v990, %v1102
  %1104 = vmatmul.f32.gmra.mxu0 %v1041
  %v1105 = vpop.f32.mrf.mxu0
  %v1106 = vadd.f32 %v993, %v1105
  %1107 = vmatmul.f32.gmra.mxu0 %v1044
  %v1108 = vpop.f32.mrf.mxu0
  %v1109 = vadd.f32 %v996, %v1108
  %1110 = vmatmul.f32.gmra.mxu0 %v1047
  %v1111 = vpop.f32.mrf.mxu0
  %v1112 = vadd.f32 %v999, %v1111
  %1113 = vmatmul.f32.gmra.mxu0 %v1050
  %v1114 = vpop.f32.mrf.mxu0
  %v1115 = vadd.f32 %v1002, %v1114
  %1116 = vmatmul.f32.gmra.mxu0 %v1053
  %v1117 = vpop.f32.mrf.mxu0
  %v1118 = vadd.f32 %v1005, %v1117
  %1119 = vmatmul.f32.gmra.mxu0 %v1056
  %v1120 = vpop.f32.mrf.mxu0
  %v1121 = vadd.f32 %v1008, %v1120
  %1122 = vmatmul.f32.gmra.mxu0 %v1059
  %v1123 = vpop.f32.mrf.mxu0
  %v1124 = vadd.f32 %v1011, %v1123
  %1125 = vmatmul.f32.gmra.mxu0 %v1062
  %v1126 = vpop.f32.mrf.mxu0
  %v1127 = vadd.f32 %v1014, %v1126
  %1128 = vmatmul.f32.gmra.mxu0 %v1065
  %v1129 = vpop.f32.mrf.mxu0
  %v1130 = vadd.f32 %v1017, %v1129
  %1131 = vmatmul.f32.gmra.mxu0 %v1068
  %v1132 = vpop.f32.mrf.mxu0
  %v1133 = vadd.f32 %v1020, %v1132
  %1134 = vmatmul.f32.gmra.mxu0 %v1071
  %v1135 = vpop.f32.mrf.mxu0
  %v1136 = vadd.f32 %v1023, %v1135
  %1137 = vmatmul.f32.gmra.mxu0 %v1074
  %v1138 = vpop.f32.mrf.mxu0
  %v1139 = vadd.f32 %v1026, %v1138
  %1140 = vdwg.mxu0
  %s1141 = scalar_lea.vmem %s3, 32
  %v1142 = vld [vmem:[%s1141] sm:$0xff]
  %v1143 = vld [vmem:[%s1141 + $0x8] sm:$0xff]
  %v1145 = vsel %vm844, %v909, 0
  %1147 = vmatpush.msra.mxu0 0.0
  %1148 = vmatpush.msra.mxu0 0.0
  %1149 = vmatpush.msra.mxu0 0.0
  %1150 = vmatpush.msra.mxu0 0.0
  %1151 = vmatpush.msra.mxu0 0.0
  %1152 = vmatpush.msra.mxu0 0.0
  %1153 = vmatpush.msra.mxu0 0.0
  %1154 = vmatpush.msra.mxu0 0.0
  %1155 = vmatpush.msra.mxu0 0.0
  %1156 = vmatpush.msra.mxu0 0.0
  %1157 = vmatpush.msra.mxu0 0.0
  %1158 = vmatpush.msra.mxu0 0.0
  %1159 = vmatpush.msra.mxu0 0.0
  %1160 = vmatpush.msra.mxu0 0.0
  %1161 = vmatpush.msra.mxu0 %v1143
  %1162 = vmatpush.msra.mxu0 %v1142
  %1163 = vmatmul.f32.gmra.mxu0 %v1032
  %v1164 = vpop.f32.mrf.mxu0
  %v1165 = vadd.f32 0.0, %v1164
  %1166 = vmatmul.f32.gmra.mxu0 %v1035
  %v1167 = vpop.f32.mrf.mxu0
  %v1168 = vadd.f32 0.0, %v1167
  %1169 = vmatmul.f32.gmra.mxu0 %v1038
  %v1170 = vpop.f32.mrf.mxu0
  %v1171 = vadd.f32 0.0, %v1170
  %1172 = vmatmul.f32.gmra.mxu0 %v1041
  %v1173 = vpop.f32.mrf.mxu0
  %v1174 = vadd.f32 0.0, %v1173
  %1175 = vmatmul.f32.gmra.mxu0 %v1044
  %v1176 = vpop.f32.mrf.mxu0
  %v1177 = vadd.f32 0.0, %v1176
  %1178 = vmatmul.f32.gmra.mxu0 %v1047
  %v1179 = vpop.f32.mrf.mxu0
  %v1180 = vadd.f32 0.0, %v1179
  %1181 = vmatmul.f32.gmra.mxu0 %v1050
  %v1182 = vpop.f32.mrf.mxu0
  %v1183 = vadd.f32 0.0, %v1182
  %1184 = vmatmul.f32.gmra.mxu0 %v1053
  %v1185 = vpop.f32.mrf.mxu0
  %v1186 = vadd.f32 0.0, %v1185
  %1187 = vmatmul.f32.gmra.mxu0 %v1056
  %v1188 = vpop.f32.mrf.mxu0
  %v1189 = vadd.f32 0.0, %v1188
  %1190 = vmatmul.f32.gmra.mxu0 %v1059
  %v1191 = vpop.f32.mrf.mxu0
  %v1192 = vadd.f32 0.0, %v1191
  %1193 = vmatmul.f32.gmra.mxu0 %v1062
  %v1194 = vpop.f32.mrf.mxu0
  %v1195 = vadd.f32 0.0, %v1194
  %1196 = vmatmul.f32.gmra.mxu0 %v1065
  %v1197 = vpop.f32.mrf.mxu0
  %v1198 = vadd.f32 0.0, %v1197
  %1199 = vmatmul.f32.gmra.mxu0 %v1068
  %v1200 = vpop.f32.mrf.mxu0
  %v1201 = vadd.f32 0.0, %v1200
  %1202 = vmatmul.f32.gmra.mxu0 %v1071
  %v1203 = vpop.f32.mrf.mxu0
  %v1204 = vadd.f32 0.0, %v1203
  %1205 = vmatmul.f32.gmra.mxu0 %v1074
  %v1206 = vpop.f32.mrf.mxu0
  %v1207 = vadd.f32 0.0, %v1206
  %1208 = vmatmul.f32.gmra.mxu0 %v1145
  %v1209 = vpop.f32.mrf.mxu0
  %v1210 = vadd.f32 0.0, %v1209
  %1211 = vdwg.mxu0
  %v1212 = vadd.f32 %v1094, %v1165
  %v1213 = vadd.f32 %v1097, %v1168
  %v1214 = vadd.f32 %v1100, %v1171
  %v1215 = vadd.f32 %v1103, %v1174
  %v1216 = vadd.f32 %v1106, %v1177
  %v1217 = vadd.f32 %v1109, %v1180
  %v1218 = vadd.f32 %v1112, %v1183
  %v1219 = vadd.f32 %v1115, %v1186
  %v1220 = vadd.f32 %v1118, %v1189
  %v1221 = vadd.f32 %v1121, %v1192
  %v1222 = vadd.f32 %v1124, %v1195
  %v1223 = vadd.f32 %v1127, %v1198
  %v1224 = vadd.f32 %v1130, %v1201
  %v1225 = vadd.f32 %v1133, %v1204
  %v1226 = vadd.f32 %v1136, %v1207
  %v1227 = vadd.f32 %v1139, %v1210
  %v1228 = vld [vmem:[%s4] sm:$0x1]
  %v1230 = vperm.slane %v1228, 0
  %v1232 = vadd.f32 %v1212, %v1230
  %v1233 = vadd.f32 %v1213, %v1230
  %v1234 = vadd.f32 %v1214, %v1230
  %v1235 = vadd.f32 %v1215, %v1230
  %v1236 = vadd.f32 %v1216, %v1230
  %v1237 = vadd.f32 %v1217, %v1230
  %v1238 = vadd.f32 %v1218, %v1230
  %v1239 = vadd.f32 %v1219, %v1230
  %v1240 = vadd.f32 %v1220, %v1230
  %v1241 = vadd.f32 %v1221, %v1230
  %v1242 = vadd.f32 %v1222, %v1230
  %v1243 = vadd.f32 %v1223, %v1230
  %v1244 = vadd.f32 %v1224, %v1230
  %v1245 = vadd.f32 %v1225, %v1230
  %v1246 = vadd.f32 %v1226, %v1230
  %v1247 = vadd.f32 %v1227, %v1230
  %vm1248 = vcmp.gt.f32.partialorder %v1232, 0.0
  %vm1249 = vcmp.gt.f32.partialorder %v1233, 0.0
  %vm1250 = vcmp.gt.f32.partialorder %v1234, 0.0
  %vm1251 = vcmp.gt.f32.partialorder %v1235, 0.0
  %vm1252 = vcmp.gt.f32.partialorder %v1236, 0.0
  %vm1253 = vcmp.gt.f32.partialorder %v1237, 0.0
  %vm1254 = vcmp.gt.f32.partialorder %v1238, 0.0
  %vm1255 = vcmp.gt.f32.partialorder %v1239, 0.0
  %vm1256 = vcmp.gt.f32.partialorder %v1240, 0.0
  %vm1257 = vcmp.gt.f32.partialorder %v1241, 0.0
  %vm1258 = vcmp.gt.f32.partialorder %v1242, 0.0
  %vm1259 = vcmp.gt.f32.partialorder %v1243, 0.0
  %vm1260 = vcmp.gt.f32.partialorder %v1244, 0.0
  %vm1261 = vcmp.gt.f32.partialorder %v1245, 0.0
  %vm1262 = vcmp.gt.f32.partialorder %v1246, 0.0
  %vm1263 = vcmp.gt.f32.partialorder %v1247, 0.0
  %v1264 = vmul.f32 %v1232, 0.01
  %v1265 = vmul.f32 %v1233, 0.01
  %v1266 = vmul.f32 %v1234, 0.01
  %v1267 = vmul.f32 %v1235, 0.01
  %v1268 = vmul.f32 %v1236, 0.01
  %v1269 = vmul.f32 %v1237, 0.01
  %v1270 = vmul.f32 %v1238, 0.01
  %v1271 = vmul.f32 %v1239, 0.01
  %v1272 = vmul.f32 %v1240, 0.01
  %v1273 = vmul.f32 %v1241, 0.01
  %v1274 = vmul.f32 %v1242, 0.01
  %v1275 = vmul.f32 %v1243, 0.01
  %v1276 = vmul.f32 %v1244, 0.01
  %v1277 = vmul.f32 %v1245, 0.01
  %v1278 = vmul.f32 %v1246, 0.01
  %v1279 = vmul.f32 %v1247, 0.01
  %v1280 = vsel %vm1248, %v1232, %v1264
  %v1281 = vsel %vm1249, %v1233, %v1265
  %v1282 = vsel %vm1250, %v1234, %v1266
  %v1283 = vsel %vm1251, %v1235, %v1267
  %v1284 = vsel %vm1252, %v1236, %v1268
  %v1285 = vsel %vm1253, %v1237, %v1269
  %v1286 = vsel %vm1254, %v1238, %v1270
  %v1287 = vsel %vm1255, %v1239, %v1271
  %v1288 = vsel %vm1256, %v1240, %v1272
  %v1289 = vsel %vm1257, %v1241, %v1273
  %v1290 = vsel %vm1258, %v1242, %v1274
  %v1291 = vsel %vm1259, %v1243, %v1275
  %v1292 = vsel %vm1260, %v1244, %v1276
  %v1293 = vsel %vm1261, %v1245, %v1277
  %v1294 = vsel %vm1262, %v1246, %v1278
  %v1295 = vsel %vm1263, %v1247, %v1279
  %s1296 = scalar_lea.vmem [#allocation3], 8
  %vm1297 = vcmask 261120
  %1298 = vst.msk [vmem:[%s1296] sm:$0xff] %vm1297, %v1280
  %1299 = vst.msk [vmem:[%s1296 + $0x8] sm:$0xff] %vm1297, %v1281
  %1300 = vst.msk [vmem:[%s1296 + $0x10] sm:$0xff] %vm1297, %v1282
  %1301 = vst.msk [vmem:[%s1296 + $0x18] sm:$0xff] %vm1297, %v1283
  %1302 = vst.msk [vmem:[%s1296 + $0x20] sm:$0xff] %vm1297, %v1284
  %1303 = vst.msk [vmem:[%s1296 + $0x28] sm:$0xff] %vm1297, %v1285
  %1304 = vst.msk [vmem:[%s1296 + $0x30] sm:$0xff] %vm1297, %v1286
  %1305 = vst.msk [vmem:[%s1296 + $0x38] sm:$0xff] %vm1297, %v1287
  %1306 = vst.msk [vmem:[%s1296 + $0x40] sm:$0xff] %vm1297, %v1288
  %1307 = vst.msk [vmem:[%s1296 + $0x48] sm:$0xff] %vm1297, %v1289
  %1308 = vst.msk [vmem:[%s1296 + $0x50] sm:$0xff] %vm1297, %v1290
  %1309 = vst.msk [vmem:[%s1296 + $0x58] sm:$0xff] %vm1297, %v1291
  %1310 = vst.msk [vmem:[%s1296 + $0x60] sm:$0xff] %vm1297, %v1292
  %1311 = vst.msk [vmem:[%s1296 + $0x68] sm:$0xff] %vm1297, %v1293
  %1312 = vst.msk [vmem:[%s1296 + $0x70] sm:$0xff] %vm1297, %v1294
  %1313 = vst.msk [vmem:[%s1296 + $0x78] sm:$0xff] %vm1297, %v1295
  %v1314 = vld [vmem:[#allocation3] sm:$0xff]
  %v1315 = vld [vmem:[#allocation3 + $0x8] sm:$0xff]
  %v1316 = vld [vmem:[#allocation3 + $0x10] sm:$0xff]
  %v1317 = vld [vmem:[#allocation3 + $0x18] sm:$0xff]
  %v1318 = vld [vmem:[#allocation3 + $0x20] sm:$0xff]
  %v1319 = vld [vmem:[#allocation3 + $0x28] sm:$0xff]
  %v1320 = vld [vmem:[#allocation3 + $0x30] sm:$0xff]
  %v1321 = vld [vmem:[#allocation3 + $0x38] sm:$0xff]
  %v1322 = vld [vmem:[#allocation3 + $0x40] sm:$0xff]
  %v1323 = vld [vmem:[#allocation3 + $0x48] sm:$0xff]
  %v1324 = vld [vmem:[#allocation3 + $0x50] sm:$0xff]
  %v1325 = vld [vmem:[#allocation3 + $0x58] sm:$0xff]
  %v1326 = vld [vmem:[#allocation3 + $0x60] sm:$0xff]
  %v1327 = vld [vmem:[#allocation3 + $0x68] sm:$0xff]
  %v1328 = vld [vmem:[#allocation3 + $0x70] sm:$0xff]
  %v1329 = vld [vmem:[#allocation3 + $0x78] sm:$0xff]
  %v1330 = vld [vmem:[#allocation3 + $0x80] sm:$0xff]
  %v1331 = vld [vmem:[%s5] sm:$0xff]
  %v1332 = vld [vmem:[%s5 + $0x8] sm:$0xff]
  %v1333 = vld [vmem:[%s5 + $0x10] sm:$0xff]
  %v1334 = vld [vmem:[%s5 + $0x18] sm:$0xff]
  %s1335 = scalar_lea.vmem %s5, 32
  %v1336 = vld [vmem:[%s1335] sm:$0xff]
  %v1337 = vld [vmem:[%s1335 + $0x8] sm:$0xff]
  %v1338 = vld [vmem:[%s1335 + $0x10] sm:$0xff]
  %v1339 = vld [vmem:[%s1335 + $0x18] sm:$0xff]
  %v1341 = vsel %vm1297, %v1315, 0
  %v1344 = vsel %vm1297, %v1317, 0
  %v1347 = vsel %vm1297, %v1319, 0
  %v1350 = vsel %vm1297, %v1321, 0
  %v1353 = vsel %vm1297, %v1323, 0
  %v1356 = vsel %vm1297, %v1325, 0
  %v1359 = vsel %vm1297, %v1327, 0
  %v1362 = vsel %vm1297, %v1329, 0
  %1364 = vmatpush.msra.mxu0 0.0
  %1365 = vmatpush.msra.mxu0 0.0
  %1366 = vmatpush.msra.mxu0 0.0
  %1367 = vmatpush.msra.mxu0 0.0
  %1368 = vmatpush.msra.mxu0 0.0
  %1369 = vmatpush.msra.mxu0 0.0
  %1370 = vmatpush.msra.mxu0 0.0
  %1371 = vmatpush.msra.mxu0 0.0
  %1372 = vmatpush.msra.mxu0 0.0
  %1373 = vmatpush.msra.mxu0 0.0
  %1374 = vmatpush.msra.mxu0 0.0
  %1375 = vmatpush.msra.mxu0 0.0
  %1376 = vmatpush.msra.mxu0 %v1339
  %1377 = vmatpush.msra.mxu0 %v1338
  %1378 = vmatpush.msra.mxu0 %v1337
  %1379 = vmatpush.msra.mxu0 %v1336
  %1380 = vmatmul.f32.gmra.mxu0 %v1341
  %v1381 = vpop.f32.mrf.mxu0
  %v1382 = vadd.f32 0.0, %v1381
  %1383 = vmatmul.f32.gmra.mxu0 %v1344
  %v1384 = vpop.f32.mrf.mxu0
  %v1385 = vadd.f32 0.0, %v1384
  %1386 = vmatmul.f32.gmra.mxu0 %v1347
  %v1387 = vpop.f32.mrf.mxu0
  %v1388 = vadd.f32 0.0, %v1387
  %1389 = vmatmul.f32.gmra.mxu0 %v1350
  %v1390 = vpop.f32.mrf.mxu0
  %v1391 = vadd.f32 0.0, %v1390
  %1392 = vmatmul.f32.gmra.mxu0 %v1353
  %v1393 = vpop.f32.mrf.mxu0
  %v1394 = vadd.f32 0.0, %v1393
  %1395 = vmatmul.f32.gmra.mxu0 %v1356
  %v1396 = vpop.f32.mrf.mxu0
  %v1397 = vadd.f32 0.0, %v1396
  %1398 = vmatmul.f32.gmra.mxu0 %v1359
  %v1399 = vpop.f32.mrf.mxu0
  %v1400 = vadd.f32 0.0, %v1399
  %1401 = vmatmul.f32.gmra.mxu0 %v1362
  %v1402 = vpop.f32.mrf.mxu0
  %v1403 = vadd.f32 0.0, %v1402
  %1404 = vdwg.mxu0
  %v1406 = vsel %vm1297, %v1314, 0
  %v1409 = vsel %vm1297, %v1316, 0
  %v1412 = vsel %vm1297, %v1318, 0
  %v1415 = vsel %vm1297, %v1320, 0
  %v1418 = vsel %vm1297, %v1322, 0
  %v1421 = vsel %vm1297, %v1324, 0
  %v1424 = vsel %vm1297, %v1326, 0
  %v1427 = vsel %vm1297, %v1328, 0
  %1429 = vmatpush.msra.mxu0 0.0
  %1430 = vmatpush.msra.mxu0 0.0
  %1431 = vmatpush.msra.mxu0 0.0
  %1432 = vmatpush.msra.mxu0 0.0
  %1433 = vmatpush.msra.mxu0 0.0
  %1434 = vmatpush.msra.mxu0 0.0
  %1435 = vmatpush.msra.mxu0 0.0
  %1436 = vmatpush.msra.mxu0 0.0
  %1437 = vmatpush.msra.mxu0 0.0
  %1438 = vmatpush.msra.mxu0 0.0
  %1439 = vmatpush.msra.mxu0 0.0
  %1440 = vmatpush.msra.mxu0 0.0
  %1441 = vmatpush.msra.mxu0 %v1334
  %1442 = vmatpush.msra.mxu0 %v1333
  %1443 = vmatpush.msra.mxu0 %v1332
  %1444 = vmatpush.msra.mxu0 %v1331
  %1445 = vmatmul.f32.gmra.mxu0 %v1406
  %v1446 = vpop.f32.mrf.mxu0
  %v1447 = vadd.f32 %v1382, %v1446
  %1448 = vmatmul.f32.gmra.mxu0 %v1409
  %v1449 = vpop.f32.mrf.mxu0
  %v1450 = vadd.f32 %v1385, %v1449
  %1451 = vmatmul.f32.gmra.mxu0 %v1412
  %v1452 = vpop.f32.mrf.mxu0
  %v1453 = vadd.f32 %v1388, %v1452
  %1454 = vmatmul.f32.gmra.mxu0 %v1415
  %v1455 = vpop.f32.mrf.mxu0
  %v1456 = vadd.f32 %v1391, %v1455
  %1457 = vmatmul.f32.gmra.mxu0 %v1418
  %v1458 = vpop.f32.mrf.mxu0
  %v1459 = vadd.f32 %v1394, %v1458
  %1460 = vmatmul.f32.gmra.mxu0 %v1421
  %v1461 = vpop.f32.mrf.mxu0
  %v1462 = vadd.f32 %v1397, %v1461
  %1463 = vmatmul.f32.gmra.mxu0 %v1424
  %v1464 = vpop.f32.mrf.mxu0
  %v1465 = vadd.f32 %v1400, %v1464
  %1466 = vmatmul.f32.gmra.mxu0 %v1427
  %v1467 = vpop.f32.mrf.mxu0
  %v1468 = vadd.f32 %v1403, %v1467
  %1469 = vdwg.mxu0
  %s1470 = scalar_lea.vmem %s5, 64
  %v1471 = vld [vmem:[%s1470] sm:$0xff]
  %v1472 = vld [vmem:[%s1470 + $0x8] sm:$0xff]
  %v1473 = vld [vmem:[%s1470 + $0x10] sm:$0xff]
  %v1474 = vld [vmem:[%s1470 + $0x18] sm:$0xff]
  %v1476 = vsel %vm1297, %v1330, 0
  %1478 = vmatpush.msra.mxu0 0.0
  %1479 = vmatpush.msra.mxu0 0.0
  %1480 = vmatpush.msra.mxu0 0.0
  %1481 = vmatpush.msra.mxu0 0.0
  %1482 = vmatpush.msra.mxu0 0.0
  %1483 = vmatpush.msra.mxu0 0.0
  %1484 = vmatpush.msra.mxu0 0.0
  %1485 = vmatpush.msra.mxu0 0.0
  %1486 = vmatpush.msra.mxu0 0.0
  %1487 = vmatpush.msra.mxu0 0.0
  %1488 = vmatpush.msra.mxu0 0.0
  %1489 = vmatpush.msra.mxu0 0.0
  %1490 = vmatpush.msra.mxu0 %v1474
  %1491 = vmatpush.msra.mxu0 %v1473
  %1492 = vmatpush.msra.mxu0 %v1472
  %1493 = vmatpush.msra.mxu0 %v1471
  %1494 = vmatmul.f32.gmra.mxu0 %v1409
  %v1495 = vpop.f32.mrf.mxu0
  %v1496 = vadd.f32 0.0, %v1495
  %1497 = vmatmul.f32.gmra.mxu0 %v1412
  %v1498 = vpop.f32.mrf.mxu0
  %v1499 = vadd.f32 0.0, %v1498
  %1500 = vmatmul.f32.gmra.mxu0 %v1415
  %v1501 = vpop.f32.mrf.mxu0
  %v1502 = vadd.f32 0.0, %v1501
  %1503 = vmatmul.f32.gmra.mxu0 %v1418
  %v1504 = vpop.f32.mrf.mxu0
  %v1505 = vadd.f32 0.0, %v1504
  %1506 = vmatmul.f32.gmra.mxu0 %v1421
  %v1507 = vpop.f32.mrf.mxu0
  %v1508 = vadd.f32 0.0, %v1507
  %1509 = vmatmul.f32.gmra.mxu0 %v1424
  %v1510 = vpop.f32.mrf.mxu0
  %v1511 = vadd.f32 0.0, %v1510
  %1512 = vmatmul.f32.gmra.mxu0 %v1427
  %v1513 = vpop.f32.mrf.mxu0
  %v1514 = vadd.f32 0.0, %v1513
  %1515 = vmatmul.f32.gmra.mxu0 %v1476
  %v1516 = vpop.f32.mrf.mxu0
  %v1517 = vadd.f32 0.0, %v1516
  %1518 = vdwg.mxu0
  %v1519 = vadd.f32 %v1447, %v1496
  %v1520 = vadd.f32 %v1450, %v1499
  %v1521 = vadd.f32 %v1453, %v1502
  %v1522 = vadd.f32 %v1456, %v1505
  %v1523 = vadd.f32 %v1459, %v1508
  %v1524 = vadd.f32 %v1462, %v1511
  %v1525 = vadd.f32 %v1465, %v1514
  %v1526 = vadd.f32 %v1468, %v1517
  %v1527 = vld [vmem:[%s6] sm:$0x1]
  %v1529 = vperm.slane %v1527, 0
  %v1531 = vadd.f32 %v1519, %v1529
  %v1532 = vadd.f32 %v1520, %v1529
  %v1533 = vadd.f32 %v1521, %v1529
  %v1534 = vadd.f32 %v1522, %v1529
  %v1535 = vadd.f32 %v1523, %v1529
  %v1536 = vadd.f32 %v1524, %v1529
  %v1537 = vadd.f32 %v1525, %v1529
  %v1538 = vadd.f32 %v1526, %v1529
  %vm1539 = vcmp.gt.f32.partialorder %v1531, 0.0
  %vm1540 = vcmp.gt.f32.partialorder %v1532, 0.0
  %vm1541 = vcmp.gt.f32.partialorder %v1533, 0.0
  %vm1542 = vcmp.gt.f32.partialorder %v1534, 0.0
  %vm1543 = vcmp.gt.f32.partialorder %v1535, 0.0
  %vm1544 = vcmp.gt.f32.partialorder %v1536, 0.0
  %vm1545 = vcmp.gt.f32.partialorder %v1537, 0.0
  %vm1546 = vcmp.gt.f32.partialorder %v1538, 0.0
  %v1547 = vmul.f32 %v1531, 0.01
  %v1548 = vmul.f32 %v1532, 0.01
  %v1549 = vmul.f32 %v1533, 0.01
  %v1550 = vmul.f32 %v1534, 0.01
  %v1551 = vmul.f32 %v1535, 0.01
  %v1552 = vmul.f32 %v1536, 0.01
  %v1553 = vmul.f32 %v1537, 0.01
  %v1554 = vmul.f32 %v1538, 0.01
  %v1555 = vsel %vm1539, %v1531, %v1547
  %v1556 = vsel %vm1540, %v1532, %v1548
  %v1557 = vsel %vm1541, %v1533, %v1549
  %v1558 = vsel %vm1542, %v1534, %v1550
  %v1559 = vsel %vm1543, %v1535, %v1551
  %v1560 = vsel %vm1544, %v1536, %v1552
  %v1561 = vsel %vm1545, %v1537, %v1553
  %v1562 = vsel %vm1546, %v1538, %v1554
  %s1563 = scalar_lea.vmem [#allocation4], 8
  %vm1564 = vcmask 523264
  %1565 = vst.msk [vmem:[%s1563] sm:$0xff] %vm1564, %v1555
  %1566 = vst.msk [vmem:[%s1563 + $0x8] sm:$0xff] %vm1564, %v1556
  %1567 = vst.msk [vmem:[%s1563 + $0x10] sm:$0xff] %vm1564, %v1557
  %1568 = vst.msk [vmem:[%s1563 + $0x18] sm:$0xff] %vm1564, %v1558
  %1569 = vst.msk [vmem:[%s1563 + $0x20] sm:$0xff] %vm1564, %v1559
  %1570 = vst.msk [vmem:[%s1563 + $0x28] sm:$0xff] %vm1564, %v1560
  %1571 = vst.msk [vmem:[%s1563 + $0x30] sm:$0xff] %vm1564, %v1561
  %1572 = vst.msk [vmem:[%s1563 + $0x38] sm:$0xff] %vm1564, %v1562
  %v1573 = vld [vmem:[#allocation4] sm:$0xff]
  %v1574 = vld [vmem:[#allocation4 + $0x8] sm:$0xff]
  %v1575 = vld [vmem:[#allocation4 + $0x10] sm:$0xff]
  %v1576 = vld [vmem:[#allocation4 + $0x18] sm:$0xff]
  %v1577 = vld [vmem:[#allocation4 + $0x20] sm:$0xff]
  %v1578 = vld [vmem:[#allocation4 + $0x28] sm:$0xff]
  %v1579 = vld [vmem:[#allocation4 + $0x30] sm:$0xff]
  %v1580 = vld [vmem:[#allocation4 + $0x38] sm:$0xff]
  %v1581 = vld [vmem:[#allocation4 + $0x40] sm:$0xff]
  %v1582 = vld [vmem:[%s7] sm:$0xff]
  %v1583 = vld [vmem:[%s7 + $0x8] sm:$0xff]
  %v1584 = vld [vmem:[%s7 + $0x10] sm:$0xff]
  %v1585 = vld [vmem:[%s7 + $0x18] sm:$0xff]
  %v1586 = vld [vmem:[%s7 + $0x20] sm:$0xff]
  %v1587 = vld [vmem:[%s7 + $0x28] sm:$0xff]
  %v1588 = vld [vmem:[%s7 + $0x30] sm:$0xff]
  %v1589 = vld [vmem:[%s7 + $0x38] sm:$0xff]
  %s1590 = scalar_lea.vmem %s7, 64
  %v1591 = vld [vmem:[%s1590] sm:$0xff]
  %v1592 = vld [vmem:[%s1590 + $0x8] sm:$0xff]
  %v1593 = vld [vmem:[%s1590 + $0x10] sm:$0xff]
  %v1594 = vld [vmem:[%s1590 + $0x18] sm:$0xff]
  %v1595 = vld [vmem:[%s1590 + $0x20] sm:$0xff]
  %v1596 = vld [vmem:[%s1590 + $0x28] sm:$0xff]
  %v1597 = vld [vmem:[%s1590 + $0x30] sm:$0xff]
  %v1598 = vld [vmem:[%s1590 + $0x38] sm:$0xff]
  %v1600 = vsel %vm1564, %v1574, 0
  %v1603 = vsel %vm1564, %v1576, 0
  %v1606 = vsel %vm1564, %v1578, 0
  %v1609 = vsel %vm1564, %v1580, 0
  %1611 = vmatpush.msra.mxu0 0.0
  %1612 = vmatpush.msra.mxu0 0.0
  %1613 = vmatpush.msra.mxu0 0.0
  %1614 = vmatpush.msra.mxu0 0.0
  %1615 = vmatpush.msra.mxu0 0.0
  %1616 = vmatpush.msra.mxu0 0.0
  %1617 = vmatpush.msra.mxu0 0.0
  %1618 = vmatpush.msra.mxu0 0.0
  %1619 = vmatpush.msra.mxu0 %v1598
  %1620 = vmatpush.msra.mxu0 %v1597
  %1621 = vmatpush.msra.mxu0 %v1596
  %1622 = vmatpush.msra.mxu0 %v1595
  %1623 = vmatpush.msra.mxu0 %v1594
  %1624 = vmatpush.msra.mxu0 %v1593
  %1625 = vmatpush.msra.mxu0 %v1592
  %1626 = vmatpush.msra.mxu0 %v1591
  %1627 = vmatmul.f32.gmra.mxu0 %v1600
  %v1628 = vpop.f32.mrf.mxu0
  %v1629 = vadd.f32 0.0, %v1628
  %1630 = vmatmul.f32.gmra.mxu0 %v1603
  %v1631 = vpop.f32.mrf.mxu0
  %v1632 = vadd.f32 0.0, %v1631
  %1633 = vmatmul.f32.gmra.mxu0 %v1606
  %v1634 = vpop.f32.mrf.mxu0
  %v1635 = vadd.f32 0.0, %v1634
  %1636 = vmatmul.f32.gmra.mxu0 %v1609
  %v1637 = vpop.f32.mrf.mxu0
  %v1638 = vadd.f32 0.0, %v1637
  %1639 = vdwg.mxu0
  %v1641 = vsel %vm1564, %v1573, 0
  %v1644 = vsel %vm1564, %v1575, 0
  %v1647 = vsel %vm1564, %v1577, 0
  %v1650 = vsel %vm1564, %v1579, 0
  %1652 = vmatpush.msra.mxu0 0.0
  %1653 = vmatpush.msra.mxu0 0.0
  %1654 = vmatpush.msra.mxu0 0.0
  %1655 = vmatpush.msra.mxu0 0.0
  %1656 = vmatpush.msra.mxu0 0.0
  %1657 = vmatpush.msra.mxu0 0.0
  %1658 = vmatpush.msra.mxu0 0.0
  %1659 = vmatpush.msra.mxu0 0.0
  %1660 = vmatpush.msra.mxu0 %v1589
  %1661 = vmatpush.msra.mxu0 %v1588
  %1662 = vmatpush.msra.mxu0 %v1587
  %1663 = vmatpush.msra.mxu0 %v1586
  %1664 = vmatpush.msra.mxu0 %v1585
  %1665 = vmatpush.msra.mxu0 %v1584
  %1666 = vmatpush.msra.mxu0 %v1583
  %1667 = vmatpush.msra.mxu0 %v1582
  %1668 = vmatmul.f32.gmra.mxu0 %v1641
  %v1669 = vpop.f32.mrf.mxu0
  %v1670 = vadd.f32 %v1629, %v1669
  %1671 = vmatmul.f32.gmra.mxu0 %v1644
  %v1672 = vpop.f32.mrf.mxu0
  %v1673 = vadd.f32 %v1632, %v1672
  %1674 = vmatmul.f32.gmra.mxu0 %v1647
  %v1675 = vpop.f32.mrf.mxu0
  %v1676 = vadd.f32 %v1635, %v1675
  %1677 = vmatmul.f32.gmra.mxu0 %v1650
  %v1678 = vpop.f32.mrf.mxu0
  %v1679 = vadd.f32 %v1638, %v1678
  %1680 = vdwg.mxu0
  %s1681 = scalar_lea.vmem %s7, 128
  %v1682 = vld [vmem:[%s1681] sm:$0xff]
  %v1683 = vld [vmem:[%s1681 + $0x8] sm:$0xff]
  %v1684 = vld [vmem:[%s1681 + $0x10] sm:$0xff]
  %v1685 = vld [vmem:[%s1681 + $0x18] sm:$0xff]
  %v1686 = vld [vmem:[%s1681 + $0x20] sm:$0xff]
  %v1687 = vld [vmem:[%s1681 + $0x28] sm:$0xff]
  %v1688 = vld [vmem:[%s1681 + $0x30] sm:$0xff]
  %v1689 = vld [vmem:[%s1681 + $0x38] sm:$0xff]
  %v1691 = vsel %vm1564, %v1581, 0
  %1693 = vmatpush.msra.mxu0 0.0
  %1694 = vmatpush.msra.mxu0 0.0
  %1695 = vmatpush.msra.mxu0 0.0
  %1696 = vmatpush.msra.mxu0 0.0
  %1697 = vmatpush.msra.mxu0 0.0
  %1698 = vmatpush.msra.mxu0 0.0
  %1699 = vmatpush.msra.mxu0 0.0
  %1700 = vmatpush.msra.mxu0 0.0
  %1701 = vmatpush.msra.mxu0 %v1689
  %1702 = vmatpush.msra.mxu0 %v1688
  %1703 = vmatpush.msra.mxu0 %v1687
  %1704 = vmatpush.msra.mxu0 %v1686
  %1705 = vmatpush.msra.mxu0 %v1685
  %1706 = vmatpush.msra.mxu0 %v1684
  %1707 = vmatpush.msra.mxu0 %v1683
  %1708 = vmatpush.msra.mxu0 %v1682
  %1709 = vmatmul.f32.gmra.mxu0 %v1644
  %v1710 = vpop.f32.mrf.mxu0
  %v1711 = vadd.f32 0.0, %v1710
  %1712 = vmatmul.f32.gmra.mxu0 %v1647
  %v1713 = vpop.f32.mrf.mxu0
  %v1714 = vadd.f32 0.0, %v1713
  %1715 = vmatmul.f32.gmra.mxu0 %v1650
  %v1716 = vpop.f32.mrf.mxu0
  %v1717 = vadd.f32 0.0, %v1716
  %1718 = vmatmul.f32.gmra.mxu0 %v1691
  %v1719 = vpop.f32.mrf.mxu0
  %v1720 = vadd.f32 0.0, %v1719
  %1721 = vdwg.mxu0
  %v1722 = vadd.f32 %v1670, %v1711
  %v1723 = vadd.f32 %v1673, %v1714
  %v1724 = vadd.f32 %v1676, %v1717
  %v1725 = vadd.f32 %v1679, %v1720
  %v1726 = vld [vmem:[%s8] sm:$0x1]
  %v1728 = vperm.slane %v1726, 0
  %v1730 = vadd.f32 %v1722, %v1728
  %v1731 = vadd.f32 %v1723, %v1728
  %v1732 = vadd.f32 %v1724, %v1728
  %v1733 = vadd.f32 %v1725, %v1728
  %vm1734 = vcmp.gt.f32.partialorder %v1730, 0.0
  %vm1735 = vcmp.gt.f32.partialorder %v1731, 0.0
  %vm1736 = vcmp.gt.f32.partialorder %v1732, 0.0
  %vm1737 = vcmp.gt.f32.partialorder %v1733, 0.0
  %v1738 = vmul.f32 %v1730, 0.01
  %v1739 = vmul.f32 %v1731, 0.01
  %v1740 = vmul.f32 %v1732, 0.01
  %v1741 = vmul.f32 %v1733, 0.01
  %v1742 = vsel %vm1734, %v1730, %v1738
  %v1743 = vsel %vm1735, %v1731, %v1739
  %v1744 = vsel %vm1736, %v1732, %v1740
  %v1745 = vsel %vm1737, %v1733, %v1741
  %s1746 = scalar_lea.vmem [#allocation5], 8
  %1747 = vst [vmem:[%s1746] sm:$0xff] %v1742
  %1748 = vst [vmem:[%s1746 + $0x8] sm:$0xff] %v1743
  %1749 = vst [vmem:[%s1746 + $0x10] sm:$0xff] %v1744
  %1750 = vst [vmem:[%s1746 + $0x18] sm:$0xff] %v1745
  %v1751 = vld [vmem:[#allocation5] sm:$0xff]
  %v1752 = vld [vmem:[#allocation5 + $0x8] sm:$0xff]
  %v1753 = vld [vmem:[#allocation5 + $0x10] sm:$0xff]
  %v1754 = vld [vmem:[#allocation5 + $0x18] sm:$0xff]
  %v1755 = vld [vmem:[#allocation5 + $0x20] sm:$0xff]
  %v1756 = vld [vmem:[%s9] sm:$0xff]
  %v1757 = vld [vmem:[%s9 + $0x8] sm:$0xff]
  %v1758 = vld [vmem:[%s9 + $0x10] sm:$0xff]
  %v1759 = vld [vmem:[%s9 + $0x18] sm:$0xff]
  %v1760 = vld [vmem:[%s9 + $0x20] sm:$0xff]
  %v1761 = vld [vmem:[%s9 + $0x28] sm:$0xff]
  %v1762 = vld [vmem:[%s9 + $0x30] sm:$0xff]
  %v1763 = vld [vmem:[%s9 + $0x38] sm:$0xff]
  %v1764 = vld [vmem:[%s9 + $0x40] sm:$0xff]
  %v1765 = vld [vmem:[%s9 + $0x48] sm:$0xff]
  %v1766 = vld [vmem:[%s9 + $0x50] sm:$0xff]
  %v1767 = vld [vmem:[%s9 + $0x58] sm:$0xff]
  %v1768 = vld [vmem:[%s9 + $0x60] sm:$0xff]
  %v1769 = vld [vmem:[%s9 + $0x68] sm:$0xff]
  %v1770 = vld [vmem:[%s9 + $0x70] sm:$0xff]
  %v1771 = vld [vmem:[%s9 + $0x78] sm:$0xff]
  %v1772 = vld [vmem:[%s9 + $0x80] sm:$0xff]
  %v1773 = vld [vmem:[%s9 + $0x88] sm:$0xff]
  %v1774 = vld [vmem:[%s9 + $0x90] sm:$0xff]
  %v1775 = vld [vmem:[%s9 + $0x98] sm:$0xff]
  %v1776 = vld [vmem:[%s9 + $0xa0] sm:$0xff]
  %v1777 = vld [vmem:[%s9 + $0xa8] sm:$0xff]
  %v1778 = vld [vmem:[%s9 + $0xb0] sm:$0xff]
  %v1779 = vld [vmem:[%s9 + $0xb8] sm:$0xff]
  %v1780 = vld [vmem:[%s9 + $0xc0] sm:$0xff]
  %v1781 = vld [vmem:[%s9 + $0xc8] sm:$0xff]
  %v1782 = vld [vmem:[%s9 + $0xd0] sm:$0xff]
  %v1783 = vld [vmem:[%s9 + $0xd8] sm:$0xff]
  %v1784 = vld [vmem:[%s9 + $0xe0] sm:$0xff]
  %v1785 = vld [vmem:[%s9 + $0xe8] sm:$0xff]
  %v1786 = vld [vmem:[%s9 + $0xf0] sm:$0xff]
  %v1787 = vld [vmem:[%s9 + $0xf8] sm:$0xff]
  %s1788 = scalar_lea.vmem %s9, 256
  %v1789 = vld [vmem:[%s1788] sm:$0xff]
  %v1790 = vld [vmem:[%s1788 + $0x8] sm:$0xff]
  %v1791 = vld [vmem:[%s1788 + $0x10] sm:$0xff]
  %v1792 = vld [vmem:[%s1788 + $0x18] sm:$0xff]
  %v1793 = vld [vmem:[%s1788 + $0x20] sm:$0xff]
  %v1794 = vld [vmem:[%s1788 + $0x28] sm:$0xff]
  %v1795 = vld [vmem:[%s1788 + $0x30] sm:$0xff]
  %v1796 = vld [vmem:[%s1788 + $0x38] sm:$0xff]
  %v1797 = vld [vmem:[%s1788 + $0x40] sm:$0xff]
  %v1798 = vld [vmem:[%s1788 + $0x48] sm:$0xff]
  %v1799 = vld [vmem:[%s1788 + $0x50] sm:$0xff]
  %v1800 = vld [vmem:[%s1788 + $0x58] sm:$0xff]
  %v1801 = vld [vmem:[%s1788 + $0x60] sm:$0xff]
  %v1802 = vld [vmem:[%s1788 + $0x68] sm:$0xff]
  %v1803 = vld [vmem:[%s1788 + $0x70] sm:$0xff]
  %v1804 = vld [vmem:[%s1788 + $0x78] sm:$0xff]
  %v1805 = vld [vmem:[%s1788 + $0x80] sm:$0xff]
  %v1806 = vld [vmem:[%s1788 + $0x88] sm:$0xff]
  %v1807 = vld [vmem:[%s1788 + $0x90] sm:$0xff]
  %v1808 = vld [vmem:[%s1788 + $0x98] sm:$0xff]
  %v1809 = vld [vmem:[%s1788 + $0xa0] sm:$0xff]
  %v1810 = vld [vmem:[%s1788 + $0xa8] sm:$0xff]
  %v1811 = vld [vmem:[%s1788 + $0xb0] sm:$0xff]
  %v1812 = vld [vmem:[%s1788 + $0xb8] sm:$0xff]
  %v1813 = vld [vmem:[%s1788 + $0xc0] sm:$0xff]
  %v1814 = vld [vmem:[%s1788 + $0xc8] sm:$0xff]
  %v1815 = vld [vmem:[%s1788 + $0xd0] sm:$0xff]
  %v1816 = vld [vmem:[%s1788 + $0xd8] sm:$0xff]
  %v1817 = vld [vmem:[%s1788 + $0xe0] sm:$0xff]
  %v1818 = vld [vmem:[%s1788 + $0xe8] sm:$0xff]
  %v1819 = vld [vmem:[%s1788 + $0xf0] sm:$0xff]
  %v1820 = vld [vmem:[%s1788 + $0xf8] sm:$0xff]
  %1821 = vmatpush.msra.mxu0 %v1819
  %1822 = vmatpush.msra.mxu0 %v1817
  %1823 = vmatpush.msra.mxu0 %v1815
  %1824 = vmatpush.msra.mxu0 %v1813
  %1825 = vmatpush.msra.mxu0 %v1811
  %1826 = vmatpush.msra.mxu0 %v1809
  %1827 = vmatpush.msra.mxu0 %v1807
  %1828 = vmatpush.msra.mxu0 %v1805
  %1829 = vmatpush.msra.mxu0 %v1803
  %1830 = vmatpush.msra.mxu0 %v1801
  %1831 = vmatpush.msra.mxu0 %v1799
  %1832 = vmatpush.msra.mxu0 %v1797
  %1833 = vmatpush.msra.mxu0 %v1795
  %1834 = vmatpush.msra.mxu0 %v1793
  %1835 = vmatpush.msra.mxu0 %v1791
  %1836 = vmatpush.msra.mxu0 %v1789
  %1837 = vmatmul.f32.gmra.mxu0 %v1752
  %v1838 = vpop.f32.mrf.mxu0
  %v1839 = vadd.f32 0.0, %v1838
  %1840 = vmatmul.f32.gmra.mxu0 %v1754
  %v1841 = vpop.f32.mrf.mxu0
  %v1842 = vadd.f32 0.0, %v1841
  %1843 = vdwg.mxu0
  %1844 = vmatpush.msra.mxu0 %v1820
  %1845 = vmatpush.msra.mxu0 %v1818
  %1846 = vmatpush.msra.mxu0 %v1816
  %1847 = vmatpush.msra.mxu0 %v1814
  %1848 = vmatpush.msra.mxu0 %v1812
  %1849 = vmatpush.msra.mxu0 %v1810
  %1850 = vmatpush.msra.mxu0 %v1808
  %1851 = vmatpush.msra.mxu0 %v1806
  %1852 = vmatpush.msra.mxu0 %v1804
  %1853 = vmatpush.msra.mxu0 %v1802
  %1854 = vmatpush.msra.mxu0 %v1800
  %1855 = vmatpush.msra.mxu0 %v1798
  %1856 = vmatpush.msra.mxu0 %v1796
  %1857 = vmatpush.msra.mxu0 %v1794
  %1858 = vmatpush.msra.mxu0 %v1792
  %1859 = vmatpush.msra.mxu0 %v1790
  %1860 = vmatmul.f32.gmra.mxu0 %v1752
  %v1861 = vpop.f32.mrf.mxu0
  %v1862 = vadd.f32 0.0, %v1861
  %1863 = vmatmul.f32.gmra.mxu0 %v1754
  %v1864 = vpop.f32.mrf.mxu0
  %v1865 = vadd.f32 0.0, %v1864
  %1866 = vdwg.mxu0
  %1867 = vmatpush.msra.mxu0 %v1786
  %1868 = vmatpush.msra.mxu0 %v1784
  %1869 = vmatpush.msra.mxu0 %v1782
  %1870 = vmatpush.msra.mxu0 %v1780
  %1871 = vmatpush.msra.mxu0 %v1778
  %1872 = vmatpush.msra.mxu0 %v1776
  %1873 = vmatpush.msra.mxu0 %v1774
  %1874 = vmatpush.msra.mxu0 %v1772
  %1875 = vmatpush.msra.mxu0 %v1770
  %1876 = vmatpush.msra.mxu0 %v1768
  %1877 = vmatpush.msra.mxu0 %v1766
  %1878 = vmatpush.msra.mxu0 %v1764
  %1879 = vmatpush.msra.mxu0 %v1762
  %1880 = vmatpush.msra.mxu0 %v1760
  %1881 = vmatpush.msra.mxu0 %v1758
  %1882 = vmatpush.msra.mxu0 %v1756
  %1883 = vmatmul.f32.gmra.mxu0 %v1751
  %v1884 = vpop.f32.mrf.mxu0
  %v1885 = vadd.f32 %v1839, %v1884
  %1886 = vmatmul.f32.gmra.mxu0 %v1753
  %v1887 = vpop.f32.mrf.mxu0
  %v1888 = vadd.f32 %v1842, %v1887
  %1889 = vdwg.mxu0
  %1890 = vmatpush.msra.mxu0 %v1787
  %1891 = vmatpush.msra.mxu0 %v1785
  %1892 = vmatpush.msra.mxu0 %v1783
  %1893 = vmatpush.msra.mxu0 %v1781
  %1894 = vmatpush.msra.mxu0 %v1779
  %1895 = vmatpush.msra.mxu0 %v1777
  %1896 = vmatpush.msra.mxu0 %v1775
  %1897 = vmatpush.msra.mxu0 %v1773
  %1898 = vmatpush.msra.mxu0 %v1771
  %1899 = vmatpush.msra.mxu0 %v1769
  %1900 = vmatpush.msra.mxu0 %v1767
  %1901 = vmatpush.msra.mxu0 %v1765
  %1902 = vmatpush.msra.mxu0 %v1763
  %1903 = vmatpush.msra.mxu0 %v1761
  %1904 = vmatpush.msra.mxu0 %v1759
  %1905 = vmatpush.msra.mxu0 %v1757
  %1906 = vmatmul.f32.gmra.mxu0 %v1751
  %v1907 = vpop.f32.mrf.mxu0
  %v1908 = vadd.f32 %v1862, %v1907
  %1909 = vmatmul.f32.gmra.mxu0 %v1753
  %v1910 = vpop.f32.mrf.mxu0
  %v1911 = vadd.f32 %v1865, %v1910
  %1912 = vdwg.mxu0
  %s1913 = scalar_lea.vmem %s9, 512
  %v1914 = vld [vmem:[%s1913] sm:$0xff]
  %v1915 = vld [vmem:[%s1913 + $0x8] sm:$0xff]
  %v1916 = vld [vmem:[%s1913 + $0x10] sm:$0xff]
  %v1917 = vld [vmem:[%s1913 + $0x18] sm:$0xff]
  %v1918 = vld [vmem:[%s1913 + $0x20] sm:$0xff]
  %v1919 = vld [vmem:[%s1913 + $0x28] sm:$0xff]
  %v1920 = vld [vmem:[%s1913 + $0x30] sm:$0xff]
  %v1921 = vld [vmem:[%s1913 + $0x38] sm:$0xff]
  %v1922 = vld [vmem:[%s1913 + $0x40] sm:$0xff]
  %v1923 = vld [vmem:[%s1913 + $0x48] sm:$0xff]
  %v1924 = vld [vmem:[%s1913 + $0x50] sm:$0xff]
  %v1925 = vld [vmem:[%s1913 + $0x58] sm:$0xff]
  %v1926 = vld [vmem:[%s1913 + $0x60] sm:$0xff]
  %v1927 = vld [vmem:[%s1913 + $0x68] sm:$0xff]
  %v1928 = vld [vmem:[%s1913 + $0x70] sm:$0xff]
  %v1929 = vld [vmem:[%s1913 + $0x78] sm:$0xff]
  %v1930 = vld [vmem:[%s1913 + $0x80] sm:$0xff]
  %v1931 = vld [vmem:[%s1913 + $0x88] sm:$0xff]
  %v1932 = vld [vmem:[%s1913 + $0x90] sm:$0xff]
  %v1933 = vld [vmem:[%s1913 + $0x98] sm:$0xff]
  %v1934 = vld [vmem:[%s1913 + $0xa0] sm:$0xff]
  %v1935 = vld [vmem:[%s1913 + $0xa8] sm:$0xff]
  %v1936 = vld [vmem:[%s1913 + $0xb0] sm:$0xff]
  %v1937 = vld [vmem:[%s1913 + $0xb8] sm:$0xff]
  %v1938 = vld [vmem:[%s1913 + $0xc0] sm:$0xff]
  %v1939 = vld [vmem:[%s1913 + $0xc8] sm:$0xff]
  %v1940 = vld [vmem:[%s1913 + $0xd0] sm:$0xff]
  %v1941 = vld [vmem:[%s1913 + $0xd8] sm:$0xff]
  %v1942 = vld [vmem:[%s1913 + $0xe0] sm:$0xff]
  %v1943 = vld [vmem:[%s1913 + $0xe8] sm:$0xff]
  %v1944 = vld [vmem:[%s1913 + $0xf0] sm:$0xff]
  %v1945 = vld [vmem:[%s1913 + $0xf8] sm:$0xff]
  %1946 = vmatpush.msra.mxu0 %v1944
  %1947 = vmatpush.msra.mxu0 %v1942
  %1948 = vmatpush.msra.mxu0 %v1940
  %1949 = vmatpush.msra.mxu0 %v1938
  %1950 = vmatpush.msra.mxu0 %v1936
  %1951 = vmatpush.msra.mxu0 %v1934
  %1952 = vmatpush.msra.mxu0 %v1932
  %1953 = vmatpush.msra.mxu0 %v1930
  %1954 = vmatpush.msra.mxu0 %v1928
  %1955 = vmatpush.msra.mxu0 %v1926
  %1956 = vmatpush.msra.mxu0 %v1924
  %1957 = vmatpush.msra.mxu0 %v1922
  %1958 = vmatpush.msra.mxu0 %v1920
  %1959 = vmatpush.msra.mxu0 %v1918
  %1960 = vmatpush.msra.mxu0 %v1916
  %1961 = vmatpush.msra.mxu0 %v1914
  %1962 = vmatmul.f32.gmra.mxu0 %v1753
  %v1963 = vpop.f32.mrf.mxu0
  %v1964 = vadd.f32 0.0, %v1963
  %1965 = vmatmul.f32.gmra.mxu0 %v1755
  %v1966 = vpop.f32.mrf.mxu0
  %v1967 = vadd.f32 0.0, %v1966
  %1968 = vdwg.mxu0
  %1969 = vmatpush.msra.mxu0 %v1945
  %1970 = vmatpush.msra.mxu0 %v1943
  %1971 = vmatpush.msra.mxu0 %v1941
  %1972 = vmatpush.msra.mxu0 %v1939
  %1973 = vmatpush.msra.mxu0 %v1937
  %1974 = vmatpush.msra.mxu0 %v1935
  %1975 = vmatpush.msra.mxu0 %v1933
  %1976 = vmatpush.msra.mxu0 %v1931
  %1977 = vmatpush.msra.mxu0 %v1929
  %1978 = vmatpush.msra.mxu0 %v1927
  %1979 = vmatpush.msra.mxu0 %v1925
  %1980 = vmatpush.msra.mxu0 %v1923
  %1981 = vmatpush.msra.mxu0 %v1921
  %1982 = vmatpush.msra.mxu0 %v1919
  %1983 = vmatpush.msra.mxu0 %v1917
  %1984 = vmatpush.msra.mxu0 %v1915
  %1985 = vmatmul.f32.gmra.mxu0 %v1753
  %v1986 = vpop.f32.mrf.mxu0
  %v1987 = vadd.f32 0.0, %v1986
  %1988 = vmatmul.f32.gmra.mxu0 %v1755
  %v1989 = vpop.f32.mrf.mxu0
  %v1990 = vadd.f32 0.0, %v1989
  %1991 = vdwg.mxu0
  %v1992 = vadd.f32 %v1885, %v1964
  %v1993 = vadd.f32 %v1908, %v1987
  %v1994 = vadd.f32 %v1888, %v1967
  %v1995 = vadd.f32 %v1911, %v1990
  %v1996 = vld [vmem:[%s10] sm:$0x3]
  %v1998 = vperm.slane %v1996, 0
  %v1999 = vperm.slane %v1996, 1
  %v2002 = vadd.f32 %v1992, %v1998
  %v2003 = vadd.f32 %v1993, %v1999
  %v2004 = vadd.f32 %v1994, %v1998
  %v2005 = vadd.f32 %v1995, %v1999
  %vm2006 = vcmp.gt.f32.partialorder %v2002, 0.0
  %vm2007 = vcmp.gt.f32.partialorder %v2003, 0.0
  %vm2008 = vcmp.gt.f32.partialorder %v2004, 0.0
  %vm2009 = vcmp.gt.f32.partialorder %v2005, 0.0
  %v2010 = vmul.f32 %v2002, 0.01
  %v2011 = vmul.f32 %v2003, 0.01
  %v2012 = vmul.f32 %v2004, 0.01
  %v2013 = vmul.f32 %v2005, 0.01
  %v2014 = vsel %vm2006, %v2002, %v2010
  %v2015 = vsel %vm2007, %v2003, %v2011
  %v2016 = vsel %vm2008, %v2004, %v2012
  %v2017 = vsel %vm2009, %v2005, %v2013
  %v2018 = vld [vmem:[%s11] sm:$0xff]
  %v2019 = vld [vmem:[%s11 + $0x8] sm:$0xff]
  %v2020 = vld [vmem:[%s11 + $0x10] sm:$0xff]
  %v2021 = vld [vmem:[%s11 + $0x18] sm:$0xff]
  %v2022 = vld [vmem:[%s11 + $0x20] sm:$0xff]
  %v2023 = vld [vmem:[%s11 + $0x28] sm:$0xff]
  %v2024 = vld [vmem:[%s11 + $0x30] sm:$0xff]
  %v2025 = vld [vmem:[%s11 + $0x38] sm:$0xff]
  %v2026 = vld [vmem:[%s11 + $0x40] sm:$0xff]
  %v2027 = vld [vmem:[%s11 + $0x48] sm:$0xff]
  %v2028 = vld [vmem:[%s11 + $0x50] sm:$0xff]
  %v2029 = vld [vmem:[%s11 + $0x58] sm:$0xff]
  %v2030 = vld [vmem:[%s11 + $0x60] sm:$0xff]
  %v2031 = vld [vmem:[%s11 + $0x68] sm:$0xff]
  %v2032 = vld [vmem:[%s11 + $0x70] sm:$0xff]
  %v2033 = vld [vmem:[%s11 + $0x78] sm:$0xff]
  %v2034 = vld [vmem:[%s11 + $0x80] sm:$0xff]
  %v2035 = vld [vmem:[%s11 + $0x88] sm:$0xff]
  %v2036 = vld [vmem:[%s11 + $0x90] sm:$0xff]
  %v2037 = vld [vmem:[%s11 + $0x98] sm:$0xff]
  %v2038 = vld [vmem:[%s11 + $0xa0] sm:$0xff]
  %v2039 = vld [vmem:[%s11 + $0xa8] sm:$0xff]
  %v2040 = vld [vmem:[%s11 + $0xb0] sm:$0xff]
  %v2041 = vld [vmem:[%s11 + $0xb8] sm:$0xff]
  %v2042 = vld [vmem:[%s11 + $0xc0] sm:$0xff]
  %v2043 = vld [vmem:[%s11 + $0xc8] sm:$0xff]
  %v2044 = vld [vmem:[%s11 + $0xd0] sm:$0xff]
  %v2045 = vld [vmem:[%s11 + $0xd8] sm:$0xff]
  %v2046 = vld [vmem:[%s11 + $0xe0] sm:$0xff]
  %v2047 = vld [vmem:[%s11 + $0xe8] sm:$0xff]
  %v2048 = vld [vmem:[%s11 + $0xf0] sm:$0xff]
  %v2049 = vld [vmem:[%s11 + $0xf8] sm:$0xff]
  %v2050 = vld [vmem:[%s11 + $0x100] sm:$0xff]
  %v2051 = vld [vmem:[%s11 + $0x108] sm:$0xff]
  %v2052 = vld [vmem:[%s11 + $0x110] sm:$0xff]
  %v2053 = vld [vmem:[%s11 + $0x118] sm:$0xff]
  %v2054 = vld [vmem:[%s11 + $0x120] sm:$0xff]
  %v2055 = vld [vmem:[%s11 + $0x128] sm:$0xff]
  %v2056 = vld [vmem:[%s11 + $0x130] sm:$0xff]
  %v2057 = vld [vmem:[%s11 + $0x138] sm:$0xff]
  %v2058 = vld [vmem:[%s11 + $0x140] sm:$0xff]
  %v2059 = vld [vmem:[%s11 + $0x148] sm:$0xff]
  %v2060 = vld [vmem:[%s11 + $0x150] sm:$0xff]
  %v2061 = vld [vmem:[%s11 + $0x158] sm:$0xff]
  %v2062 = vld [vmem:[%s11 + $0x160] sm:$0xff]
  %v2063 = vld [vmem:[%s11 + $0x168] sm:$0xff]
  %v2064 = vld [vmem:[%s11 + $0x170] sm:$0xff]
  %v2065 = vld [vmem:[%s11 + $0x178] sm:$0xff]
  %v2066 = vld [vmem:[%s11 + $0x180] sm:$0xff]
  %v2067 = vld [vmem:[%s11 + $0x188] sm:$0xff]
  %v2068 = vld [vmem:[%s11 + $0x190] sm:$0xff]
  %v2069 = vld [vmem:[%s11 + $0x198] sm:$0xff]
  %v2070 = vld [vmem:[%s11 + $0x1a0] sm:$0xff]
  %v2071 = vld [vmem:[%s11 + $0x1a8] sm:$0xff]
  %v2072 = vld [vmem:[%s11 + $0x1b0] sm:$0xff]
  %v2073 = vld [vmem:[%s11 + $0x1b8] sm:$0xff]
  %v2074 = vld [vmem:[%s11 + $0x1c0] sm:$0xff]
  %v2075 = vld [vmem:[%s11 + $0x1c8] sm:$0xff]
  %v2076 = vld [vmem:[%s11 + $0x1d0] sm:$0xff]
  %v2077 = vld [vmem:[%s11 + $0x1d8] sm:$0xff]
  %v2078 = vld [vmem:[%s11 + $0x1e0] sm:$0xff]
  %v2079 = vld [vmem:[%s11 + $0x1e8] sm:$0xff]
  %v2080 = vld [vmem:[%s11 + $0x1f0] sm:$0xff]
  %v2081 = vld [vmem:[%s11 + $0x1f8] sm:$0xff]
  %v2082 = vld [vmem:[%s11 + $0x200] sm:$0xff]
  %v2083 = vld [vmem:[%s11 + $0x208] sm:$0xff]
  %v2084 = vld [vmem:[%s11 + $0x210] sm:$0xff]
  %v2085 = vld [vmem:[%s11 + $0x218] sm:$0xff]
  %v2086 = vld [vmem:[%s11 + $0x220] sm:$0xff]
  %v2087 = vld [vmem:[%s11 + $0x228] sm:$0xff]
  %v2088 = vld [vmem:[%s11 + $0x230] sm:$0xff]
  %v2089 = vld [vmem:[%s11 + $0x238] sm:$0xff]
  %v2090 = vld [vmem:[%s11 + $0x240] sm:$0xff]
  %v2091 = vld [vmem:[%s11 + $0x248] sm:$0xff]
  %v2092 = vld [vmem:[%s11 + $0x250] sm:$0xff]
  %v2093 = vld [vmem:[%s11 + $0x258] sm:$0xff]
  %v2094 = vld [vmem:[%s11 + $0x260] sm:$0xff]
  %v2095 = vld [vmem:[%s11 + $0x268] sm:$0xff]
  %v2096 = vld [vmem:[%s11 + $0x270] sm:$0xff]
  %v2097 = vld [vmem:[%s11 + $0x278] sm:$0xff]
  %v2098 = vld [vmem:[%s11 + $0x280] sm:$0xff]
  %v2099 = vld [vmem:[%s11 + $0x288] sm:$0xff]
  %v2100 = vld [vmem:[%s11 + $0x290] sm:$0xff]
  %v2101 = vld [vmem:[%s11 + $0x298] sm:$0xff]
  %v2102 = vld [vmem:[%s11 + $0x2a0] sm:$0xff]
  %v2103 = vld [vmem:[%s11 + $0x2a8] sm:$0xff]
  %v2104 = vld [vmem:[%s11 + $0x2b0] sm:$0xff]
  %v2105 = vld [vmem:[%s11 + $0x2b8] sm:$0xff]
  %v2106 = vld [vmem:[%s11 + $0x2c0] sm:$0xff]
  %v2107 = vld [vmem:[%s11 + $0x2c8] sm:$0xff]
  %v2108 = vld [vmem:[%s11 + $0x2d0] sm:$0xff]
  %v2109 = vld [vmem:[%s11 + $0x2d8] sm:$0xff]
  %v2110 = vld [vmem:[%s11 + $0x2e0] sm:$0xff]
  %v2111 = vld [vmem:[%s11 + $0x2e8] sm:$0xff]
  %v2112 = vld [vmem:[%s11 + $0x2f0] sm:$0xff]
  %v2113 = vld [vmem:[%s11 + $0x2f8] sm:$0xff]
  %v2114 = vld [vmem:[%s11 + $0x300] sm:$0xff]
  %v2115 = vld [vmem:[%s11 + $0x308] sm:$0xff]
  %v2116 = vld [vmem:[%s11 + $0x310] sm:$0xff]
  %v2117 = vld [vmem:[%s11 + $0x318] sm:$0xff]
  %v2118 = vld [vmem:[%s11 + $0x320] sm:$0xff]
  %v2119 = vld [vmem:[%s11 + $0x328] sm:$0xff]
  %v2120 = vld [vmem:[%s11 + $0x330] sm:$0xff]
  %v2121 = vld [vmem:[%s11 + $0x338] sm:$0xff]
  %v2122 = vld [vmem:[%s11 + $0x340] sm:$0xff]
  %v2123 = vld [vmem:[%s11 + $0x348] sm:$0xff]
  %v2124 = vld [vmem:[%s11 + $0x350] sm:$0xff]
  %v2125 = vld [vmem:[%s11 + $0x358] sm:$0xff]
  %v2126 = vld [vmem:[%s11 + $0x360] sm:$0xff]
  %v2127 = vld [vmem:[%s11 + $0x368] sm:$0xff]
  %v2128 = vld [vmem:[%s11 + $0x370] sm:$0xff]
  %v2129 = vld [vmem:[%s11 + $0x378] sm:$0xff]
  %v2130 = vld [vmem:[%s11 + $0x380] sm:$0xff]
  %v2131 = vld [vmem:[%s11 + $0x388] sm:$0xff]
  %v2132 = vld [vmem:[%s11 + $0x390] sm:$0xff]
  %v2133 = vld [vmem:[%s11 + $0x398] sm:$0xff]
  %v2134 = vld [vmem:[%s11 + $0x3a0] sm:$0xff]
  %v2135 = vld [vmem:[%s11 + $0x3a8] sm:$0xff]
  %v2136 = vld [vmem:[%s11 + $0x3b0] sm:$0xff]
  %v2137 = vld [vmem:[%s11 + $0x3b8] sm:$0xff]
  %v2138 = vld [vmem:[%s11 + $0x3c0] sm:$0xff]
  %v2139 = vld [vmem:[%s11 + $0x3c8] sm:$0xff]
  %v2140 = vld [vmem:[%s11 + $0x3d0] sm:$0xff]
  %v2141 = vld [vmem:[%s11 + $0x3d8] sm:$0xff]
  %v2142 = vld [vmem:[%s11 + $0x3e0] sm:$0xff]
  %v2143 = vld [vmem:[%s11 + $0x3e8] sm:$0xff]
  %v2144 = vld [vmem:[%s11 + $0x3f0] sm:$0xff]
  %v2145 = vld [vmem:[%s11 + $0x3f8] sm:$0xff]
  %v2146 = vld [vmem:[%s12] sm:$0xf]
  %v2148 = vperm.slane %v2146, 0
  %v2149 = vperm.slane %v2146, 1
  %v2150 = vperm.slane %v2146, 2
  %v2151 = vperm.slane %v2146, 3
  %2156 = vmatpush.msra.mxu0 %v2078
  %2157 = vmatpush.msra.mxu0 %v2074
  %2158 = vmatpush.msra.mxu0 %v2070
  %2159 = vmatpush.msra.mxu0 %v2066
  %2160 = vmatpush.msra.mxu0 %v2062
  %2161 = vmatpush.msra.mxu0 %v2058
  %2162 = vmatpush.msra.mxu0 %v2054
  %2163 = vmatpush.msra.mxu0 %v2050
  %2164 = vmatpush.msra.mxu0 %v2046
  %2165 = vmatpush.msra.mxu0 %v2042
  %2166 = vmatpush.msra.mxu0 %v2038
  %2167 = vmatpush.msra.mxu0 %v2034
  %2168 = vmatpush.msra.mxu0 %v2030
  %2169 = vmatpush.msra.mxu0 %v2026
  %2170 = vmatpush.msra.mxu0 %v2022
  %2171 = vmatpush.msra.mxu0 %v2018
  %2172 = vmatmul.f32.gmra.mxu0 %v2014
  %v2173 = vpop.f32.mrf.mxu0
  %v2174 = vadd.f32 %v2148, %v2173
  %2175 = vmatmul.f32.gmra.mxu0 %v2016
  %v2176 = vpop.f32.mrf.mxu0
  %v2177 = vadd.f32 %v2148, %v2176
  %2178 = vdwg.mxu0
  %2179 = vmatpush.msra.mxu0 %v2142
  %2180 = vmatpush.msra.mxu0 %v2138
  %2181 = vmatpush.msra.mxu0 %v2134
  %2182 = vmatpush.msra.mxu0 %v2130
  %2183 = vmatpush.msra.mxu0 %v2126
  %2184 = vmatpush.msra.mxu0 %v2122
  %2185 = vmatpush.msra.mxu0 %v2118
  %2186 = vmatpush.msra.mxu0 %v2114
  %2187 = vmatpush.msra.mxu0 %v2110
  %2188 = vmatpush.msra.mxu0 %v2106
  %2189 = vmatpush.msra.mxu0 %v2102
  %2190 = vmatpush.msra.mxu0 %v2098
  %2191 = vmatpush.msra.mxu0 %v2094
  %2192 = vmatpush.msra.mxu0 %v2090
  %2193 = vmatpush.msra.mxu0 %v2086
  %2194 = vmatpush.msra.mxu0 %v2082
  %2195 = vmatmul.f32.gmra.mxu0 %v2015
  %v2196 = vpop.f32.mrf.mxu0
  %v2197 = vadd.f32 %v2174, %v2196
  %2198 = vmatmul.f32.gmra.mxu0 %v2017
  %v2199 = vpop.f32.mrf.mxu0
  %v2200 = vadd.f32 %v2177, %v2199
  %2201 = vdwg.mxu0
  %2202 = vmatpush.msra.mxu0 %v2079
  %2203 = vmatpush.msra.mxu0 %v2075
  %2204 = vmatpush.msra.mxu0 %v2071
  %2205 = vmatpush.msra.mxu0 %v2067
  %2206 = vmatpush.msra.mxu0 %v2063
  %2207 = vmatpush.msra.mxu0 %v2059
  %2208 = vmatpush.msra.mxu0 %v2055
  %2209 = vmatpush.msra.mxu0 %v2051
  %2210 = vmatpush.msra.mxu0 %v2047
  %2211 = vmatpush.msra.mxu0 %v2043
  %2212 = vmatpush.msra.mxu0 %v2039
  %2213 = vmatpush.msra.mxu0 %v2035
  %2214 = vmatpush.msra.mxu0 %v2031
  %2215 = vmatpush.msra.mxu0 %v2027
  %2216 = vmatpush.msra.mxu0 %v2023
  %2217 = vmatpush.msra.mxu0 %v2019
  %2218 = vmatmul.f32.gmra.mxu0 %v2014
  %v2219 = vpop.f32.mrf.mxu0
  %v2220 = vadd.f32 %v2149, %v2219
  %2221 = vmatmul.f32.gmra.mxu0 %v2016
  %v2222 = vpop.f32.mrf.mxu0
  %v2223 = vadd.f32 %v2149, %v2222
  %2224 = vdwg.mxu0
  %2225 = vmatpush.msra.mxu0 %v2143
  %2226 = vmatpush.msra.mxu0 %v2139
  %2227 = vmatpush.msra.mxu0 %v2135
  %2228 = vmatpush.msra.mxu0 %v2131
  %2229 = vmatpush.msra.mxu0 %v2127
  %2230 = vmatpush.msra.mxu0 %v2123
  %2231 = vmatpush.msra.mxu0 %v2119
  %2232 = vmatpush.msra.mxu0 %v2115
  %2233 = vmatpush.msra.mxu0 %v2111
  %2234 = vmatpush.msra.mxu0 %v2107
  %2235 = vmatpush.msra.mxu0 %v2103
  %2236 = vmatpush.msra.mxu0 %v2099
  %2237 = vmatpush.msra.mxu0 %v2095
  %2238 = vmatpush.msra.mxu0 %v2091
  %2239 = vmatpush.msra.mxu0 %v2087
  %2240 = vmatpush.msra.mxu0 %v2083
  %2241 = vmatmul.f32.gmra.mxu0 %v2015
  %v2242 = vpop.f32.mrf.mxu0
  %v2243 = vadd.f32 %v2220, %v2242
  %2244 = vmatmul.f32.gmra.mxu0 %v2017
  %v2245 = vpop.f32.mrf.mxu0
  %v2246 = vadd.f32 %v2223, %v2245
  %2247 = vdwg.mxu0
  %2248 = vmatpush.msra.mxu0 %v2080
  %2249 = vmatpush.msra.mxu0 %v2076
  %2250 = vmatpush.msra.mxu0 %v2072
  %2251 = vmatpush.msra.mxu0 %v2068
  %2252 = vmatpush.msra.mxu0 %v2064
  %2253 = vmatpush.msra.mxu0 %v2060
  %2254 = vmatpush.msra.mxu0 %v2056
  %2255 = vmatpush.msra.mxu0 %v2052
  %2256 = vmatpush.msra.mxu0 %v2048
  %2257 = vmatpush.msra.mxu0 %v2044
  %2258 = vmatpush.msra.mxu0 %v2040
  %2259 = vmatpush.msra.mxu0 %v2036
  %2260 = vmatpush.msra.mxu0 %v2032
  %2261 = vmatpush.msra.mxu0 %v2028
  %2262 = vmatpush.msra.mxu0 %v2024
  %2263 = vmatpush.msra.mxu0 %v2020
  %2264 = vmatmul.f32.gmra.mxu0 %v2014
  %v2265 = vpop.f32.mrf.mxu0
  %v2266 = vadd.f32 %v2150, %v2265
  %2267 = vmatmul.f32.gmra.mxu0 %v2016
  %v2268 = vpop.f32.mrf.mxu0
  %v2269 = vadd.f32 %v2150, %v2268
  %2270 = vdwg.mxu0
  %2271 = vmatpush.msra.mxu0 %v2144
  %2272 = vmatpush.msra.mxu0 %v2140
  %2273 = vmatpush.msra.mxu0 %v2136
  %2274 = vmatpush.msra.mxu0 %v2132
  %2275 = vmatpush.msra.mxu0 %v2128
  %2276 = vmatpush.msra.mxu0 %v2124
  %2277 = vmatpush.msra.mxu0 %v2120
  %2278 = vmatpush.msra.mxu0 %v2116
  %2279 = vmatpush.msra.mxu0 %v2112
  %2280 = vmatpush.msra.mxu0 %v2108
  %2281 = vmatpush.msra.mxu0 %v2104
  %2282 = vmatpush.msra.mxu0 %v2100
  %2283 = vmatpush.msra.mxu0 %v2096
  %2284 = vmatpush.msra.mxu0 %v2092
  %2285 = vmatpush.msra.mxu0 %v2088
  %2286 = vmatpush.msra.mxu0 %v2084
  %2287 = vmatmul.f32.gmra.mxu0 %v2015
  %v2288 = vpop.f32.mrf.mxu0
  %v2289 = vadd.f32 %v2266, %v2288
  %2290 = vmatmul.f32.gmra.mxu0 %v2017
  %v2291 = vpop.f32.mrf.mxu0
  %v2292 = vadd.f32 %v2269, %v2291
  %2293 = vdwg.mxu0
  %2294 = vmatpush.msra.mxu0 %v2081
  %2295 = vmatpush.msra.mxu0 %v2077
  %2296 = vmatpush.msra.mxu0 %v2073
  %2297 = vmatpush.msra.mxu0 %v2069
  %2298 = vmatpush.msra.mxu0 %v2065
  %2299 = vmatpush.msra.mxu0 %v2061
  %2300 = vmatpush.msra.mxu0 %v2057
  %2301 = vmatpush.msra.mxu0 %v2053
  %2302 = vmatpush.msra.mxu0 %v2049
  %2303 = vmatpush.msra.mxu0 %v2045
  %2304 = vmatpush.msra.mxu0 %v2041
  %2305 = vmatpush.msra.mxu0 %v2037
  %2306 = vmatpush.msra.mxu0 %v2033
  %2307 = vmatpush.msra.mxu0 %v2029
  %2308 = vmatpush.msra.mxu0 %v2025
  %2309 = vmatpush.msra.mxu0 %v2021
  %2310 = vmatmul.f32.gmra.mxu0 %v2014
  %v2311 = vpop.f32.mrf.mxu0
  %v2312 = vadd.f32 %v2151, %v2311
  %2313 = vmatmul.f32.gmra.mxu0 %v2016
  %v2314 = vpop.f32.mrf.mxu0
  %v2315 = vadd.f32 %v2151, %v2314
  %2316 = vdwg.mxu0
  %2317 = vmatpush.msra.mxu0 %v2145
  %2318 = vmatpush.msra.mxu0 %v2141
  %2319 = vmatpush.msra.mxu0 %v2137
  %2320 = vmatpush.msra.mxu0 %v2133
  %2321 = vmatpush.msra.mxu0 %v2129
  %2322 = vmatpush.msra.mxu0 %v2125
  %2323 = vmatpush.msra.mxu0 %v2121
  %2324 = vmatpush.msra.mxu0 %v2117
  %2325 = vmatpush.msra.mxu0 %v2113
  %2326 = vmatpush.msra.mxu0 %v2109
  %2327 = vmatpush.msra.mxu0 %v2105
  %2328 = vmatpush.msra.mxu0 %v2101
  %2329 = vmatpush.msra.mxu0 %v2097
  %2330 = vmatpush.msra.mxu0 %v2093
  %2331 = vmatpush.msra.mxu0 %v2089
  %2332 = vmatpush.msra.mxu0 %v2085
  %2333 = vmatmul.f32.gmra.mxu0 %v2015
  %v2334 = vpop.f32.mrf.mxu0
  %v2335 = vadd.f32 %v2312, %v2334
  %2336 = vmatmul.f32.gmra.mxu0 %v2017
  %v2337 = vpop.f32.mrf.mxu0
  %v2338 = vadd.f32 %v2315, %v2337
  %2339 = vdwg.mxu0
  %vm2340 = vcmp.gt.f32.partialorder %v2197, 0.0
  %vm2341 = vcmp.gt.f32.partialorder %v2243, 0.0
  %vm2342 = vcmp.gt.f32.partialorder %v2289, 0.0
  %vm2343 = vcmp.gt.f32.partialorder %v2335, 0.0
  %vm2344 = vcmp.gt.f32.partialorder %v2200, 0.0
  %vm2345 = vcmp.gt.f32.partialorder %v2246, 0.0
  %vm2346 = vcmp.gt.f32.partialorder %v2292, 0.0
  %vm2347 = vcmp.gt.f32.partialorder %v2338, 0.0
  %v2348 = vmul.f32 %v2197, 0.01
  %v2349 = vmul.f32 %v2243, 0.01
  %v2350 = vmul.f32 %v2289, 0.01
  %v2351 = vmul.f32 %v2335, 0.01
  %v2352 = vmul.f32 %v2200, 0.01
  %v2353 = vmul.f32 %v2246, 0.01
  %v2354 = vmul.f32 %v2292, 0.01
  %v2355 = vmul.f32 %v2338, 0.01
  %v2356 = vsel %vm2340, %v2197, %v2348
  %v2357 = vsel %vm2341, %v2243, %v2349
  %v2358 = vsel %vm2342, %v2289, %v2350
  %v2359 = vsel %vm2343, %v2335, %v2351
  %v2360 = vsel %vm2344, %v2200, %v2352
  %v2361 = vsel %vm2345, %v2246, %v2353
  %v2362 = vsel %vm2346, %v2292, %v2354
  %v2363 = vsel %vm2347, %v2338, %v2355
  %v2364 = vld [vmem:[%s13] sm:$0xff]
  %v2365 = vld [vmem:[%s13 + $0x8] sm:$0xff]
  %v2366 = vld [vmem:[%s13 + $0x10] sm:$0xff]
  %v2367 = vld [vmem:[%s13 + $0x18] sm:$0xff]
  %v2368 = vld [vmem:[%s13 + $0x20] sm:$0xff]
  %v2369 = vld [vmem:[%s13 + $0x28] sm:$0xff]
  %v2370 = vld [vmem:[%s13 + $0x30] sm:$0xff]
  %v2371 = vld [vmem:[%s13 + $0x38] sm:$0xff]
  %v2372 = vld [vmem:[%s13 + $0x40] sm:$0xff]
  %v2373 = vld [vmem:[%s13 + $0x48] sm:$0xff]
  %v2374 = vld [vmem:[%s13 + $0x50] sm:$0xff]
  %v2375 = vld [vmem:[%s13 + $0x58] sm:$0xff]
  %v2376 = vld [vmem:[%s13 + $0x60] sm:$0xff]
  %v2377 = vld [vmem:[%s13 + $0x68] sm:$0xff]
  %v2378 = vld [vmem:[%s13 + $0x70] sm:$0xff]
  %v2379 = vld [vmem:[%s13 + $0x78] sm:$0xff]
  %v2380 = vld [vmem:[%s13 + $0x80] sm:$0xff]
  %v2381 = vld [vmem:[%s13 + $0x88] sm:$0xff]
  %v2382 = vld [vmem:[%s13 + $0x90] sm:$0xff]
  %v2383 = vld [vmem:[%s13 + $0x98] sm:$0xff]
  %v2384 = vld [vmem:[%s13 + $0xa0] sm:$0xff]
  %v2385 = vld [vmem:[%s13 + $0xa8] sm:$0xff]
  %v2386 = vld [vmem:[%s13 + $0xb0] sm:$0xff]
  %v2387 = vld [vmem:[%s13 + $0xb8] sm:$0xff]
  %v2388 = vld [vmem:[%s13 + $0xc0] sm:$0xff]
  %v2389 = vld [vmem:[%s13 + $0xc8] sm:$0xff]
  %v2390 = vld [vmem:[%s13 + $0xd0] sm:$0xff]
  %v2391 = vld [vmem:[%s13 + $0xd8] sm:$0xff]
  %v2392 = vld [vmem:[%s13 + $0xe0] sm:$0xff]
  %v2393 = vld [vmem:[%s13 + $0xe8] sm:$0xff]
  %v2394 = vld [vmem:[%s13 + $0xf0] sm:$0xff]
  %v2395 = vld [vmem:[%s13 + $0xf8] sm:$0xff]
  %v2396 = vld [vmem:[%s13 + $0x100] sm:$0xff]
  %v2397 = vld [vmem:[%s13 + $0x108] sm:$0xff]
  %v2398 = vld [vmem:[%s13 + $0x110] sm:$0xff]
  %v2399 = vld [vmem:[%s13 + $0x118] sm:$0xff]
  %v2400 = vld [vmem:[%s13 + $0x120] sm:$0xff]
  %v2401 = vld [vmem:[%s13 + $0x128] sm:$0xff]
  %v2402 = vld [vmem:[%s13 + $0x130] sm:$0xff]
  %v2403 = vld [vmem:[%s13 + $0x138] sm:$0xff]
  %v2404 = vld [vmem:[%s13 + $0x140] sm:$0xff]
  %v2405 = vld [vmem:[%s13 + $0x148] sm:$0xff]
  %v2406 = vld [vmem:[%s13 + $0x150] sm:$0xff]
  %v2407 = vld [vmem:[%s13 + $0x158] sm:$0xff]
  %v2408 = vld [vmem:[%s13 + $0x160] sm:$0xff]
  %v2409 = vld [vmem:[%s13 + $0x168] sm:$0xff]
  %v2410 = vld [vmem:[%s13 + $0x170] sm:$0xff]
  %v2411 = vld [vmem:[%s13 + $0x178] sm:$0xff]
  %v2412 = vld [vmem:[%s13 + $0x180] sm:$0xff]
  %v2413 = vld [vmem:[%s13 + $0x188] sm:$0xff]
  %v2414 = vld [vmem:[%s13 + $0x190] sm:$0xff]
  %v2415 = vld [vmem:[%s13 + $0x198] sm:$0xff]
  %v2416 = vld [vmem:[%s13 + $0x1a0] sm:$0xff]
  %v2417 = vld [vmem:[%s13 + $0x1a8] sm:$0xff]
  %v2418 = vld [vmem:[%s13 + $0x1b0] sm:$0xff]
  %v2419 = vld [vmem:[%s13 + $0x1b8] sm:$0xff]
  %v2420 = vld [vmem:[%s13 + $0x1c0] sm:$0xff]
  %v2421 = vld [vmem:[%s13 + $0x1c8] sm:$0xff]
  %v2422 = vld [vmem:[%s13 + $0x1d0] sm:$0xff]
  %v2423 = vld [vmem:[%s13 + $0x1d8] sm:$0xff]
  %v2424 = vld [vmem:[%s13 + $0x1e0] sm:$0xff]
  %v2425 = vld [vmem:[%s13 + $0x1e8] sm:$0xff]
  %v2426 = vld [vmem:[%s13 + $0x1f0] sm:$0xff]
  %v2427 = vld [vmem:[%s13 + $0x1f8] sm:$0xff]
  %v2428 = vld [vmem:[%s14] sm:$0xff]
  %v2429 = vld [vmem:[%s14 + $0x8] sm:$0xff]
  %v2430 = vld [vmem:[%s14 + $0x10] sm:$0xff]
  %v2431 = vld [vmem:[%s14 + $0x18] sm:$0xff]
  %v2432 = vld [vmem:[%s14 + $0x20] sm:$0xff]
  %v2433 = vld [vmem:[%s14 + $0x28] sm:$0xff]
  %v2434 = vld [vmem:[%s14 + $0x30] sm:$0xff]
  %v2435 = vld [vmem:[%s14 + $0x38] sm:$0xff]
  %v2436 = vld [vmem:[%s14 + $0x40] sm:$0xff]
  %v2437 = vld [vmem:[%s14 + $0x48] sm:$0xff]
  %v2438 = vld [vmem:[%s14 + $0x50] sm:$0xff]
  %v2439 = vld [vmem:[%s14 + $0x58] sm:$0xff]
  %v2440 = vld [vmem:[%s14 + $0x60] sm:$0xff]
  %v2441 = vld [vmem:[%s14 + $0x68] sm:$0xff]
  %v2442 = vld [vmem:[%s14 + $0x70] sm:$0xff]
  %v2443 = vld [vmem:[%s14 + $0x78] sm:$0xff]
  %v2444 = vld [vmem:[%s14 + $0x80] sm:$0xff]
  %v2445 = vld [vmem:[%s14 + $0x88] sm:$0xff]
  %v2446 = vld [vmem:[%s14 + $0x90] sm:$0xff]
  %v2447 = vld [vmem:[%s14 + $0x98] sm:$0xff]
  %v2448 = vld [vmem:[%s14 + $0xa0] sm:$0xff]
  %v2449 = vld [vmem:[%s14 + $0xa8] sm:$0xff]
  %v2450 = vld [vmem:[%s14 + $0xb0] sm:$0xff]
  %v2451 = vld [vmem:[%s14 + $0xb8] sm:$0xff]
  %v2452 = vld [vmem:[%s14 + $0xc0] sm:$0xff]
  %v2453 = vld [vmem:[%s14 + $0xc8] sm:$0xff]
  %v2454 = vld [vmem:[%s14 + $0xd0] sm:$0xff]
  %v2455 = vld [vmem:[%s14 + $0xd8] sm:$0xff]
  %v2456 = vld [vmem:[%s14 + $0xe0] sm:$0xff]
  %v2457 = vld [vmem:[%s14 + $0xe8] sm:$0xff]
  %v2458 = vld [vmem:[%s14 + $0xf0] sm:$0xff]
  %v2459 = vld [vmem:[%s14 + $0xf8] sm:$0xff]
  %v2460 = vld [vmem:[%s14 + $0x100] sm:$0xff]
  %v2461 = vld [vmem:[%s14 + $0x108] sm:$0xff]
  %v2462 = vld [vmem:[%s14 + $0x110] sm:$0xff]
  %v2463 = vld [vmem:[%s14 + $0x118] sm:$0xff]
  %v2464 = vld [vmem:[%s14 + $0x120] sm:$0xff]
  %v2465 = vld [vmem:[%s14 + $0x128] sm:$0xff]
  %v2466 = vld [vmem:[%s14 + $0x130] sm:$0xff]
  %v2467 = vld [vmem:[%s14 + $0x138] sm:$0xff]
  %v2468 = vld [vmem:[%s14 + $0x140] sm:$0xff]
  %v2469 = vld [vmem:[%s14 + $0x148] sm:$0xff]
  %v2470 = vld [vmem:[%s14 + $0x150] sm:$0xff]
  %v2471 = vld [vmem:[%s14 + $0x158] sm:$0xff]
  %v2472 = vld [vmem:[%s14 + $0x160] sm:$0xff]
  %v2473 = vld [vmem:[%s14 + $0x168] sm:$0xff]
  %v2474 = vld [vmem:[%s14 + $0x170] sm:$0xff]
  %v2475 = vld [vmem:[%s14 + $0x178] sm:$0xff]
  %v2476 = vld [vmem:[%s14 + $0x180] sm:$0xff]
  %v2477 = vld [vmem:[%s14 + $0x188] sm:$0xff]
  %v2478 = vld [vmem:[%s14 + $0x190] sm:$0xff]
  %v2479 = vld [vmem:[%s14 + $0x198] sm:$0xff]
  %v2480 = vld [vmem:[%s14 + $0x1a0] sm:$0xff]
  %v2481 = vld [vmem:[%s14 + $0x1a8] sm:$0xff]
  %v2482 = vld [vmem:[%s14 + $0x1b0] sm:$0xff]
  %v2483 = vld [vmem:[%s14 + $0x1b8] sm:$0xff]
  %v2484 = vld [vmem:[%s14 + $0x1c0] sm:$0xff]
  %v2485 = vld [vmem:[%s14 + $0x1c8] sm:$0xff]
  %v2486 = vld [vmem:[%s14 + $0x1d0] sm:$0xff]
  %v2487 = vld [vmem:[%s14 + $0x1d8] sm:$0xff]
  %v2488 = vld [vmem:[%s14 + $0x1e0] sm:$0xff]
  %v2489 = vld [vmem:[%s14 + $0x1e8] sm:$0xff]
  %v2490 = vld [vmem:[%s14 + $0x1f0] sm:$0xff]
  %v2491 = vld [vmem:[%s14 + $0x1f8] sm:$0xff]
  %2492 = vmatpush.msra.mxu0 %v2443
  %2493 = vmatpush.msra.mxu0 %v2442
  %2494 = vmatpush.msra.mxu0 %v2441
  %2495 = vmatpush.msra.mxu0 %v2440
  %2496 = vmatpush.msra.mxu0 %v2439
  %2497 = vmatpush.msra.mxu0 %v2438
  %2498 = vmatpush.msra.mxu0 %v2437
  %2499 = vmatpush.msra.mxu0 %v2436
  %2500 = vmatpush.msra.mxu0 %v2435
  %2501 = vmatpush.msra.mxu0 %v2434
  %2502 = vmatpush.msra.mxu0 %v2433
  %2503 = vmatpush.msra.mxu0 %v2432
  %2504 = vmatpush.msra.mxu0 %v2431
  %2505 = vmatpush.msra.mxu0 %v2430
  %2506 = vmatpush.msra.mxu0 %v2429
  %2507 = vmatpush.msra.mxu0 %v2428
  %2508 = vmatmul.f32.gmra.mxu0 %v2360
  %v2509 = vpop.f32.mrf.mxu0
  %v2510 = vadd.f32 0.0, %v2509
  %2511 = vdwg.mxu0
  %2512 = vmatpush.msra.mxu0 %v2459
  %2513 = vmatpush.msra.mxu0 %v2458
  %2514 = vmatpush.msra.mxu0 %v2457
  %2515 = vmatpush.msra.mxu0 %v2456
  %2516 = vmatpush.msra.mxu0 %v2455
  %2517 = vmatpush.msra.mxu0 %v2454
  %2518 = vmatpush.msra.mxu0 %v2453
  %2519 = vmatpush.msra.mxu0 %v2452
  %2520 = vmatpush.msra.mxu0 %v2451
  %2521 = vmatpush.msra.mxu0 %v2450
  %2522 = vmatpush.msra.mxu0 %v2449
  %2523 = vmatpush.msra.mxu0 %v2448
  %2524 = vmatpush.msra.mxu0 %v2447
  %2525 = vmatpush.msra.mxu0 %v2446
  %2526 = vmatpush.msra.mxu0 %v2445
  %2527 = vmatpush.msra.mxu0 %v2444
  %2528 = vmatmul.f32.gmra.mxu0 %v2361
  %v2529 = vpop.f32.mrf.mxu0
  %v2530 = vadd.f32 %v2510, %v2529
  %2531 = vdwg.mxu0
  %2532 = vmatpush.msra.mxu0 %v2475
  %2533 = vmatpush.msra.mxu0 %v2474
  %2534 = vmatpush.msra.mxu0 %v2473
  %2535 = vmatpush.msra.mxu0 %v2472
  %2536 = vmatpush.msra.mxu0 %v2471
  %2537 = vmatpush.msra.mxu0 %v2470
  %2538 = vmatpush.msra.mxu0 %v2469
  %2539 = vmatpush.msra.mxu0 %v2468
  %2540 = vmatpush.msra.mxu0 %v2467
  %2541 = vmatpush.msra.mxu0 %v2466
  %2542 = vmatpush.msra.mxu0 %v2465
  %2543 = vmatpush.msra.mxu0 %v2464
  %2544 = vmatpush.msra.mxu0 %v2463
  %2545 = vmatpush.msra.mxu0 %v2462
  %2546 = vmatpush.msra.mxu0 %v2461
  %2547 = vmatpush.msra.mxu0 %v2460
  %2548 = vmatmul.f32.gmra.mxu0 %v2362
  %v2549 = vpop.f32.mrf.mxu0
  %v2550 = vadd.f32 %v2530, %v2549
  %2551 = vdwg.mxu0
  %2552 = vmatpush.msra.mxu0 %v2491
  %2553 = vmatpush.msra.mxu0 %v2490
  %2554 = vmatpush.msra.mxu0 %v2489
  %2555 = vmatpush.msra.mxu0 %v2488
  %2556 = vmatpush.msra.mxu0 %v2487
  %2557 = vmatpush.msra.mxu0 %v2486
  %2558 = vmatpush.msra.mxu0 %v2485
  %2559 = vmatpush.msra.mxu0 %v2484
  %2560 = vmatpush.msra.mxu0 %v2483
  %2561 = vmatpush.msra.mxu0 %v2482
  %2562 = vmatpush.msra.mxu0 %v2481
  %2563 = vmatpush.msra.mxu0 %v2480
  %2564 = vmatpush.msra.mxu0 %v2479
  %2565 = vmatpush.msra.mxu0 %v2478
  %2566 = vmatpush.msra.mxu0 %v2477
  %2567 = vmatpush.msra.mxu0 %v2476
  %2568 = vmatmul.f32.gmra.mxu0 %v2363
  %v2569 = vpop.f32.mrf.mxu0
  %v2570 = vadd.f32 %v2550, %v2569
  %2571 = vdwg.mxu0
  %2572 = vmatpush.msra.mxu0 %v2379
  %2573 = vmatpush.msra.mxu0 %v2378
  %2574 = vmatpush.msra.mxu0 %v2377
  %2575 = vmatpush.msra.mxu0 %v2376
  %2576 = vmatpush.msra.mxu0 %v2375
  %2577 = vmatpush.msra.mxu0 %v2374
  %2578 = vmatpush.msra.mxu0 %v2373
  %2579 = vmatpush.msra.mxu0 %v2372
  %2580 = vmatpush.msra.mxu0 %v2371
  %2581 = vmatpush.msra.mxu0 %v2370
  %2582 = vmatpush.msra.mxu0 %v2369
  %2583 = vmatpush.msra.mxu0 %v2368
  %2584 = vmatpush.msra.mxu0 %v2367
  %2585 = vmatpush.msra.mxu0 %v2366
  %2586 = vmatpush.msra.mxu0 %v2365
  %2587 = vmatpush.msra.mxu0 %v2364
  %2588 = vmatmul.f32.gmra.mxu0 %v2356
  %v2589 = vpop.f32.mrf.mxu0
  %v2590 = vadd.f32 %v2570, %v2589
  %2591 = vdwg.mxu0
  %2592 = vmatpush.msra.mxu0 %v2395
  %2593 = vmatpush.msra.mxu0 %v2394
  %2594 = vmatpush.msra.mxu0 %v2393
  %2595 = vmatpush.msra.mxu0 %v2392
  %2596 = vmatpush.msra.mxu0 %v2391
  %2597 = vmatpush.msra.mxu0 %v2390
  %2598 = vmatpush.msra.mxu0 %v2389
  %2599 = vmatpush.msra.mxu0 %v2388
  %2600 = vmatpush.msra.mxu0 %v2387
  %2601 = vmatpush.msra.mxu0 %v2386
  %2602 = vmatpush.msra.mxu0 %v2385
  %2603 = vmatpush.msra.mxu0 %v2384
  %2604 = vmatpush.msra.mxu0 %v2383
  %2605 = vmatpush.msra.mxu0 %v2382
  %2606 = vmatpush.msra.mxu0 %v2381
  %2607 = vmatpush.msra.mxu0 %v2380
  %2608 = vmatmul.f32.gmra.mxu0 %v2357
  %v2609 = vpop.f32.mrf.mxu0
  %v2610 = vadd.f32 %v2590, %v2609
  %2611 = vdwg.mxu0
  %2612 = vmatpush.msra.mxu0 %v2411
  %2613 = vmatpush.msra.mxu0 %v2410
  %2614 = vmatpush.msra.mxu0 %v2409
  %2615 = vmatpush.msra.mxu0 %v2408
  %2616 = vmatpush.msra.mxu0 %v2407
  %2617 = vmatpush.msra.mxu0 %v2406
  %2618 = vmatpush.msra.mxu0 %v2405
  %2619 = vmatpush.msra.mxu0 %v2404
  %2620 = vmatpush.msra.mxu0 %v2403
  %2621 = vmatpush.msra.mxu0 %v2402
  %2622 = vmatpush.msra.mxu0 %v2401
  %2623 = vmatpush.msra.mxu0 %v2400
  %2624 = vmatpush.msra.mxu0 %v2399
  %2625 = vmatpush.msra.mxu0 %v2398
  %2626 = vmatpush.msra.mxu0 %v2397
  %2627 = vmatpush.msra.mxu0 %v2396
  %2628 = vmatmul.f32.gmra.mxu0 %v2358
  %v2629 = vpop.f32.mrf.mxu0
  %v2630 = vadd.f32 %v2610, %v2629
  %2631 = vdwg.mxu0
  %2632 = vmatpush.msra.mxu0 %v2427
  %2633 = vmatpush.msra.mxu0 %v2426
  %2634 = vmatpush.msra.mxu0 %v2425
  %2635 = vmatpush.msra.mxu0 %v2424
  %2636 = vmatpush.msra.mxu0 %v2423
  %2637 = vmatpush.msra.mxu0 %v2422
  %2638 = vmatpush.msra.mxu0 %v2421
  %2639 = vmatpush.msra.mxu0 %v2420
  %2640 = vmatpush.msra.mxu0 %v2419
  %2641 = vmatpush.msra.mxu0 %v2418
  %2642 = vmatpush.msra.mxu0 %v2417
  %2643 = vmatpush.msra.mxu0 %v2416
  %2644 = vmatpush.msra.mxu0 %v2415
  %2645 = vmatpush.msra.mxu0 %v2414
  %2646 = vmatpush.msra.mxu0 %v2413
  %2647 = vmatpush.msra.mxu0 %v2412
  %2648 = vmatmul.f32.gmra.mxu0 %v2359
  %v2649 = vpop.f32.mrf.mxu0
  %v2650 = vadd.f32 %v2630, %v2649
  %2651 = vdwg.mxu0
  %v2652 = vld [vmem:[%s15] sm:$0x1]
  %v2654 = vperm.slane %v2652, 0
  %v2656 = vadd.f32 %v2650, %v2654
  %2657 = vst.msk [vmem:[%s16] sm:$0xff] %vm1297, %v2656
  // Predicated region
  $region70: #{encoder_forward.1} parent=0 // pred_check
    _
  $region71: #{encoder_forward.1} parent=0 // pred_check_branch
    %2659 = sbr.rel (0) target = $region73
  $region72: #{encoder_forward.1} parent=0 // pred_region
    _
  $region73: #{encoder_forward.1} parent=0 // pred_fallthru
    _
  // Predicated region
  $region74: #{encoder_forward.1} parent=0 // pred_check
    _
  $region75: #{encoder_forward.1} parent=0 // pred_check_branch
    %2661 = sbr.rel (0) target = $region77
  $region76: #{encoder_forward.1} parent=0 // pred_region
    _
  $region77: #{encoder_forward.1} parent=0 // pred_fallthru
    _

</llo_original>
